<compile_context>
chip_gen: v6e
topology: v6e:2x2x1
jax: 0.10.0
libtpu: 0.0.40
codegen_flags: <defaults>
</compile_context>

<pallas_src>
import functools
import math

import jax
import jax.numpy as jnp
from jax.experimental import pallas as pl
from jax.experimental.pallas import tpu as pltpu

DIM = 10                                                     # channels per group / depth conv
GROUP_RANGES = [(0, 39, 40), (40, 79, 40), (80, 104, 25), (105, 144, 40), (145, 199, 55)]
N_GROUPS = len(GROUP_RANGES)
C_IN = GROUP_RANGES[-1][1] + 1                               # 200 spectral bands
C_MID = DIM * N_GROUPS                                       # 50 concatenated group channels
C_PAD = 64                                                   # 50 padded to a clean sublane multiple
BN_EPS = 1e-5


def _pick_lane_tile(L, HW, cap):
    """Largest lane tile <= cap that divides L, is a multiple of HW (so tiles
    hold whole images) and of 128 (lane-dense tiling). Falls back to full L."""
    base = HW * 128 // math.gcd(HW, 128)                     # lcm(HW, 128)
    if L % base != 0 or base > min(L, cap):
        return L
    best = base
    t = base
    while t <= min(L, cap):
        if L % t == 0:
            best = t
        t += base
    return best


# ---------------------------------------------------------------------------
# Fused Pallas kernel: the entire module forward, one lane tile per grid step.
# ---------------------------------------------------------------------------
def _fused_forward_kernel(W, mask_ref, x_ref, w1_ref, sc1_ref, sh1_ref,
                          w2_ref, sc2_ref, sh2_ref, w3_ref, b3_ref,
                          o_ref, y_ref):
    # mask_ref: (9, 1, LT) f32      3x3 "same"-pad border masks (0/1), tile-invariant
    # x_ref   : (C_IN, LT) f32      input lane tile (LT = whole images)
    # w*_ref  : (9, rows, cols) bf16 tap-major block-diagonal conv weights (VMEM-resident)
    # sc/sh/b3: (rows, 1) f32       folded conv-bias + BatchNorm affines
    # o_ref   : (C_PAD, LT) f32     output tile (rows 50..63 are zero padding)
    # y_ref   : (C_PAD, LT) f32     scratch holding the layer-1 / layer-2 activations
    L = x_ref.shape[1]
    masks = [mask_ref[t] for t in range(9)]                  # (1, LT) each, loaded once

    def conv3x3(src, w_ref):
        # src: (C, L) f32 activations; w_ref: (9, R, C) bf16 packed weights.
        # 3x3 "same" conv as 9 accumulating MXU matmuls; each tap is a lane
        # roll of the whole tile (tiles hold whole images, so valid taps never
        # cross an image boundary) times the border mask.  No im2col slab.
        acc = None
        for t in range(9):
            dy, dx = t // 3 - 1, t % 3 - 1
            off = dy * W + dx
            tap = src if off == 0 else pltpu.roll(src, (-off) % L, axis=1)
            if (dy, dx) != (0, 0):
                tap = tap * masks[t]
            part = jnp.dot(w_ref[t], tap.astype(jnp.bfloat16),
                           preferred_element_type=jnp.float32)
            acc = part if acc is None else acc + part
        return acc

    # ---- layer 1: 5 per-band-group Conv3x3 + BN (block-diagonal weights) ----
    y1 = conv3x3(x_ref[...], w1_ref)
    y_ref[...] = y1 * sc1_ref[...] + sh1_ref[...]            # fused conv-bias + BatchNorm (f32)

    # ---- layer 2: 5 per-group Conv3x3 + BN -----------------------------------
    y2 = conv3x3(y_ref[...], w2_ref)
    y_ref[...] = y2 * sc2_ref[...] + sh2_ref[...]

    # ---- depth conv: shared 10->10 conv per depth block, rows in torch order -
    z = conv3x3(y_ref[...], w3_ref)
    o_ref[...] = z + b3_ref[...]


@functools.partial(jax.jit, static_argnames=("lane_tile_cap",))
def forward_pallas(x, packed, *, lane_tile_cap=2048):
    """x: (B, 200, H, W) f32 -> (B, 50, H, W) f32.

    lane_tile_cap: per-generation lane tile cap (f32 activations):
      v7x (64 MiB VMEM) <= 2048, v6e/v5e (128 MiB) can go to ~4096+.
    """
    B, C, H, W = x.shape
    assert C == C_IN, C
    HW = H * W
    L = B * HW
    LT = _pick_lane_tile(L, HW, lane_tile_cap)
    assert LT % HW == 0 and L % LT == 0, (L, LT, HW)
    num_tiles = L // LT

    # Channels on sublanes, batch*spatial on (128-dense) lanes.
    # TODO(synk): at deployment batch sizes these two host-side transposes should
    # be folded into the kernel's lane grid to avoid an extra HBM round-trip.
    x2d = jnp.transpose(x, (1, 0, 2, 3)).reshape(C_IN, L)

    # Border masks of a 3x3 "same" conv for ONE lane tile (tile-invariant since
    # tiles are aligned to whole images), hoisted out of the kernel entirely.
    q = jnp.arange(LT, dtype=jnp.int32) % HW
    r, c = q // W, q % W
    mask9 = jnp.stack(
        [(r + t // 3 - 1 >= 0) & (r + t // 3 - 1 < H) &
         (c + t % 3 - 1 >= 0) & (c + t % 3 - 1 < W) for t in range(9)]
    ).astype(jnp.float32).reshape(9, 1, LT)

    const2 = lambda shape: pl.BlockSpec(shape, lambda i: (0, 0))
    const3 = lambda shape: pl.BlockSpec(shape, lambda i: (0, 0, 0))
    lane2 = lambda rows: pl.BlockSpec((rows, LT), lambda i: (0, i))

    flops = 2 * L * 9 * (C_PAD * C_IN + C_PAD * C_PAD + C_PAD * C_PAD)
    bytes_accessed = int(
        x2d.size * x2d.dtype.itemsize + C_PAD * L * 4 + mask9.size * 4 +
        sum(int(v.size) * v.dtype.itemsize for v in packed.values()))

    out2d = pl.pallas_call(
        functools.partial(_fused_forward_kernel, W),
        out_shape=jax.ShapeDtypeStruct((C_PAD, L), jnp.float32),
        grid_spec=pltpu.PrefetchScalarGridSpec(
            num_scalar_prefetch=0,
            grid=(num_tiles,),
            in_specs=[
                const3((9, 1, LT)),                          # border masks (resident)
                lane2(C_IN),                                 # x lane tile (pipelined)
                const3((9, C_PAD, C_IN)),                    # w1 (resident)
                const2((C_PAD, 1)), const2((C_PAD, 1)),      # sc1, sh1
                const3((9, C_PAD, C_PAD)),                   # w2
                const2((C_PAD, 1)), const2((C_PAD, 1)),      # sc2, sh2
                const3((9, C_PAD, C_PAD)),                   # w3
                const2((C_PAD, 1)),                          # b3
            ],
            out_specs=lane2(C_PAD),
            scratch_shapes=[pltpu.VMEM((C_PAD, LT), jnp.float32)],
        ),
        compiler_params=pltpu.CompilerParams(
            dimension_semantics=("parallel",),               # shard lane tiles over v7x's 2 TCs
            vmem_limit_bytes=48 * 1024 * 1024,
        ),
        cost_estimate=pl.CostEstimate(flops=flops, transcendentals=0,
                                      bytes_accessed=bytes_accessed),
    )(mask9, x2d, packed["w1"], packed["sc1"], packed["sh1"],
      packed["w2"], packed["sc2"], packed["sh2"],
      packed["w3"], packed["b3"])

    # Drop zero padding rows; rows are already in the final torch channel order.
    out2d = out2d[:C_MID]
    return jnp.transpose(out2d.reshape(C_MID, B, H, W), (1, 0, 2, 3))


# ---------------------------------------------------------------------------
# Host-side packing: tap-major block-diagonal weights (bf16) + folded affines.
# Tap index t = 3*ky + kx; weight layout (9, out_rows, in_cols).
# ---------------------------------------------------------------------------
def pack_params(params):
    w1p = jnp.zeros((9, C_PAD, C_IN), jnp.float32)
    sc1 = jnp.zeros((C_PAD, 1), jnp.float32)
    sh1 = jnp.zeros((C_PAD, 1), jnp.float32)
    w2p = jnp.zeros((9, C_PAD, C_PAD), jnp.float32)
    sc2 = jnp.zeros((C_PAD, 1), jnp.float32)
    sh2 = jnp.zeros((C_PAD, 1), jnp.float32)
    for g, (start, end, size) in enumerate(GROUP_RANGES):
        p = params["groups"][g]
        r0 = g * DIM
        w1t = jnp.transpose(p["w1"], (2, 3, 0, 1)).reshape(9, DIM, size)
        w1p = w1p.at[:, r0:r0 + DIM, start:end + 1].set(w1t)
        sc1 = sc1.at[r0:r0 + DIM, 0].set(p["sc1"])
        sh1 = sh1.at[r0:r0 + DIM, 0].set(p["sh1"])
        w2t = jnp.transpose(p["w2"], (2, 3, 0, 1)).reshape(9, DIM, DIM)
        w2p = w2p.at[:, r0:r0 + DIM, r0:r0 + DIM].set(w2t)
        sc2 = sc2.at[r0:r0 + DIM, 0].set(p["sc2"])
        sh2 = sh2.at[r0:r0 + DIM, 0].set(p["sh2"])

    # Depth conv: shared (10 -> 10) conv repeated along the block diagonal for
    # the 5 depth blocks; rows pre-permuted to the final torch channel order
    # c_out = m*5 + d (rearrange 'b c d h w -> b (c d) h w'); rows padded to 64.
    w3t = jnp.transpose(params["w3"], (2, 3, 0, 1)).reshape(9, DIM, DIM)
    w3p = jnp.zeros((9, DIM, N_GROUPS, C_PAD), jnp.float32)
    for d in range(N_GROUPS):
        w3p = w3p.at[:, :, d, d * DIM:(d + 1) * DIM].set(w3t)
    w3p = w3p.reshape(9, C_MID, C_PAD)
    w3p = jnp.concatenate(
        [w3p, jnp.zeros((9, C_PAD - C_MID, C_PAD), jnp.float32)], axis=1)
    b3 = jnp.concatenate(
        [jnp.repeat(params["b3"], N_GROUPS),
         jnp.zeros((C_PAD - C_MID,), jnp.float32)]).reshape(C_PAD, 1)

    bf = lambda a: a.astype(jnp.bfloat16)
    return dict(w1=bf(w1p), sc1=sc1, sh1=sh1,
                w2=bf(w2p), sc2=sc2, sh2=sh2,
                w3=bf(w3p), b3=b3)


# ---------------------------------------------------------------------------
# Pure-JAX reference (lax.conv, full f32 precision) for a correctness check.
# ---------------------------------------------------------------------------
def _conv3x3_ref(x, w, scale, shift):
    y = jax.lax.conv_general_dilated(
        x, w, window_strides=(1, 1), padding=((1, 1), (1, 1)),
        dimension_numbers=("NCHW", "OIHW", "NCHW"),
        precision=jax.lax.Precision.HIGHEST)
    return y * scale[None, :, None, None] + shift[None, :, None, None]


def forward_reference(x, params):
    results = []
    for g, (start, end, _) in enumerate(GROUP_RANGES):
        p = params["groups"][g]
        sub = x[:, start:end + 1]
        h = _conv3x3_ref(sub, p["w1"], p["sc1"], p["sh1"])
        h = _conv3x3_ref(h, p["w2"], p["sc2"], p["sh2"])
        results.append(h)
    xc = jnp.concatenate(results, axis=1)                    # (B, 50, H, W)
    B, C, H, W = xc.shape
    D = C // DIM
    xb = xc.reshape(B * D, DIM, H, W)                        # depth blocks as batch
    ones = jnp.ones((DIM,), jnp.float32)
    yb = _conv3x3_ref(xb, params["w3"], ones, params["b3"])  # (B*D, DIM, H, W)
    y = yb.reshape(B, D, DIM, H, W)
    y = jnp.transpose(y, (0, 2, 1, 3, 4)).reshape(B, DIM * D, H, W)
    return y


# ---------------------------------------------------------------------------
# Deterministic parameter initialization (mirrors the PyTorch module shapes).
# ---------------------------------------------------------------------------
def _init_conv(key, c_out, c_in, k=3):
    bound = 1.0 / math.sqrt(c_in * k * k)
    kw, kb = jax.random.split(key)
    w = jax.random.uniform(kw, (c_out, c_in, k, k), jnp.float32, -bound, bound)
    b = jax.random.uniform(kb, (c_out,), jnp.float32, -bound, bound)
    return w, b


def _init_bn(key, c):
    k1, k2, k3, k4 = jax.random.split(key, 4)
    gamma = jax.random.uniform(k1, (c,), jnp.float32, 0.5, 1.5)
    beta = jax.random.uniform(k2, (c,), jnp.float32, -0.5, 0.5)
    mean = jax.random.uniform(k3, (c,), jnp.float32, -0.5, 0.5)
    var = jax.random.uniform(k4, (c,), jnp.float32, 0.5, 1.5)
    return gamma, beta, mean, var


def _fold_bias_bn(conv_bias, gamma, beta, mean, var):
    scale = gamma / jnp.sqrt(var + BN_EPS)
    shift = beta + scale * (conv_bias - mean)
    return scale, shift


def init_params(key):
    params = {"groups": []}
    for _, _, size in GROUP_RANGES:
        key, k1, k2, k3, k4 = jax.random.split(key, 5)
        w1, b1 = _init_conv(k1, DIM, size)
        sc1, sh1 = _fold_bias_bn(b1, *_init_bn(k2, DIM))
        w2, b2 = _init_conv(k3, DIM, DIM)
        sc2, sh2 = _fold_bias_bn(b2, *_init_bn(k4, DIM))
        params["groups"].append(dict(w1=w1, sc1=sc1, sh1=sh1, w2=w2, sc2=sc2, sh2=sh2))
    key, k5 = jax.random.split(key)
    # Conv3d(1, DIM, (DIM,3,3), stride=(DIM,1,1)) weight (DIM,1,DIM,3,3) ==
    # shared Conv2d(DIM -> DIM, 3x3) applied to each 10-channel depth block.
    w3, b3 = _init_conv(k5, DIM, DIM)
    params["w3"], params["b3"] = w3, b3
    return params


if __name__ == "__main__":
    key = jax.random.PRNGKey(0)
    kx, kp = jax.random.split(key)

    B, H, W = 4, 8, 8                          # B*H*W = 256 lanes
    x = jax.random.normal(kx, (B, C_IN, H, W), jnp.float32)
    params = init_params(kp)
    packed = pack_params(params)

    # lane_tile_cap=128 -> two 128-lane tiles: exercises the lane grid,
    # the pipelined x/out DMA and the VMEM-resident weights.
    out = jax.block_until_ready(forward_pallas(x, packed, lane_tile_cap=128))
    assert out.shape == (B, C_MID, H, W), out.shape

    ref = jax.block_until_ready(forward_reference(x, params))
    max_err = float(jnp.max(jnp.abs(out - ref)))
    rel_err = float(jnp.linalg.norm(out - ref) / (jnp.linalg.norm(ref) + 1e-12))
    # bf16 matmul operands with f32 accumulation: small quantization noise is
    # expected; a structural bug (wrong tap / channel mapping) gives O(1) errors.
    assert max_err < 2e-1 and rel_err < 5e-2, (max_err, rel_err)

    print("KERNEL_OK")
</pallas_src>

<mosaic_0001>
module attributes {stable_mosaic.version = 11 : i64} {
  func.func @_fused_forward_kernel(%arg0: i32, %arg1: memref<9x1x128xf32, #tpu.memory_space<vmem>>, %arg2: memref<200x128xf32, #tpu.memory_space<vmem>>, %arg3: memref<9x64x200xbf16, #tpu.memory_space<vmem>>, %arg4: memref<64x1xf32, #tpu.memory_space<vmem>>, %arg5: memref<64x1xf32, #tpu.memory_space<vmem>>, %arg6: memref<9x64x64xbf16, #tpu.memory_space<vmem>>, %arg7: memref<64x1xf32, #tpu.memory_space<vmem>>, %arg8: memref<64x1xf32, #tpu.memory_space<vmem>>, %arg9: memref<9x64x64xbf16, #tpu.memory_space<vmem>>, %arg10: memref<64x1xf32, #tpu.memory_space<vmem>>, %arg11: memref<64x128xf32, #tpu.memory_space<vmem>>, %arg12: memref<64x128xf32, #tpu.memory_space<vmem>>) attributes {dimension_semantics = [#tpu.dimension_semantics<parallel>], iteration_bounds = array<i64: 2>, scalar_prefetch = 0 : i64, scratch_operands = 1 : i64, tpu.core_type = #tpu.core_type<tc>, window_params = [{pipeline_mode = #tpu.pipeline_mode<synchronous>, transform_indices = @transform_0, window_bounds = array<i64: 9, 1, 128>}, {transform_indices = @transform_1, window_bounds = array<i64: 200, 128>}, {pipeline_mode = #tpu.pipeline_mode<synchronous>, transform_indices = @transform_2, window_bounds = array<i64: 9, 64, 200>}, {pipeline_mode = #tpu.pipeline_mode<synchronous>, transform_indices = @transform_3, window_bounds = array<i64: 64, 1>}, {pipeline_mode = #tpu.pipeline_mode<synchronous>, transform_indices = @transform_4, window_bounds = array<i64: 64, 1>}, {pipeline_mode = #tpu.pipeline_mode<synchronous>, transform_indices = @transform_5, window_bounds = array<i64: 9, 64, 64>}, {pipeline_mode = #tpu.pipeline_mode<synchronous>, transform_indices = @transform_6, window_bounds = array<i64: 64, 1>}, {pipeline_mode = #tpu.pipeline_mode<synchronous>, transform_indices = @transform_7, window_bounds = array<i64: 64, 1>}, {pipeline_mode = #tpu.pipeline_mode<synchronous>, transform_indices = @transform_8, window_bounds = array<i64: 9, 64, 64>}, {pipeline_mode = #tpu.pipeline_mode<synchronous>, transform_indices = @transform_9, window_bounds = array<i64: 64, 1>}, {transform_indices = @transform_10, window_bounds = array<i64: 64, 128>}]} {
    %c0 = arith.constant 0 : index
    %c0_0 = arith.constant 0 : index
    %c0_1 = arith.constant 0 : index
    %0 = vector.load %arg1[%c0, %c0_0, %c0_1] : memref<9x1x128xf32, #tpu.memory_space<vmem>>, vector<1x1x128xf32>
    %1 = vector.shape_cast %0 : vector<1x1x128xf32> to vector<1x128xf32>
    %c1 = arith.constant 1 : index
    %c0_2 = arith.constant 0 : index
    %c0_3 = arith.constant 0 : index
    %2 = vector.load %arg1[%c1, %c0_2, %c0_3] : memref<9x1x128xf32, #tpu.memory_space<vmem>>, vector<1x1x128xf32>
    %3 = vector.shape_cast %2 : vector<1x1x128xf32> to vector<1x128xf32>
    %c2 = arith.constant 2 : index
    %c0_4 = arith.constant 0 : index
    %c0_5 = arith.constant 0 : index
    %4 = vector.load %arg1[%c2, %c0_4, %c0_5] : memref<9x1x128xf32, #tpu.memory_space<vmem>>, vector<1x1x128xf32>
    %5 = vector.shape_cast %4 : vector<1x1x128xf32> to vector<1x128xf32>
    %c3 = arith.constant 3 : index
    %c0_6 = arith.constant 0 : index
    %c0_7 = arith.constant 0 : index
    %6 = vector.load %arg1[%c3, %c0_6, %c0_7] : memref<9x1x128xf32, #tpu.memory_space<vmem>>, vector<1x1x128xf32>
    %7 = vector.shape_cast %6 : vector<1x1x128xf32> to vector<1x128xf32>
    %c5 = arith.constant 5 : index
    %c0_8 = arith.constant 0 : index
    %c0_9 = arith.constant 0 : index
    %8 = vector.load %arg1[%c5, %c0_8, %c0_9] : memref<9x1x128xf32, #tpu.memory_space<vmem>>, vector<1x1x128xf32>
    %9 = vector.shape_cast %8 : vector<1x1x128xf32> to vector<1x128xf32>
    %c6 = arith.constant 6 : index
    %c0_10 = arith.constant 0 : index
    %c0_11 = arith.constant 0 : index
    %10 = vector.load %arg1[%c6, %c0_10, %c0_11] : memref<9x1x128xf32, #tpu.memory_space<vmem>>, vector<1x1x128xf32>
    %11 = vector.shape_cast %10 : vector<1x1x128xf32> to vector<1x128xf32>
    %c7 = arith.constant 7 : index
    %c0_12 = arith.constant 0 : index
    %c0_13 = arith.constant 0 : index
    %12 = vector.load %arg1[%c7, %c0_12, %c0_13] : memref<9x1x128xf32, #tpu.memory_space<vmem>>, vector<1x1x128xf32>
    %13 = vector.shape_cast %12 : vector<1x1x128xf32> to vector<1x128xf32>
    %c8 = arith.constant 8 : index
    %c0_14 = arith.constant 0 : index
    %c0_15 = arith.constant 0 : index
    %14 = vector.load %arg1[%c8, %c0_14, %c0_15] : memref<9x1x128xf32, #tpu.memory_space<vmem>>, vector<1x1x128xf32>
    %15 = vector.shape_cast %14 : vector<1x1x128xf32> to vector<1x128xf32>
    %c0_16 = arith.constant 0 : index
    %c0_17 = arith.constant 0 : index
    %16 = vector.load %arg2[%c0_16, %c0_17] : memref<200x128xf32, #tpu.memory_space<vmem>>, vector<200x128xf32>
    %c9_i32 = arith.constant 9 : i32
    %17 = tpu.dynamic_rotate %16 by %c9_i32 dim 1 : vector<200x128xf32>, i32 -> vector<200x128xf32>
    %18 = vector.broadcast %1 : vector<1x128xf32> to vector<200x128xf32>
    %19 = arith.mulf %17, %18 : vector<200x128xf32>
    %c0_18 = arith.constant 0 : index
    %c0_19 = arith.constant 0 : index
    %c0_20 = arith.constant 0 : index
    %20 = vector.load %arg3[%c0_18, %c0_19, %c0_20] : memref<9x64x200xbf16, #tpu.memory_space<vmem>>, vector<1x64x200xbf16>
    %21 = vector.shape_cast %20 : vector<1x64x200xbf16> to vector<64x200xbf16>
    %22 = arith.truncf %19 : vector<200x128xf32> to vector<200x128xbf16>
    %cst = arith.constant dense<0.000000e+00> : vector<64x128xf32>
    %23 = tpu.matmul %21, %22, %cst {dimension_numbers = #tpu.dot_dimension_numbers<[1], [0], [0], [1], [0, 0, 1, 1], [], []>} : vector<64x200xbf16>, vector<200x128xbf16>, vector<64x128xf32> -> vector<64x128xf32>
    %c8_i32 = arith.constant 8 : i32
    %24 = tpu.dynamic_rotate %16 by %c8_i32 dim 1 : vector<200x128xf32>, i32 -> vector<200x128xf32>
    %25 = vector.broadcast %3 : vector<1x128xf32> to vector<200x128xf32>
    %26 = arith.mulf %24, %25 : vector<200x128xf32>
    %c1_21 = arith.constant 1 : index
    %c0_22 = arith.constant 0 : index
    %c0_23 = arith.constant 0 : index
    %27 = vector.load %arg3[%c1_21, %c0_22, %c0_23] : memref<9x64x200xbf16, #tpu.memory_space<vmem>>, vector<1x64x200xbf16>
    %28 = vector.shape_cast %27 : vector<1x64x200xbf16> to vector<64x200xbf16>
    %29 = arith.truncf %26 : vector<200x128xf32> to vector<200x128xbf16>
    %cst_24 = arith.constant dense<0.000000e+00> : vector<64x128xf32>
    %30 = tpu.matmul %28, %29, %cst_24 {dimension_numbers = #tpu.dot_dimension_numbers<[1], [0], [0], [1], [0, 0, 1, 1], [], []>} : vector<64x200xbf16>, vector<200x128xbf16>, vector<64x128xf32> -> vector<64x128xf32>
    %31 = arith.addf %23, %30 : vector<64x128xf32>
    %c7_i32 = arith.constant 7 : i32
    %32 = tpu.dynamic_rotate %16 by %c7_i32 dim 1 : vector<200x128xf32>, i32 -> vector<200x128xf32>
    %33 = vector.broadcast %5 : vector<1x128xf32> to vector<200x128xf32>
    %34 = arith.mulf %32, %33 : vector<200x128xf32>
    %c2_25 = arith.constant 2 : index
    %c0_26 = arith.constant 0 : index
    %c0_27 = arith.constant 0 : index
    %35 = vector.load %arg3[%c2_25, %c0_26, %c0_27] : memref<9x64x200xbf16, #tpu.memory_space<vmem>>, vector<1x64x200xbf16>
    %36 = vector.shape_cast %35 : vector<1x64x200xbf16> to vector<64x200xbf16>
    %37 = arith.truncf %34 : vector<200x128xf32> to vector<200x128xbf16>
    %cst_28 = arith.constant dense<0.000000e+00> : vector<64x128xf32>
    %38 = tpu.matmul %36, %37, %cst_28 {dimension_numbers = #tpu.dot_dimension_numbers<[1], [0], [0], [1], [0, 0, 1, 1], [], []>} : vector<64x200xbf16>, vector<200x128xbf16>, vector<64x128xf32> -> vector<64x128xf32>
    %39 = arith.addf %31, %38 : vector<64x128xf32>
    %c1_i32 = arith.constant 1 : i32
    %40 = tpu.dynamic_rotate %16 by %c1_i32 dim 1 : vector<200x128xf32>, i32 -> vector<200x128xf32>
    %41 = vector.broadcast %7 : vector<1x128xf32> to vector<200x128xf32>
    %42 = arith.mulf %40, %41 : vector<200x128xf32>
    %c3_29 = arith.constant 3 : index
    %c0_30 = arith.constant 0 : index
    %c0_31 = arith.constant 0 : index
    %43 = vector.load %arg3[%c3_29, %c0_30, %c0_31] : memref<9x64x200xbf16, #tpu.memory_space<vmem>>, vector<1x64x200xbf16>
    %44 = vector.shape_cast %43 : vector<1x64x200xbf16> to vector<64x200xbf16>
    %45 = arith.truncf %42 : vector<200x128xf32> to vector<200x128xbf16>
    %cst_32 = arith.constant dense<0.000000e+00> : vector<64x128xf32>
    %46 = tpu.matmul %44, %45, %cst_32 {dimension_numbers = #tpu.dot_dimension_numbers<[1], [0], [0], [1], [0, 0, 1, 1], [], []>} : vector<64x200xbf16>, vector<200x128xbf16>, vector<64x128xf32> -> vector<64x128xf32>
    %47 = arith.addf %39, %46 : vector<64x128xf32>
    %c4 = arith.constant 4 : index
    %c0_33 = arith.constant 0 : index
    %c0_34 = arith.constant 0 : index
    %48 = vector.load %arg3[%c4, %c0_33, %c0_34] : memref<9x64x200xbf16, #tpu.memory_space<vmem>>, vector<1x64x200xbf16>
    %49 = vector.shape_cast %48 : vector<1x64x200xbf16> to vector<64x200xbf16>
    %50 = arith.truncf %16 : vector<200x128xf32> to vector<200x128xbf16>
    %cst_35 = arith.constant dense<0.000000e+00> : vector<64x128xf32>
    %51 = tpu.matmul %49, %50, %cst_35 {dimension_numbers = #tpu.dot_dimension_numbers<[1], [0], [0], [1], [0, 0, 1, 1], [], []>} : vector<64x200xbf16>, vector<200x128xbf16>, vector<64x128xf32> -> vector<64x128xf32>
    %52 = arith.addf %47, %51 : vector<64x128xf32>
    %c127_i32 = arith.constant 127 : i32
    %53 = tpu.dynamic_rotate %16 by %c127_i32 dim 1 : vector<200x128xf32>, i32 -> vector<200x128xf32>
    %54 = vector.broadcast %9 : vector<1x128xf32> to vector<200x128xf32>
    %55 = arith.mulf %53, %54 : vector<200x128xf32>
    %c5_36 = arith.constant 5 : index
    %c0_37 = arith.constant 0 : index
    %c0_38 = arith.constant 0 : index
    %56 = vector.load %arg3[%c5_36, %c0_37, %c0_38] : memref<9x64x200xbf16, #tpu.memory_space<vmem>>, vector<1x64x200xbf16>
    %57 = vector.shape_cast %56 : vector<1x64x200xbf16> to vector<64x200xbf16>
    %58 = arith.truncf %55 : vector<200x128xf32> to vector<200x128xbf16>
    %cst_39 = arith.constant dense<0.000000e+00> : vector<64x128xf32>
    %59 = tpu.matmul %57, %58, %cst_39 {dimension_numbers = #tpu.dot_dimension_numbers<[1], [0], [0], [1], [0, 0, 1, 1], [], []>} : vector<64x200xbf16>, vector<200x128xbf16>, vector<64x128xf32> -> vector<64x128xf32>
    %60 = arith.addf %52, %59 : vector<64x128xf32>
    %c121_i32 = arith.constant 121 : i32
    %61 = tpu.dynamic_rotate %16 by %c121_i32 dim 1 : vector<200x128xf32>, i32 -> vector<200x128xf32>
    %62 = vector.broadcast %11 : vector<1x128xf32> to vector<200x128xf32>
    %63 = arith.mulf %61, %62 : vector<200x128xf32>
    %c6_40 = arith.constant 6 : index
    %c0_41 = arith.constant 0 : index
    %c0_42 = arith.constant 0 : index
    %64 = vector.load %arg3[%c6_40, %c0_41, %c0_42] : memref<9x64x200xbf16, #tpu.memory_space<vmem>>, vector<1x64x200xbf16>
    %65 = vector.shape_cast %64 : vector<1x64x200xbf16> to vector<64x200xbf16>
    %66 = arith.truncf %63 : vector<200x128xf32> to vector<200x128xbf16>
    %cst_43 = arith.constant dense<0.000000e+00> : vector<64x128xf32>
    %67 = tpu.matmul %65, %66, %cst_43 {dimension_numbers = #tpu.dot_dimension_numbers<[1], [0], [0], [1], [0, 0, 1, 1], [], []>} : vector<64x200xbf16>, vector<200x128xbf16>, vector<64x128xf32> -> vector<64x128xf32>
    %68 = arith.addf %60, %67 : vector<64x128xf32>
    %c120_i32 = arith.constant 120 : i32
    %69 = tpu.dynamic_rotate %16 by %c120_i32 dim 1 : vector<200x128xf32>, i32 -> vector<200x128xf32>
    %70 = vector.broadcast %13 : vector<1x128xf32> to vector<200x128xf32>
    %71 = arith.mulf %69, %70 : vector<200x128xf32>
    %c7_44 = arith.constant 7 : index
    %c0_45 = arith.constant 0 : index
    %c0_46 = arith.constant 0 : index
    %72 = vector.load %arg3[%c7_44, %c0_45, %c0_46] : memref<9x64x200xbf16, #tpu.memory_space<vmem>>, vector<1x64x200xbf16>
    %73 = vector.shape_cast %72 : vector<1x64x200xbf16> to vector<64x200xbf16>
    %74 = arith.truncf %71 : vector<200x128xf32> to vector<200x128xbf16>
    %cst_47 = arith.constant dense<0.000000e+00> : vector<64x128xf32>
    %75 = tpu.matmul %73, %74, %cst_47 {dimension_numbers = #tpu.dot_dimension_numbers<[1], [0], [0], [1], [0, 0, 1, 1], [], []>} : vector<64x200xbf16>, vector<200x128xbf16>, vector<64x128xf32> -> vector<64x128xf32>
    %76 = arith.addf %68, %75 : vector<64x128xf32>
    %c119_i32 = arith.constant 119 : i32
    %77 = tpu.dynamic_rotate %16 by %c119_i32 dim 1 : vector<200x128xf32>, i32 -> vector<200x128xf32>
    %78 = vector.broadcast %15 : vector<1x128xf32> to vector<200x128xf32>
    %79 = arith.mulf %77, %78 : vector<200x128xf32>
    %c8_48 = arith.constant 8 : index
    %c0_49 = arith.constant 0 : index
    %c0_50 = arith.constant 0 : index
    %80 = vector.load %arg3[%c8_48, %c0_49, %c0_50] : memref<9x64x200xbf16, #tpu.memory_space<vmem>>, vector<1x64x200xbf16>
    %81 = vector.shape_cast %80 : vector<1x64x200xbf16> to vector<64x200xbf16>
    %82 = arith.truncf %79 : vector<200x128xf32> to vector<200x128xbf16>
    %cst_51 = arith.constant dense<0.000000e+00> : vector<64x128xf32>
    %83 = tpu.matmul %81, %82, %cst_51 {dimension_numbers = #tpu.dot_dimension_numbers<[1], [0], [0], [1], [0, 0, 1, 1], [], []>} : vector<64x200xbf16>, vector<200x128xbf16>, vector<64x128xf32> -> vector<64x128xf32>
    %84 = arith.addf %76, %83 : vector<64x128xf32>
    %c0_52 = arith.constant 0 : index
    %c0_53 = arith.constant 0 : index
    %85 = vector.load %arg4[%c0_52, %c0_53] : memref<64x1xf32, #tpu.memory_space<vmem>>, vector<64x1xf32>
    %86 = vector.broadcast %85 : vector<64x1xf32> to vector<64x128xf32>
    %87 = arith.mulf %84, %86 : vector<64x128xf32>
    %c0_54 = arith.constant 0 : index
    %c0_55 = arith.constant 0 : index
    %88 = vector.load %arg5[%c0_54, %c0_55] : memref<64x1xf32, #tpu.memory_space<vmem>>, vector<64x1xf32>
    %89 = vector.broadcast %88 : vector<64x1xf32> to vector<64x128xf32>
    %90 = arith.addf %87, %89 : vector<64x128xf32>
    %c0_56 = arith.constant 0 : index
    %c0_57 = arith.constant 0 : index
    %91 = vector.load %arg12[%c0_56, %c0_57] : memref<64x128xf32, #tpu.memory_space<vmem>>, vector<64x128xf32>
    tpu.vector_store %arg12[%c0_56, %c0_57], %90 {strides = array<i32>} : memref<64x128xf32, #tpu.memory_space<vmem>>, vector<64x128xf32>,
    %c0_58 = arith.constant 0 : index
    %c0_59 = arith.constant 0 : index
    %92 = vector.load %arg12[%c0_58, %c0_59] : memref<64x128xf32, #tpu.memory_space<vmem>>, vector<64x128xf32>
    %c9_i32_60 = arith.constant 9 : i32
    %93 = tpu.dynamic_rotate %92 by %c9_i32_60 dim 1 : vector<64x128xf32>, i32 -> vector<64x128xf32>
    %94 = vector.broadcast %1 : vector<1x128xf32> to vector<64x128xf32>
    %95 = arith.mulf %93, %94 : vector<64x128xf32>
    %c0_61 = arith.constant 0 : index
    %c0_62 = arith.constant 0 : index
    %c0_63 = arith.constant 0 : index
    %96 = vector.load %arg6[%c0_61, %c0_62, %c0_63] : memref<9x64x64xbf16, #tpu.memory_space<vmem>>, vector<1x64x64xbf16>
    %97 = vector.shape_cast %96 : vector<1x64x64xbf16> to vector<64x64xbf16>
    %98 = arith.truncf %95 : vector<64x128xf32> to vector<64x128xbf16>
    %cst_64 = arith.constant dense<0.000000e+00> : vector<64x128xf32>
    %99 = tpu.matmul %97, %98, %cst_64 {dimension_numbers = #tpu.dot_dimension_numbers<[1], [0], [0], [1], [0, 0, 1, 1], [], []>} : vector<64x64xbf16>, vector<64x128xbf16>, vector<64x128xf32> -> vector<64x128xf32>
    %c8_i32_65 = arith.constant 8 : i32
    %100 = tpu.dynamic_rotate %92 by %c8_i32_65 dim 1 : vector<64x128xf32>, i32 -> vector<64x128xf32>
    %101 = vector.broadcast %3 : vector<1x128xf32> to vector<64x128xf32>
    %102 = arith.mulf %100, %101 : vector<64x128xf32>
    %c1_66 = arith.constant 1 : index
    %c0_67 = arith.constant 0 : index
    %c0_68 = arith.constant 0 : index
    %103 = vector.load %arg6[%c1_66, %c0_67, %c0_68] : memref<9x64x64xbf16, #tpu.memory_space<vmem>>, vector<1x64x64xbf16>
    %104 = vector.shape_cast %103 : vector<1x64x64xbf16> to vector<64x64xbf16>
    %105 = arith.truncf %102 : vector<64x128xf32> to vector<64x128xbf16>
    %cst_69 = arith.constant dense<0.000000e+00> : vector<64x128xf32>
    %106 = tpu.matmul %104, %105, %cst_69 {dimension_numbers = #tpu.dot_dimension_numbers<[1], [0], [0], [1], [0, 0, 1, 1], [], []>} : vector<64x64xbf16>, vector<64x128xbf16>, vector<64x128xf32> -> vector<64x128xf32>
    %107 = arith.addf %99, %106 : vector<64x128xf32>
    %c7_i32_70 = arith.constant 7 : i32
    %108 = tpu.dynamic_rotate %92 by %c7_i32_70 dim 1 : vector<64x128xf32>, i32 -> vector<64x128xf32>
    %109 = vector.broadcast %5 : vector<1x128xf32> to vector<64x128xf32>
    %110 = arith.mulf %108, %109 : vector<64x128xf32>
    %c2_71 = arith.constant 2 : index
    %c0_72 = arith.constant 0 : index
    %c0_73 = arith.constant 0 : index
    %111 = vector.load %arg6[%c2_71, %c0_72, %c0_73] : memref<9x64x64xbf16, #tpu.memory_space<vmem>>, vector<1x64x64xbf16>
    %112 = vector.shape_cast %111 : vector<1x64x64xbf16> to vector<64x64xbf16>
    %113 = arith.truncf %110 : vector<64x128xf32> to vector<64x128xbf16>
    %cst_74 = arith.constant dense<0.000000e+00> : vector<64x128xf32>
    %114 = tpu.matmul %112, %113, %cst_74 {dimension_numbers = #tpu.dot_dimension_numbers<[1], [0], [0], [1], [0, 0, 1, 1], [], []>} : vector<64x64xbf16>, vector<64x128xbf16>, vector<64x128xf32> -> vector<64x128xf32>
    %115 = arith.addf %107, %114 : vector<64x128xf32>
    %c1_i32_75 = arith.constant 1 : i32
    %116 = tpu.dynamic_rotate %92 by %c1_i32_75 dim 1 : vector<64x128xf32>, i32 -> vector<64x128xf32>
    %117 = vector.broadcast %7 : vector<1x128xf32> to vector<64x128xf32>
    %118 = arith.mulf %116, %117 : vector<64x128xf32>
    %c3_76 = arith.constant 3 : index
    %c0_77 = arith.constant 0 : index
    %c0_78 = arith.constant 0 : index
    %119 = vector.load %arg6[%c3_76, %c0_77, %c0_78] : memref<9x64x64xbf16, #tpu.memory_space<vmem>>, vector<1x64x64xbf16>
    %120 = vector.shape_cast %119 : vector<1x64x64xbf16> to vector<64x64xbf16>
    %121 = arith.truncf %118 : vector<64x128xf32> to vector<64x128xbf16>
    %cst_79 = arith.constant dense<0.000000e+00> : vector<64x128xf32>
    %122 = tpu.matmul %120, %121, %cst_79 {dimension_numbers = #tpu.dot_dimension_numbers<[1], [0], [0], [1], [0, 0, 1, 1], [], []>} : vector<64x64xbf16>, vector<64x128xbf16>, vector<64x128xf32> -> vector<64x128xf32>
    %123 = arith.addf %115, %122 : vector<64x128xf32>
    %c4_80 = arith.constant 4 : index
    %c0_81 = arith.constant 0 : index
    %c0_82 = arith.constant 0 : index
    %124 = vector.load %arg6[%c4_80, %c0_81, %c0_82] : memref<9x64x64xbf16, #tpu.memory_space<vmem>>, vector<1x64x64xbf16>
    %125 = vector.shape_cast %124 : vector<1x64x64xbf16> to vector<64x64xbf16>
    %126 = arith.truncf %92 : vector<64x128xf32> to vector<64x128xbf16>
    %cst_83 = arith.constant dense<0.000000e+00> : vector<64x128xf32>
    %127 = tpu.matmul %125, %126, %cst_83 {dimension_numbers = #tpu.dot_dimension_numbers<[1], [0], [0], [1], [0, 0, 1, 1], [], []>} : vector<64x64xbf16>, vector<64x128xbf16>, vector<64x128xf32> -> vector<64x128xf32>
    %128 = arith.addf %123, %127 : vector<64x128xf32>
    %c127_i32_84 = arith.constant 127 : i32
    %129 = tpu.dynamic_rotate %92 by %c127_i32_84 dim 1 : vector<64x128xf32>, i32 -> vector<64x128xf32>
    %130 = vector.broadcast %9 : vector<1x128xf32> to vector<64x128xf32>
    %131 = arith.mulf %129, %130 : vector<64x128xf32>
    %c5_85 = arith.constant 5 : index
    %c0_86 = arith.constant 0 : index
    %c0_87 = arith.constant 0 : index
    %132 = vector.load %arg6[%c5_85, %c0_86, %c0_87] : memref<9x64x64xbf16, #tpu.memory_space<vmem>>, vector<1x64x64xbf16>
    %133 = vector.shape_cast %132 : vector<1x64x64xbf16> to vector<64x64xbf16>
    %134 = arith.truncf %131 : vector<64x128xf32> to vector<64x128xbf16>
    %cst_88 = arith.constant dense<0.000000e+00> : vector<64x128xf32>
    %135 = tpu.matmul %133, %134, %cst_88 {dimension_numbers = #tpu.dot_dimension_numbers<[1], [0], [0], [1], [0, 0, 1, 1], [], []>} : vector<64x64xbf16>, vector<64x128xbf16>, vector<64x128xf32> -> vector<64x128xf32>
    %136 = arith.addf %128, %135 : vector<64x128xf32>
    %c121_i32_89 = arith.constant 121 : i32
    %137 = tpu.dynamic_rotate %92 by %c121_i32_89 dim 1 : vector<64x128xf32>, i32 -> vector<64x128xf32>
    %138 = vector.broadcast %11 : vector<1x128xf32> to vector<64x128xf32>
    %139 = arith.mulf %137, %138 : vector<64x128xf32>
    %c6_90 = arith.constant 6 : index
    %c0_91 = arith.constant 0 : index
    %c0_92 = arith.constant 0 : index
    %140 = vector.load %arg6[%c6_90, %c0_91, %c0_92] : memref<9x64x64xbf16, #tpu.memory_space<vmem>>, vector<1x64x64xbf16>
    %141 = vector.shape_cast %140 : vector<1x64x64xbf16> to vector<64x64xbf16>
    %142 = arith.truncf %139 : vector<64x128xf32> to vector<64x128xbf16>
    %cst_93 = arith.constant dense<0.000000e+00> : vector<64x128xf32>
    %143 = tpu.matmul %141, %142, %cst_93 {dimension_numbers = #tpu.dot_dimension_numbers<[1], [0], [0], [1], [0, 0, 1, 1], [], []>} : vector<64x64xbf16>, vector<64x128xbf16>, vector<64x128xf32> -> vector<64x128xf32>
    %144 = arith.addf %136, %143 : vector<64x128xf32>
    %c120_i32_94 = arith.constant 120 : i32
    %145 = tpu.dynamic_rotate %92 by %c120_i32_94 dim 1 : vector<64x128xf32>, i32 -> vector<64x128xf32>
    %146 = vector.broadcast %13 : vector<1x128xf32> to vector<64x128xf32>
    %147 = arith.mulf %145, %146 : vector<64x128xf32>
    %c7_95 = arith.constant 7 : index
    %c0_96 = arith.constant 0 : index
    %c0_97 = arith.constant 0 : index
    %148 = vector.load %arg6[%c7_95, %c0_96, %c0_97] : memref<9x64x64xbf16, #tpu.memory_space<vmem>>, vector<1x64x64xbf16>
    %149 = vector.shape_cast %148 : vector<1x64x64xbf16> to vector<64x64xbf16>
    %150 = arith.truncf %147 : vector<64x128xf32> to vector<64x128xbf16>
    %cst_98 = arith.constant dense<0.000000e+00> : vector<64x128xf32>
    %151 = tpu.matmul %149, %150, %cst_98 {dimension_numbers = #tpu.dot_dimension_numbers<[1], [0], [0], [1], [0, 0, 1, 1], [], []>} : vector<64x64xbf16>, vector<64x128xbf16>, vector<64x128xf32> -> vector<64x128xf32>
    %152 = arith.addf %144, %151 : vector<64x128xf32>
    %c119_i32_99 = arith.constant 119 : i32
    %153 = tpu.dynamic_rotate %92 by %c119_i32_99 dim 1 : vector<64x128xf32>, i32 -> vector<64x128xf32>
    %154 = vector.broadcast %15 : vector<1x128xf32> to vector<64x128xf32>
    %155 = arith.mulf %153, %154 : vector<64x128xf32>
    %c8_100 = arith.constant 8 : index
    %c0_101 = arith.constant 0 : index
    %c0_102 = arith.constant 0 : index
    %156 = vector.load %arg6[%c8_100, %c0_101, %c0_102] : memref<9x64x64xbf16, #tpu.memory_space<vmem>>, vector<1x64x64xbf16>
    %157 = vector.shape_cast %156 : vector<1x64x64xbf16> to vector<64x64xbf16>
    %158 = arith.truncf %155 : vector<64x128xf32> to vector<64x128xbf16>
    %cst_103 = arith.constant dense<0.000000e+00> : vector<64x128xf32>
    %159 = tpu.matmul %157, %158, %cst_103 {dimension_numbers = #tpu.dot_dimension_numbers<[1], [0], [0], [1], [0, 0, 1, 1], [], []>} : vector<64x64xbf16>, vector<64x128xbf16>, vector<64x128xf32> -> vector<64x128xf32>
    %160 = arith.addf %152, %159 : vector<64x128xf32>
    %c0_104 = arith.constant 0 : index
    %c0_105 = arith.constant 0 : index
    %161 = vector.load %arg7[%c0_104, %c0_105] : memref<64x1xf32, #tpu.memory_space<vmem>>, vector<64x1xf32>
    %162 = vector.broadcast %161 : vector<64x1xf32> to vector<64x128xf32>
    %163 = arith.mulf %160, %162 : vector<64x128xf32>
    %c0_106 = arith.constant 0 : index
    %c0_107 = arith.constant 0 : index
    %164 = vector.load %arg8[%c0_106, %c0_107] : memref<64x1xf32, #tpu.memory_space<vmem>>, vector<64x1xf32>
    %165 = vector.broadcast %164 : vector<64x1xf32> to vector<64x128xf32>
    %166 = arith.addf %163, %165 : vector<64x128xf32>
    %c0_108 = arith.constant 0 : index
    %c0_109 = arith.constant 0 : index
    %167 = vector.load %arg12[%c0_108, %c0_109] : memref<64x128xf32, #tpu.memory_space<vmem>>, vector<64x128xf32>
    tpu.vector_store %arg12[%c0_108, %c0_109], %166 {strides = array<i32>} : memref<64x128xf32, #tpu.memory_space<vmem>>, vector<64x128xf32>,
    %c0_110 = arith.constant 0 : index
    %c0_111 = arith.constant 0 : index
    %168 = vector.load %arg12[%c0_110, %c0_111] : memref<64x128xf32, #tpu.memory_space<vmem>>, vector<64x128xf32>
    %c9_i32_112 = arith.constant 9 : i32
    %169 = tpu.dynamic_rotate %168 by %c9_i32_112 dim 1 : vector<64x128xf32>, i32 -> vector<64x128xf32>
    %170 = vector.broadcast %1 : vector<1x128xf32> to vector<64x128xf32>
    %171 = arith.mulf %169, %170 : vector<64x128xf32>
    %c0_113 = arith.constant 0 : index
    %c0_114 = arith.constant 0 : index
    %c0_115 = arith.constant 0 : index
    %172 = vector.load %arg9[%c0_113, %c0_114, %c0_115] : memref<9x64x64xbf16, #tpu.memory_space<vmem>>, vector<1x64x64xbf16>
    %173 = vector.shape_cast %172 : vector<1x64x64xbf16> to vector<64x64xbf16>
    %174 = arith.truncf %171 : vector<64x128xf32> to vector<64x128xbf16>
    %cst_116 = arith.constant dense<0.000000e+00> : vector<64x128xf32>
    %175 = tpu.matmul %173, %174, %cst_116 {dimension_numbers = #tpu.dot_dimension_numbers<[1], [0], [0], [1], [0, 0, 1, 1], [], []>} : vector<64x64xbf16>, vector<64x128xbf16>, vector<64x128xf32> -> vector<64x128xf32>
    %c8_i32_117 = arith.constant 8 : i32
    %176 = tpu.dynamic_rotate %168 by %c8_i32_117 dim 1 : vector<64x128xf32>, i32 -> vector<64x128xf32>
    %177 = vector.broadcast %3 : vector<1x128xf32> to vector<64x128xf32>
    %178 = arith.mulf %176, %177 : vector<64x128xf32>
    %c1_118 = arith.constant 1 : index
    %c0_119 = arith.constant 0 : index
    %c0_120 = arith.constant 0 : index
    %179 = vector.load %arg9[%c1_118, %c0_119, %c0_120] : memref<9x64x64xbf16, #tpu.memory_space<vmem>>, vector<1x64x64xbf16>
    %180 = vector.shape_cast %179 : vector<1x64x64xbf16> to vector<64x64xbf16>
    %181 = arith.truncf %178 : vector<64x128xf32> to vector<64x128xbf16>
    %cst_121 = arith.constant dense<0.000000e+00> : vector<64x128xf32>
    %182 = tpu.matmul %180, %181, %cst_121 {dimension_numbers = #tpu.dot_dimension_numbers<[1], [0], [0], [1], [0, 0, 1, 1], [], []>} : vector<64x64xbf16>, vector<64x128xbf16>, vector<64x128xf32> -> vector<64x128xf32>
    %183 = arith.addf %175, %182 : vector<64x128xf32>
    %c7_i32_122 = arith.constant 7 : i32
    %184 = tpu.dynamic_rotate %168 by %c7_i32_122 dim 1 : vector<64x128xf32>, i32 -> vector<64x128xf32>
    %185 = vector.broadcast %5 : vector<1x128xf32> to vector<64x128xf32>
    %186 = arith.mulf %184, %185 : vector<64x128xf32>
    %c2_123 = arith.constant 2 : index
    %c0_124 = arith.constant 0 : index
    %c0_125 = arith.constant 0 : index
    %187 = vector.load %arg9[%c2_123, %c0_124, %c0_125] : memref<9x64x64xbf16, #tpu.memory_space<vmem>>, vector<1x64x64xbf16>
    %188 = vector.shape_cast %187 : vector<1x64x64xbf16> to vector<64x64xbf16>
    %189 = arith.truncf %186 : vector<64x128xf32> to vector<64x128xbf16>
    %cst_126 = arith.constant dense<0.000000e+00> : vector<64x128xf32>
    %190 = tpu.matmul %188, %189, %cst_126 {dimension_numbers = #tpu.dot_dimension_numbers<[1], [0], [0], [1], [0, 0, 1, 1], [], []>} : vector<64x64xbf16>, vector<64x128xbf16>, vector<64x128xf32> -> vector<64x128xf32>
    %191 = arith.addf %183, %190 : vector<64x128xf32>
    %c1_i32_127 = arith.constant 1 : i32
    %192 = tpu.dynamic_rotate %168 by %c1_i32_127 dim 1 : vector<64x128xf32>, i32 -> vector<64x128xf32>
    %193 = vector.broadcast %7 : vector<1x128xf32> to vector<64x128xf32>
    %194 = arith.mulf %192, %193 : vector<64x128xf32>
    %c3_128 = arith.constant 3 : index
    %c0_129 = arith.constant 0 : index
    %c0_130 = arith.constant 0 : index
    %195 = vector.load %arg9[%c3_128, %c0_129, %c0_130] : memref<9x64x64xbf16, #tpu.memory_space<vmem>>, vector<1x64x64xbf16>
    %196 = vector.shape_cast %195 : vector<1x64x64xbf16> to vector<64x64xbf16>
    %197 = arith.truncf %194 : vector<64x128xf32> to vector<64x128xbf16>
    %cst_131 = arith.constant dense<0.000000e+00> : vector<64x128xf32>
    %198 = tpu.matmul %196, %197, %cst_131 {dimension_numbers = #tpu.dot_dimension_numbers<[1], [0], [0], [1], [0, 0, 1, 1], [], []>} : vector<64x64xbf16>, vector<64x128xbf16>, vector<64x128xf32> -> vector<64x128xf32>
    %199 = arith.addf %191, %198 : vector<64x128xf32>
    %c4_132 = arith.constant 4 : index
    %c0_133 = arith.constant 0 : index
    %c0_134 = arith.constant 0 : index
    %200 = vector.load %arg9[%c4_132, %c0_133, %c0_134] : memref<9x64x64xbf16, #tpu.memory_space<vmem>>, vector<1x64x64xbf16>
    %201 = vector.shape_cast %200 : vector<1x64x64xbf16> to vector<64x64xbf16>
    %202 = arith.truncf %168 : vector<64x128xf32> to vector<64x128xbf16>
    %cst_135 = arith.constant dense<0.000000e+00> : vector<64x128xf32>
    %203 = tpu.matmul %201, %202, %cst_135 {dimension_numbers = #tpu.dot_dimension_numbers<[1], [0], [0], [1], [0, 0, 1, 1], [], []>} : vector<64x64xbf16>, vector<64x128xbf16>, vector<64x128xf32> -> vector<64x128xf32>
    %204 = arith.addf %199, %203 : vector<64x128xf32>
    %c127_i32_136 = arith.constant 127 : i32
    %205 = tpu.dynamic_rotate %168 by %c127_i32_136 dim 1 : vector<64x128xf32>, i32 -> vector<64x128xf32>
    %206 = vector.broadcast %9 : vector<1x128xf32> to vector<64x128xf32>
    %207 = arith.mulf %205, %206 : vector<64x128xf32>
    %c5_137 = arith.constant 5 : index
    %c0_138 = arith.constant 0 : index
    %c0_139 = arith.constant 0 : index
    %208 = vector.load %arg9[%c5_137, %c0_138, %c0_139] : memref<9x64x64xbf16, #tpu.memory_space<vmem>>, vector<1x64x64xbf16>
    %209 = vector.shape_cast %208 : vector<1x64x64xbf16> to vector<64x64xbf16>
    %210 = arith.truncf %207 : vector<64x128xf32> to vector<64x128xbf16>
    %cst_140 = arith.constant dense<0.000000e+00> : vector<64x128xf32>
    %211 = tpu.matmul %209, %210, %cst_140 {dimension_numbers = #tpu.dot_dimension_numbers<[1], [0], [0], [1], [0, 0, 1, 1], [], []>} : vector<64x64xbf16>, vector<64x128xbf16>, vector<64x128xf32> -> vector<64x128xf32>
    %212 = arith.addf %204, %211 : vector<64x128xf32>
    %c121_i32_141 = arith.constant 121 : i32
    %213 = tpu.dynamic_rotate %168 by %c121_i32_141 dim 1 : vector<64x128xf32>, i32 -> vector<64x128xf32>
    %214 = vector.broadcast %11 : vector<1x128xf32> to vector<64x128xf32>
    %215 = arith.mulf %213, %214 : vector<64x128xf32>
    %c6_142 = arith.constant 6 : index
    %c0_143 = arith.constant 0 : index
    %c0_144 = arith.constant 0 : index
    %216 = vector.load %arg9[%c6_142, %c0_143, %c0_144] : memref<9x64x64xbf16, #tpu.memory_space<vmem>>, vector<1x64x64xbf16>
    %217 = vector.shape_cast %216 : vector<1x64x64xbf16> to vector<64x64xbf16>
    %218 = arith.truncf %215 : vector<64x128xf32> to vector<64x128xbf16>
    %cst_145 = arith.constant dense<0.000000e+00> : vector<64x128xf32>
    %219 = tpu.matmul %217, %218, %cst_145 {dimension_numbers = #tpu.dot_dimension_numbers<[1], [0], [0], [1], [0, 0, 1, 1], [], []>} : vector<64x64xbf16>, vector<64x128xbf16>, vector<64x128xf32> -> vector<64x128xf32>
    %220 = arith.addf %212, %219 : vector<64x128xf32>
    %c120_i32_146 = arith.constant 120 : i32
    %221 = tpu.dynamic_rotate %168 by %c120_i32_146 dim 1 : vector<64x128xf32>, i32 -> vector<64x128xf32>
    %222 = vector.broadcast %13 : vector<1x128xf32> to vector<64x128xf32>
    %223 = arith.mulf %221, %222 : vector<64x128xf32>
    %c7_147 = arith.constant 7 : index
    %c0_148 = arith.constant 0 : index
    %c0_149 = arith.constant 0 : index
    %224 = vector.load %arg9[%c7_147, %c0_148, %c0_149] : memref<9x64x64xbf16, #tpu.memory_space<vmem>>, vector<1x64x64xbf16>
    %225 = vector.shape_cast %224 : vector<1x64x64xbf16> to vector<64x64xbf16>
    %226 = arith.truncf %223 : vector<64x128xf32> to vector<64x128xbf16>
    %cst_150 = arith.constant dense<0.000000e+00> : vector<64x128xf32>
    %227 = tpu.matmul %225, %226, %cst_150 {dimension_numbers = #tpu.dot_dimension_numbers<[1], [0], [0], [1], [0, 0, 1, 1], [], []>} : vector<64x64xbf16>, vector<64x128xbf16>, vector<64x128xf32> -> vector<64x128xf32>
    %228 = arith.addf %220, %227 : vector<64x128xf32>
    %c119_i32_151 = arith.constant 119 : i32
    %229 = tpu.dynamic_rotate %168 by %c119_i32_151 dim 1 : vector<64x128xf32>, i32 -> vector<64x128xf32>
    %230 = vector.broadcast %15 : vector<1x128xf32> to vector<64x128xf32>
    %231 = arith.mulf %229, %230 : vector<64x128xf32>
    %c8_152 = arith.constant 8 : index
    %c0_153 = arith.constant 0 : index
    %c0_154 = arith.constant 0 : index
    %232 = vector.load %arg9[%c8_152, %c0_153, %c0_154] : memref<9x64x64xbf16, #tpu.memory_space<vmem>>, vector<1x64x64xbf16>
    %233 = vector.shape_cast %232 : vector<1x64x64xbf16> to vector<64x64xbf16>
    %234 = arith.truncf %231 : vector<64x128xf32> to vector<64x128xbf16>
    %cst_155 = arith.constant dense<0.000000e+00> : vector<64x128xf32>
    %235 = tpu.matmul %233, %234, %cst_155 {dimension_numbers = #tpu.dot_dimension_numbers<[1], [0], [0], [1], [0, 0, 1, 1], [], []>} : vector<64x64xbf16>, vector<64x128xbf16>, vector<64x128xf32> -> vector<64x128xf32>
    %236 = arith.addf %228, %235 : vector<64x128xf32>
    %c0_156 = arith.constant 0 : index
    %c0_157 = arith.constant 0 : index
    %237 = vector.load %arg10[%c0_156, %c0_157] : memref<64x1xf32, #tpu.memory_space<vmem>>, vector<64x1xf32>
    %238 = vector.broadcast %237 : vector<64x1xf32> to vector<64x128xf32>
    %239 = arith.addf %236, %238 : vector<64x128xf32>
    %c0_158 = arith.constant 0 : index
    %c0_159 = arith.constant 0 : index
    %240 = vector.load %arg11[%c0_158, %c0_159] : memref<64x128xf32, #tpu.memory_space<vmem>>, vector<64x128xf32>
    tpu.vector_store %arg11[%c0_158, %c0_159], %239 {strides = array<i32>} : memref<64x128xf32, #tpu.memory_space<vmem>>, vector<64x128xf32>,
    return
  }
  func.func @transform_0(%arg0: i32) -> (i32, i32, i32) {
    %c0_i32 = arith.constant 0 : i32
    %c0_i32_0 = arith.constant 0 : i32
    %c0_i32_1 = arith.constant 0 : i32
    %c0_i32_2 = arith.constant 0 : i32
    return %c0_i32, %c0_i32_0, %c0_i32_1 : i32, i32, i32
  }
  func.func @transform_1(%arg0: i32) -> (i32, i32) {
    %c0_i32 = arith.constant 0 : i32
    %c0_i32_0 = arith.constant 0 : i32
    return %c0_i32, %arg0 : i32, i32
  }
  func.func @transform_2(%arg0: i32) -> (i32, i32, i32) {
    %c0_i32 = arith.constant 0 : i32
    %c0_i32_0 = arith.constant 0 : i32
    %c0_i32_1 = arith.constant 0 : i32
    %c0_i32_2 = arith.constant 0 : i32
    return %c0_i32, %c0_i32_0, %c0_i32_1 : i32, i32, i32
  }
  func.func @transform_3(%arg0: i32) -> (i32, i32) {
    %c0_i32 = arith.constant 0 : i32
    %c0_i32_0 = arith.constant 0 : i32
    %c0_i32_1 = arith.constant 0 : i32
    return %c0_i32, %c0_i32_0 : i32, i32
  }
  func.func @transform_4(%arg0: i32) -> (i32, i32) {
    %c0_i32 = arith.constant 0 : i32
    %c0_i32_0 = arith.constant 0 : i32
    %c0_i32_1 = arith.constant 0 : i32
    return %c0_i32, %c0_i32_0 : i32, i32
  }
  func.func @transform_5(%arg0: i32) -> (i32, i32, i32) {
    %c0_i32 = arith.constant 0 : i32
    %c0_i32_0 = arith.constant 0 : i32
    %c0_i32_1 = arith.constant 0 : i32
    %c0_i32_2 = arith.constant 0 : i32
    return %c0_i32, %c0_i32_0, %c0_i32_1 : i32, i32, i32
  }
  func.func @transform_6(%arg0: i32) -> (i32, i32) {
    %c0_i32 = arith.constant 0 : i32
    %c0_i32_0 = arith.constant 0 : i32
    %c0_i32_1 = arith.constant 0 : i32
    return %c0_i32, %c0_i32_0 : i32, i32
  }
  func.func @transform_7(%arg0: i32) -> (i32, i32) {
    %c0_i32 = arith.constant 0 : i32
    %c0_i32_0 = arith.constant 0 : i32
    %c0_i32_1 = arith.constant 0 : i32
    return %c0_i32, %c0_i32_0 : i32, i32
  }
  func.func @transform_8(%arg0: i32) -> (i32, i32, i32) {
    %c0_i32 = arith.constant 0 : i32
    %c0_i32_0 = arith.constant 0 : i32
    %c0_i32_1 = arith.constant 0 : i32
    %c0_i32_2 = arith.constant 0 : i32
    return %c0_i32, %c0_i32_0, %c0_i32_1 : i32, i32, i32
  }
  func.func @transform_9(%arg0: i32) -> (i32, i32) {
    %c0_i32 = arith.constant 0 : i32
    %c0_i32_0 = arith.constant 0 : i32
    %c0_i32_1 = arith.constant 0 : i32
    return %c0_i32, %c0_i32_0 : i32, i32
  }
  func.func @transform_10(%arg0: i32) -> (i32, i32) {
    %c0_i32 = arith.constant 0 : i32
    %c0_i32_0 = arith.constant 0 : i32
    return %c0_i32, %arg0 : i32, i32
  }
}

</mosaic_0001>

<llo_original>
// kernel: forward_pallas.1
$region0: #{forward_pallas.1}
  #allocation0 [shape = 'u32[]', space=smem, size = 0x4, offset = 0x4, fixed_abs, tag = 'smem constant byte address 0x4 - core index']
  #allocation1 [shape = 'u32[144,128]{1,0:T(1,128)}', space=vmem, size = 0x12000, scoped, tag = 'internal scratch']
  #allocation2 [shape = 'f32[64,128]{1,0:T(8,128)}', space=vmem, size = 0x8000, scoped, tag = 'scratch operand']
  %s0 = inlined_call_operand.vmem [shape: f32[9,1,128], index: 0, kind: input, shape index: {}]
  %s1 = inlined_call_operand.vmem [shape: f32[200,256], index: 1, kind: input, shape index: {}]
  %s2 = inlined_call_operand.vmem [shape: bf16[9,64,200], index: 2, kind: input, shape index: {}]
  %s3 = inlined_call_operand.vmem [shape: f32[64,1], index: 3, kind: input, shape index: {}]
  %s4 = inlined_call_operand.vmem [shape: f32[64,1], index: 4, kind: input, shape index: {}]
  %s5 = inlined_call_operand.vmem [shape: bf16[9,64,64], index: 5, kind: input, shape index: {}]
  %s6 = inlined_call_operand.vmem [shape: f32[64,1], index: 6, kind: input, shape index: {}]
  %s7 = inlined_call_operand.vmem [shape: f32[64,1], index: 7, kind: input, shape index: {}]
  %s8 = inlined_call_operand.vmem [shape: bf16[9,64,64], index: 8, kind: input, shape index: {}]
  %s9 = inlined_call_operand.vmem [shape: f32[64,1], index: 9, kind: input, shape index: {}]
  %s10 = inlined_call_operand.vmem [shape: f32[64,256], index: 10, kind: output, shape index: {}]
  %s11 = sld [smem:[#allocation0]]
  $region145: #{forward_pallas.1} parent=0
    _
  %s13 = ssub.s32 1, %s11
  %s14 = scalar_select 0, %s13, %s11
  $region1: #{forward_pallas.1} parent=0
    #allocation3 [shape = 'u8[204800]{0}', space=vmem, size = 0x32000, scoped, tag = 'input window, operand 1']
    #allocation4 [shape = 'u8[65536]{0}', space=vmem, size = 0x10000, scoped, tag = 'output window, operand 0']
    loop: start=0, step=1, limit=4
    $region2: #{forward_pallas.1} parent=1 // loop_pre_header
      _
    $region3: #{forward_pallas.1} parent=1 // loop_header
      %s16 = sphi 0, %s20
      %p17 = scmp.ge.s32.totalorder %s16, 4
      %s24 = sphi 0, %s24
      %s26 = sphi 0, %s24
      %s27 = sphi 0, %s26
      %s41 = sphi 0, %s27
      %s47 = sphi 0, %s49
      %s50 = sphi 0, %s47
      %s51 = sphi 0, %s50
      %s67 = sphi 0, %s51
      %s71 = sphi 0, %s71
      %s73 = sphi 0, %s71
      %s74 = sphi 0, %s73
      %s88 = sphi 0, %s74
      %s92 = sphi 0, %s92
      %s94 = sphi 0, %s92
      %s95 = sphi 0, %s94
      %s109 = sphi 0, %s95
      %s113 = sphi 0, %s113
      %s115 = sphi 0, %s113
      %s116 = sphi 0, %s115
      %s130 = sphi 0, %s116
      %s134 = sphi 0, %s134
      %s136 = sphi 0, %s134
      %s137 = sphi 0, %s136
      %s151 = sphi 0, %s137
      %s155 = sphi 0, %s155
      %s157 = sphi 0, %s155
      %s158 = sphi 0, %s157
      %s172 = sphi 0, %s158
      %s176 = sphi 0, %s176
      %s178 = sphi 0, %s176
      %s179 = sphi 0, %s178
      %s193 = sphi 0, %s179
      %s197 = sphi 0, %s197
      %s199 = sphi 0, %s197
      %s200 = sphi 0, %s199
      %s214 = sphi 0, %s200
      %s218 = sphi 0, %s218
      %s220 = sphi 0, %s218
      %s221 = sphi 0, %s220
      %s235 = sphi 0, %s221
      %s241 = sphi 0, %s243
      %s244 = sphi 0, %s241
      %s245 = sphi 0, %s244
      %s261 = sphi 0, %s245
    $region4: #{forward_pallas.1} parent=1 // loop_header_branch
      %19 = sbr.rel (%p17) target = $region8
    $region5: #{forward_pallas.1} parent=1 // loop_body
      %s21 = ssub.s32 %s16, 1
      %s22 = ssub.s32 %s16, 2
      %s23 = sadd.s32 %s16, 1
      %s25 = sadd.s32 %s24, 1
      %p28 = scmp.eq.s32.totalorder %s16, 1
      %p29 = scmp.ne.s32.totalorder %s24, %s26
      %p30 = scmp.eq.s32.totalorder %s16, 0
      %p31 = por %p29, %p30
      %p32 = scmp.ne.s32.totalorder %s24, %s26
      %p33 = scmp.eq.s32.totalorder %s21, 1
      %p34 = por %p32, %p33
      %p35 = scmp.ne.s32.totalorder %s26, %s27
      %p36 = scmp.eq.s32.totalorder %s21, 0
      %p37 = por %p35, %p36
      %p38 = scmp.ne.s32.totalorder %s26, %s27
      %p39 = scmp.eq.s32.totalorder %s22, 1
      %p40 = por %p38, %p39
      %p42 = scmp.ne.s32.totalorder %s27, %s41
      %p43 = scmp.eq.s32.totalorder %s22, 0
      %p44 = por %p42, %p43
      %s45 = ssub.s32 %s16, %s23
      %p46 = scmp.eq.s32.totalorder %s45, 0
      %s48 = sadd.s32 %s47, 1
      %s49 = scalar_select %p46, %s47, %s48
      %p52 = pneg %p46
      %p53 = scmp.eq.s32.totalorder %s16, 1
      %p54 = por %p52, %p53
      %p55 = scmp.ne.s32.totalorder %s47, %s50
      %p56 = scmp.eq.s32.totalorder %s16, 0
      %p57 = por %p55, %p56
      %p58 = scmp.ne.s32.totalorder %s47, %s50
      %p59 = scmp.eq.s32.totalorder %s21, 1
      %p60 = por %p58, %p59
      %p61 = scmp.ne.s32.totalorder %s50, %s51
      %p62 = scmp.eq.s32.totalorder %s21, 0
      %p63 = por %p61, %p62
      %p64 = scmp.ne.s32.totalorder %s50, %s51
      %p65 = scmp.eq.s32.totalorder %s22, 1
      %p66 = por %p64, %p65
      %p68 = scmp.ne.s32.totalorder %s51, %s67
      %p69 = scmp.eq.s32.totalorder %s22, 0
      %p70 = por %p68, %p69
      %s72 = sadd.s32 %s71, 1
      %p75 = scmp.eq.s32.totalorder %s16, 1
      %p76 = scmp.ne.s32.totalorder %s71, %s73
      %p77 = scmp.eq.s32.totalorder %s16, 0
      %p78 = por %p76, %p77
      %p79 = scmp.ne.s32.totalorder %s71, %s73
      %p80 = scmp.eq.s32.totalorder %s21, 1
      %p81 = por %p79, %p80
      %p82 = scmp.ne.s32.totalorder %s73, %s74
      %p83 = scmp.eq.s32.totalorder %s21, 0
      %p84 = por %p82, %p83
      %p85 = scmp.ne.s32.totalorder %s73, %s74
      %p86 = scmp.eq.s32.totalorder %s22, 1
      %p87 = por %p85, %p86
      %p89 = scmp.ne.s32.totalorder %s74, %s88
      %p90 = scmp.eq.s32.totalorder %s22, 0
      %p91 = por %p89, %p90
      %s93 = sadd.s32 %s92, 1
      %p96 = scmp.eq.s32.totalorder %s16, 1
      %p97 = scmp.ne.s32.totalorder %s92, %s94
      %p98 = scmp.eq.s32.totalorder %s16, 0
      %p99 = por %p97, %p98
      %p100 = scmp.ne.s32.totalorder %s92, %s94
      %p101 = scmp.eq.s32.totalorder %s21, 1
      %p102 = por %p100, %p101
      %p103 = scmp.ne.s32.totalorder %s94, %s95
      %p104 = scmp.eq.s32.totalorder %s21, 0
      %p105 = por %p103, %p104
      %p106 = scmp.ne.s32.totalorder %s94, %s95
      %p107 = scmp.eq.s32.totalorder %s22, 1
      %p108 = por %p106, %p107
      %p110 = scmp.ne.s32.totalorder %s95, %s109
      %p111 = scmp.eq.s32.totalorder %s22, 0
      %p112 = por %p110, %p111
      %s114 = sadd.s32 %s113, 1
      %p117 = scmp.eq.s32.totalorder %s16, 1
      %p118 = scmp.ne.s32.totalorder %s113, %s115
      %p119 = scmp.eq.s32.totalorder %s16, 0
      %p120 = por %p118, %p119
      %p121 = scmp.ne.s32.totalorder %s113, %s115
      %p122 = scmp.eq.s32.totalorder %s21, 1
      %p123 = por %p121, %p122
      %p124 = scmp.ne.s32.totalorder %s115, %s116
      %p125 = scmp.eq.s32.totalorder %s21, 0
      %p126 = por %p124, %p125
      %p127 = scmp.ne.s32.totalorder %s115, %s116
      %p128 = scmp.eq.s32.totalorder %s22, 1
      %p129 = por %p127, %p128
      %p131 = scmp.ne.s32.totalorder %s116, %s130
      %p132 = scmp.eq.s32.totalorder %s22, 0
      %p133 = por %p131, %p132
      %s135 = sadd.s32 %s134, 1
      %p138 = scmp.eq.s32.totalorder %s16, 1
      %p139 = scmp.ne.s32.totalorder %s134, %s136
      %p140 = scmp.eq.s32.totalorder %s16, 0
      %p141 = por %p139, %p140
      %p142 = scmp.ne.s32.totalorder %s134, %s136
      %p143 = scmp.eq.s32.totalorder %s21, 1
      %p144 = por %p142, %p143
      %p145 = scmp.ne.s32.totalorder %s136, %s137
      %p146 = scmp.eq.s32.totalorder %s21, 0
      %p147 = por %p145, %p146
      %p148 = scmp.ne.s32.totalorder %s136, %s137
      %p149 = scmp.eq.s32.totalorder %s22, 1
      %p150 = por %p148, %p149
      %p152 = scmp.ne.s32.totalorder %s137, %s151
      %p153 = scmp.eq.s32.totalorder %s22, 0
      %p154 = por %p152, %p153
      %s156 = sadd.s32 %s155, 1
      %p159 = scmp.eq.s32.totalorder %s16, 1
      %p160 = scmp.ne.s32.totalorder %s155, %s157
      %p161 = scmp.eq.s32.totalorder %s16, 0
      %p162 = por %p160, %p161
      %p163 = scmp.ne.s32.totalorder %s155, %s157
      %p164 = scmp.eq.s32.totalorder %s21, 1
      %p165 = por %p163, %p164
      %p166 = scmp.ne.s32.totalorder %s157, %s158
      %p167 = scmp.eq.s32.totalorder %s21, 0
      %p168 = por %p166, %p167
      %p169 = scmp.ne.s32.totalorder %s157, %s158
      %p170 = scmp.eq.s32.totalorder %s22, 1
      %p171 = por %p169, %p170
      %p173 = scmp.ne.s32.totalorder %s158, %s172
      %p174 = scmp.eq.s32.totalorder %s22, 0
      %p175 = por %p173, %p174
      %s177 = sadd.s32 %s176, 1
      %p180 = scmp.eq.s32.totalorder %s16, 1
      %p181 = scmp.ne.s32.totalorder %s176, %s178
      %p182 = scmp.eq.s32.totalorder %s16, 0
      %p183 = por %p181, %p182
      %p184 = scmp.ne.s32.totalorder %s176, %s178
      %p185 = scmp.eq.s32.totalorder %s21, 1
      %p186 = por %p184, %p185
      %p187 = scmp.ne.s32.totalorder %s178, %s179
      %p188 = scmp.eq.s32.totalorder %s21, 0
      %p189 = por %p187, %p188
      %p190 = scmp.ne.s32.totalorder %s178, %s179
      %p191 = scmp.eq.s32.totalorder %s22, 1
      %p192 = por %p190, %p191
      %p194 = scmp.ne.s32.totalorder %s179, %s193
      %p195 = scmp.eq.s32.totalorder %s22, 0
      %p196 = por %p194, %p195
      %s198 = sadd.s32 %s197, 1
      %p201 = scmp.eq.s32.totalorder %s16, 1
      %p202 = scmp.ne.s32.totalorder %s197, %s199
      %p203 = scmp.eq.s32.totalorder %s16, 0
      %p204 = por %p202, %p203
      %p205 = scmp.ne.s32.totalorder %s197, %s199
      %p206 = scmp.eq.s32.totalorder %s21, 1
      %p207 = por %p205, %p206
      %p208 = scmp.ne.s32.totalorder %s199, %s200
      %p209 = scmp.eq.s32.totalorder %s21, 0
      %p210 = por %p208, %p209
      %p211 = scmp.ne.s32.totalorder %s199, %s200
      %p212 = scmp.eq.s32.totalorder %s22, 1
      %p213 = por %p211, %p212
      %p215 = scmp.ne.s32.totalorder %s200, %s214
      %p216 = scmp.eq.s32.totalorder %s22, 0
      %p217 = por %p215, %p216
      %s219 = sadd.s32 %s218, 1
      %p222 = scmp.eq.s32.totalorder %s16, 1
      %p223 = scmp.ne.s32.totalorder %s218, %s220
      %p224 = scmp.eq.s32.totalorder %s16, 0
      %p225 = por %p223, %p224
      %p226 = scmp.ne.s32.totalorder %s218, %s220
      %p227 = scmp.eq.s32.totalorder %s21, 1
      %p228 = por %p226, %p227
      %p229 = scmp.ne.s32.totalorder %s220, %s221
      %p230 = scmp.eq.s32.totalorder %s21, 0
      %p231 = por %p229, %p230
      %p232 = scmp.ne.s32.totalorder %s220, %s221
      %p233 = scmp.eq.s32.totalorder %s22, 1
      %p234 = por %p232, %p233
      %p236 = scmp.ne.s32.totalorder %s221, %s235
      %p237 = scmp.eq.s32.totalorder %s22, 0
      %p238 = por %p236, %p237
      %s239 = ssub.s32 %s16, %s23
      %p240 = scmp.eq.s32.totalorder %s239, 0
      %s242 = sadd.s32 %s241, 1
      %s243 = scalar_select %p240, %s241, %s242
      %p246 = pneg %p240
      %p247 = scmp.eq.s32.totalorder %s16, 1
      %p248 = por %p246, %p247
      %p249 = scmp.ne.s32.totalorder %s241, %s244
      %p250 = scmp.eq.s32.totalorder %s16, 0
      %p251 = por %p249, %p250
      %p252 = scmp.ne.s32.totalorder %s241, %s244
      %p253 = scmp.eq.s32.totalorder %s21, 1
      %p254 = por %p252, %p253
      %p255 = scmp.ne.s32.totalorder %s244, %s245
      %p256 = scmp.eq.s32.totalorder %s21, 0
      %p257 = por %p255, %p256
      %p258 = scmp.ne.s32.totalorder %s244, %s245
      %p259 = scmp.eq.s32.totalorder %s22, 1
      %p260 = por %p258, %p259
      %p262 = scmp.ne.s32.totalorder %s245, %s261
      %p263 = scmp.eq.s32.totalorder %s22, 0
      %p264 = por %p262, %p263
      %p265 = scmp.le.s32.totalorder 1, %s16
      %p266 = scmp.lt.s32.totalorder %s16, 3
      %p267 = pnand %p265, %p266
      %p268 = pneg %p267
      // Predicated region
      $region9: #{forward_pallas.1} parent=5 // pred_check
        _
      $region10: #{forward_pallas.1} parent=5 // pred_check_branch
        %270 = sbr.rel (%p267) target = $region12
      $region11: #{forward_pallas.1} parent=5 // pred_region
        %s271 = ssub.s32 %s16, 1
        // Predicated region
        $region13: #{forward_pallas.1} parent=11 // pred_check
          %p272 = pneg %p37
        $region14: #{forward_pallas.1} parent=11 // pred_check_branch
          %274 = sbr.rel (%p272) target = $region16
        $region15: #{forward_pallas.1} parent=11 // pred_region
          _
        $region16: #{forward_pallas.1} parent=11 // pred_fallthru
          _
        // Predicated region
        $region17: #{forward_pallas.1} parent=11 // pred_check
          %p275 = pneg %p84
        $region18: #{forward_pallas.1} parent=11 // pred_check_branch
          %277 = sbr.rel (%p275) target = $region20
        $region19: #{forward_pallas.1} parent=11 // pred_region
          _
        $region20: #{forward_pallas.1} parent=11 // pred_fallthru
          _
        // Predicated region
        $region21: #{forward_pallas.1} parent=11 // pred_check
          %p278 = pneg %p105
        $region22: #{forward_pallas.1} parent=11 // pred_check_branch
          %280 = sbr.rel (%p278) target = $region24
        $region23: #{forward_pallas.1} parent=11 // pred_region
          _
        $region24: #{forward_pallas.1} parent=11 // pred_fallthru
          _
        // Predicated region
        $region25: #{forward_pallas.1} parent=11 // pred_check
          %p281 = pneg %p126
        $region26: #{forward_pallas.1} parent=11 // pred_check_branch
          %283 = sbr.rel (%p281) target = $region28
        $region27: #{forward_pallas.1} parent=11 // pred_region
          _
        $region28: #{forward_pallas.1} parent=11 // pred_fallthru
          _
        // Predicated region
        $region29: #{forward_pallas.1} parent=11 // pred_check
          %p284 = pneg %p147
        $region30: #{forward_pallas.1} parent=11 // pred_check_branch
          %286 = sbr.rel (%p284) target = $region32
        $region31: #{forward_pallas.1} parent=11 // pred_region
          _
        $region32: #{forward_pallas.1} parent=11 // pred_fallthru
          _
        // Predicated region
        $region33: #{forward_pallas.1} parent=11 // pred_check
          %p287 = pneg %p168
        $region34: #{forward_pallas.1} parent=11 // pred_check_branch
          %289 = sbr.rel (%p287) target = $region36
        $region35: #{forward_pallas.1} parent=11 // pred_region
          _
        $region36: #{forward_pallas.1} parent=11 // pred_fallthru
          _
        // Predicated region
        $region37: #{forward_pallas.1} parent=11 // pred_check
          %p290 = pneg %p189
        $region38: #{forward_pallas.1} parent=11 // pred_check_branch
          %292 = sbr.rel (%p290) target = $region40
        $region39: #{forward_pallas.1} parent=11 // pred_region
          _
        $region40: #{forward_pallas.1} parent=11 // pred_fallthru
          _
        // Predicated region
        $region41: #{forward_pallas.1} parent=11 // pred_check
          %p293 = pneg %p210
        $region42: #{forward_pallas.1} parent=11 // pred_check_branch
          %295 = sbr.rel (%p293) target = $region44
        $region43: #{forward_pallas.1} parent=11 // pred_region
          _
        $region44: #{forward_pallas.1} parent=11 // pred_fallthru
          _
        // Predicated region
        $region45: #{forward_pallas.1} parent=11 // pred_check
          %p296 = pneg %p231
        $region46: #{forward_pallas.1} parent=11 // pred_check_branch
          %298 = sbr.rel (%p296) target = $region48
        $region47: #{forward_pallas.1} parent=11 // pred_region
          _
        $region48: #{forward_pallas.1} parent=11 // pred_fallthru
          _
      $region12: #{forward_pallas.1} parent=5 // pred_fallthru
        _
      %p299 = scmp.lt.s32.totalorder %s16, 2
      // Predicated region
      $region49: #{forward_pallas.1} parent=5 // pred_check
        %p300 = pneg %p299
      $region50: #{forward_pallas.1} parent=5 // pred_check_branch
        %302 = sbr.rel (%p300) target = $region52
      $region51: #{forward_pallas.1} parent=5 // pred_region
        // Predicated region
        $region53: #{forward_pallas.1} parent=51 // pred_check
          %p303 = pneg %p57
        $region54: #{forward_pallas.1} parent=51 // pred_check_branch
          %305 = sbr.rel (%p303) target = $region56
        $region55: #{forward_pallas.1} parent=51 // pred_region
          %s306 = sand.u32 %s47, 1
          %s307 = sand.u32 %s47, 1
          %s308 = smul.addr %s307, 200
          %s309 = scalar_lea.vmem [#allocation3], %s308
          %s310 = smul.addr %s16, 8
          %s311 = scalar_lea.vmem %s1, %s310
          // Predicated region
          $region57: #{forward_pallas.1} parent=55 // pred_check
            _
          $region58: #{forward_pallas.1} parent=55 // pred_check_branch
            %313 = sbr.rel (0) target = $region60
          $region59: #{forward_pallas.1} parent=55 // pred_region
            // Predicated region
            $region61: #{forward_pallas.1} parent=59 // pred_check
              _
            $region62: #{forward_pallas.1} parent=59 // pred_check_branch
              %315 = sbr.rel (0) target = $region64
            $region63: #{forward_pallas.1} parent=59 // pred_region
              // Predicated region
              $region76: #{forward_pallas.1} parent=63 // pred_check
                _
              $region77: #{forward_pallas.1} parent=63 // pred_check_branch
                %379 = sbr.rel (0) target = $region79
              $region78: #{forward_pallas.1} parent=63 // pred_region
                loop: start=0, step=1, limit=1
                $region80: #{forward_pallas.1} parent=78 // loop_pre_header
                  _
                $region81: #{forward_pallas.1} parent=78 // loop_header
                  %s381 = sphi 0, %s385
                  %p382 = scmp.ge.s32.totalorder %s381, 1
                  %s386 = sphi %s311, %s311
                  %s387 = sphi %s309, %s309
                $region82: #{forward_pallas.1} parent=78 // loop_header_branch
                  %384 = sbr.rel (%p382) target = $region86
                $region83: #{forward_pallas.1} parent=78 // loop_body
                  %v388 = vld [vmem:[%s386] sm:$0xff]
                  %389 = vst [vmem:[%s387] sm:$0xff] %v388
                  %v390 = vld [vmem:[%s386 + $0x10] sm:$0xff]
                  %391 = vst [vmem:[%s387 + $0x8] sm:$0xff] %v390
                  %v392 = vld [vmem:[%s386 + $0x20] sm:$0xff]
                  %393 = vst [vmem:[%s387 + $0x10] sm:$0xff] %v392
                  %v394 = vld [vmem:[%s386 + $0x30] sm:$0xff]
                  %395 = vst [vmem:[%s387 + $0x18] sm:$0xff] %v394
                  %v396 = vld [vmem:[%s386 + $0x40] sm:$0xff]
                  %397 = vst [vmem:[%s387 + $0x20] sm:$0xff] %v396
                  %v398 = vld [vmem:[%s386 + $0x50] sm:$0xff]
                  %399 = vst [vmem:[%s387 + $0x28] sm:$0xff] %v398
                  %v400 = vld [vmem:[%s386 + $0x60] sm:$0xff]
                  %401 = vst [vmem:[%s387 + $0x30] sm:$0xff] %v400
                  %v402 = vld [vmem:[%s386 + $0x70] sm:$0xff]
                  %403 = vst [vmem:[%s387 + $0x38] sm:$0xff] %v402
                  %v404 = vld [vmem:[%s386 + $0x80] sm:$0xff]
                  %405 = vst [vmem:[%s387 + $0x40] sm:$0xff] %v404
                  %v406 = vld [vmem:[%s386 + $0x90] sm:$0xff]
                  %407 = vst [vmem:[%s387 + $0x48] sm:$0xff] %v406
                  %v408 = vld [vmem:[%s386 + $0xa0] sm:$0xff]
                  %409 = vst [vmem:[%s387 + $0x50] sm:$0xff] %v408
                  %v410 = vld [vmem:[%s386 + $0xb0] sm:$0xff]
                  %411 = vst [vmem:[%s387 + $0x58] sm:$0xff] %v410
                  %v412 = vld [vmem:[%s386 + $0xc0] sm:$0xff]
                  %413 = vst [vmem:[%s387 + $0x60] sm:$0xff] %v412
                  %v414 = vld [vmem:[%s386 + $0xd0] sm:$0xff]
                  %415 = vst [vmem:[%s387 + $0x68] sm:$0xff] %v414
                  %v416 = vld [vmem:[%s386 + $0xe0] sm:$0xff]
                  %417 = vst [vmem:[%s387 + $0x70] sm:$0xff] %v416
                  %v418 = vld [vmem:[%s386 + $0xf0] sm:$0xff]
                  %419 = vst [vmem:[%s387 + $0x78] sm:$0xff] %v418
                  %v420 = vld [vmem:[%s386 + $0x100] sm:$0xff]
                  %421 = vst [vmem:[%s387 + $0x80] sm:$0xff] %v420
                  %v422 = vld [vmem:[%s386 + $0x110] sm:$0xff]
                  %423 = vst [vmem:[%s387 + $0x88] sm:$0xff] %v422
                  %v424 = vld [vmem:[%s386 + $0x120] sm:$0xff]
                  %425 = vst [vmem:[%s387 + $0x90] sm:$0xff] %v424
                  %v426 = vld [vmem:[%s386 + $0x130] sm:$0xff]
                  %427 = vst [vmem:[%s387 + $0x98] sm:$0xff] %v426
                  %v428 = vld [vmem:[%s386 + $0x140] sm:$0xff]
                  %429 = vst [vmem:[%s387 + $0xa0] sm:$0xff] %v428
                  %v430 = vld [vmem:[%s386 + $0x150] sm:$0xff]
                  %431 = vst [vmem:[%s387 + $0xa8] sm:$0xff] %v430
                  %v432 = vld [vmem:[%s386 + $0x160] sm:$0xff]
                  %433 = vst [vmem:[%s387 + $0xb0] sm:$0xff] %v432
                  %v434 = vld [vmem:[%s386 + $0x170] sm:$0xff]
                  %435 = vst [vmem:[%s387 + $0xb8] sm:$0xff] %v434
                  %v436 = vld [vmem:[%s386 + $0x180] sm:$0xff]
                  %437 = vst [vmem:[%s387 + $0xc0] sm:$0xff] %v436
                $region84: #{forward_pallas.1} parent=78 // loop_footer
                  %s385 = sadd.s32 1, %s381
                $region85: #{forward_pallas.1} parent=78 // loop_footer_branch
                  %380 = sbr.rel target = $region81
                $region86: #{forward_pallas.1} parent=78 // loop_exit
                  _
              $region79: #{forward_pallas.1} parent=63 // pred_fallthru
                _
              // Predicated region
              $region87: #{forward_pallas.1} parent=63 // pred_check
                _
              $region88: #{forward_pallas.1} parent=63 // pred_check_branch
                %439 = sbr.rel target = $region90
              $region89: #{forward_pallas.1} parent=63 // pred_region
                _
              $region90: #{forward_pallas.1} parent=63 // pred_fallthru
                _
            $region64: #{forward_pallas.1} parent=59 // pred_fallthru
              _
            // Predicated region
            $region65: #{forward_pallas.1} parent=59 // pred_check
              _
            $region66: #{forward_pallas.1} parent=59 // pred_check_branch
              %317 = sbr.rel target = $region68
            $region67: #{forward_pallas.1} parent=59 // pred_region
              %s319 = ssub.s32 256, 1
              loop: start=0, step=1, limit=1
              $region69: #{forward_pallas.1} parent=67 // loop_pre_header
                _
              $region70: #{forward_pallas.1} parent=67 // loop_header
                %s321 = sphi 0, %s325
                %p322 = scmp.ge.s32.totalorder %s321, 1
                %s326 = sphi %s311, %s311
                %s327 = sphi %s309, %s309
              $region71: #{forward_pallas.1} parent=67 // loop_header_branch
                %324 = sbr.rel (%p322) target = $region75
              $region72: #{forward_pallas.1} parent=67 // loop_body
                %v328 = vld [vmem:[%s326] sm:%s319]
                %329 = vst [vmem:[%s327] sm:%s319] %v328
                %v330 = vld [vmem:[%s326 + $0x10] sm:%s319]
                %331 = vst [vmem:[%s327 + $0x8] sm:%s319] %v330
                %v332 = vld [vmem:[%s326 + $0x20] sm:%s319]
                %333 = vst [vmem:[%s327 + $0x10] sm:%s319] %v332
                %v334 = vld [vmem:[%s326 + $0x30] sm:%s319]
                %335 = vst [vmem:[%s327 + $0x18] sm:%s319] %v334
                %v336 = vld [vmem:[%s326 + $0x40] sm:%s319]
                %337 = vst [vmem:[%s327 + $0x20] sm:%s319] %v336
                %v338 = vld [vmem:[%s326 + $0x50] sm:%s319]
                %339 = vst [vmem:[%s327 + $0x28] sm:%s319] %v338
                %v340 = vld [vmem:[%s326 + $0x60] sm:%s319]
                %341 = vst [vmem:[%s327 + $0x30] sm:%s319] %v340
                %v342 = vld [vmem:[%s326 + $0x70] sm:%s319]
                %343 = vst [vmem:[%s327 + $0x38] sm:%s319] %v342
                %v344 = vld [vmem:[%s326 + $0x80] sm:%s319]
                %345 = vst [vmem:[%s327 + $0x40] sm:%s319] %v344
                %v346 = vld [vmem:[%s326 + $0x90] sm:%s319]
                %347 = vst [vmem:[%s327 + $0x48] sm:%s319] %v346
                %v348 = vld [vmem:[%s326 + $0xa0] sm:%s319]
                %349 = vst [vmem:[%s327 + $0x50] sm:%s319] %v348
                %v350 = vld [vmem:[%s326 + $0xb0] sm:%s319]
                %351 = vst [vmem:[%s327 + $0x58] sm:%s319] %v350
                %v352 = vld [vmem:[%s326 + $0xc0] sm:%s319]
                %353 = vst [vmem:[%s327 + $0x60] sm:%s319] %v352
                %v354 = vld [vmem:[%s326 + $0xd0] sm:%s319]
                %355 = vst [vmem:[%s327 + $0x68] sm:%s319] %v354
                %v356 = vld [vmem:[%s326 + $0xe0] sm:%s319]
                %357 = vst [vmem:[%s327 + $0x70] sm:%s319] %v356
                %v358 = vld [vmem:[%s326 + $0xf0] sm:%s319]
                %359 = vst [vmem:[%s327 + $0x78] sm:%s319] %v358
                %v360 = vld [vmem:[%s326 + $0x100] sm:%s319]
                %361 = vst [vmem:[%s327 + $0x80] sm:%s319] %v360
                %v362 = vld [vmem:[%s326 + $0x110] sm:%s319]
                %363 = vst [vmem:[%s327 + $0x88] sm:%s319] %v362
                %v364 = vld [vmem:[%s326 + $0x120] sm:%s319]
                %365 = vst [vmem:[%s327 + $0x90] sm:%s319] %v364
                %v366 = vld [vmem:[%s326 + $0x130] sm:%s319]
                %367 = vst [vmem:[%s327 + $0x98] sm:%s319] %v366
                %v368 = vld [vmem:[%s326 + $0x140] sm:%s319]
                %369 = vst [vmem:[%s327 + $0xa0] sm:%s319] %v368
                %v370 = vld [vmem:[%s326 + $0x150] sm:%s319]
                %371 = vst [vmem:[%s327 + $0xa8] sm:%s319] %v370
                %v372 = vld [vmem:[%s326 + $0x160] sm:%s319]
                %373 = vst [vmem:[%s327 + $0xb0] sm:%s319] %v372
                %v374 = vld [vmem:[%s326 + $0x170] sm:%s319]
                %375 = vst [vmem:[%s327 + $0xb8] sm:%s319] %v374
                %v376 = vld [vmem:[%s326 + $0x180] sm:%s319]
                %377 = vst [vmem:[%s327 + $0xc0] sm:%s319] %v376
              $region73: #{forward_pallas.1} parent=67 // loop_footer
                %s325 = sadd.s32 1, %s321
              $region74: #{forward_pallas.1} parent=67 // loop_footer_branch
                %320 = sbr.rel target = $region70
              $region75: #{forward_pallas.1} parent=67 // loop_exit
                _
            $region68: #{forward_pallas.1} parent=59 // pred_fallthru
              _
          $region60: #{forward_pallas.1} parent=55 // pred_fallthru
            _
          %440 = vnop
        $region56: #{forward_pallas.1} parent=51 // pred_fallthru
          _
      $region52: #{forward_pallas.1} parent=5 // pred_fallthru
        _
      %p441 = scmp.le.s32.totalorder 1, %s16
      %p442 = scmp.lt.s32.totalorder %s16, 3
      %p443 = pnand %p441, %p442
      %p444 = pneg %p443
      // Predicated region
      $region91: #{forward_pallas.1} parent=5 // pred_check
        _
      $region92: #{forward_pallas.1} parent=5 // pred_check_branch
        %446 = sbr.rel (%p443) target = $region94
      $region93: #{forward_pallas.1} parent=5 // pred_region
        %s447 = ssub.s32 %s16, 1
        %s448 = sand.u32 %s50, 1
        %s449 = sand.u32 %s50, 1
        %s450 = smul.addr %s449, 200
        %s451 = scalar_lea.vmem [#allocation3], %s450
        // Predicated region
        $region95: #{forward_pallas.1} parent=93 // pred_check
          %p452 = pneg %p63
        $region96: #{forward_pallas.1} parent=93 // pred_check_branch
          %454 = sbr.rel (%p452) target = $region98
        $region97: #{forward_pallas.1} parent=93 // pred_region
          _
        $region98: #{forward_pallas.1} parent=93 // pred_fallthru
          _
        %p455 = pneg %p37
        %p456 = pneg %p34
        %s457 = sand.u32 %s50, 1
        %s458 = sand.u32 %s50, 1
        %s459 = smul.addr %s458, 200
        %s460 = scalar_lea.vmem [#allocation3], %s459
        %p461 = pneg %p63
        %p462 = pneg %p60
        %p463 = pneg %p84
        %p464 = pneg %p81
        %p465 = pneg %p105
        %p466 = pneg %p102
        %p467 = pneg %p126
        %p468 = pneg %p123
        %p469 = pneg %p147
        %p470 = pneg %p144
        %p471 = pneg %p168
        %p472 = pneg %p165
        %p473 = pneg %p189
        %p474 = pneg %p186
        %p475 = pneg %p210
        %p476 = pneg %p207
        %p477 = pneg %p231
        %p478 = pneg %p228
        %p479 = pneg %p257
        %p480 = pneg %p254
        %s481 = sand.u32 %s244, 1
        %s482 = sand.u32 %s244, 1
        %s483 = smul.addr %s482, 64
        %s484 = scalar_lea.vmem [#allocation4], %s483
        %v486 = vld [vmem:[%s0] sm:$0x1]
        %s487 = scalar_lea.vmem %s0, 1
        %v488 = vld [vmem:[%s487] sm:$0x1]
        %s489 = scalar_lea.vmem %s0, 2
        %v490 = vld [vmem:[%s489] sm:$0x1]
        %s491 = scalar_lea.vmem %s0, 3
        %v492 = vld [vmem:[%s491] sm:$0x1]
        %s493 = scalar_lea.vmem %s0, 5
        %v494 = vld [vmem:[%s493] sm:$0x1]
        %s495 = scalar_lea.vmem %s0, 6
        %v496 = vld [vmem:[%s495] sm:$0x1]
        %s497 = scalar_lea.vmem %s0, 7
        %v498 = vld [vmem:[%s497] sm:$0x1]
        %s499 = scalar_lea.vmem %s0, 8
        %v500 = vld [vmem:[%s499] sm:$0x1]
        %v501 = vld [vmem:[%s451] sm:$0xff]
        %v502 = vld [vmem:[%s451 + $0x8] sm:$0xff]
        %v503 = vld [vmem:[%s451 + $0x10] sm:$0xff]
        %v504 = vld [vmem:[%s451 + $0x18] sm:$0xff]
        %v505 = vld [vmem:[%s451 + $0x20] sm:$0xff]
        %v506 = vld [vmem:[%s451 + $0x28] sm:$0xff]
        %v507 = vld [vmem:[%s451 + $0x30] sm:$0xff]
        %v508 = vld [vmem:[%s451 + $0x38] sm:$0xff]
        %v509 = vld [vmem:[%s451 + $0x40] sm:$0xff]
        %v510 = vld [vmem:[%s451 + $0x48] sm:$0xff]
        %v511 = vld [vmem:[%s451 + $0x50] sm:$0xff]
        %v512 = vld [vmem:[%s451 + $0x58] sm:$0xff]
        %v513 = vld [vmem:[%s451 + $0x60] sm:$0xff]
        %v514 = vld [vmem:[%s451 + $0x68] sm:$0xff]
        %v515 = vld [vmem:[%s451 + $0x70] sm:$0xff]
        %v516 = vld [vmem:[%s451 + $0x78] sm:$0xff]
        %v517 = vld [vmem:[%s451 + $0x80] sm:$0xff]
        %v518 = vld [vmem:[%s451 + $0x88] sm:$0xff]
        %v519 = vld [vmem:[%s451 + $0x90] sm:$0xff]
        %v520 = vld [vmem:[%s451 + $0x98] sm:$0xff]
        %v521 = vld [vmem:[%s451 + $0xa0] sm:$0xff]
        %v522 = vld [vmem:[%s451 + $0xa8] sm:$0xff]
        %v523 = vld [vmem:[%s451 + $0xb0] sm:$0xff]
        %v524 = vld [vmem:[%s451 + $0xb8] sm:$0xff]
        %v525 = vld [vmem:[%s451 + $0xc0] sm:$0xff]
        %526 = vrot.lane.b32.xlu0 %v501, 9
        %v527 = vpop.permute.xlu0 %526
        %528 = vrot.lane.b32.xlu0 %v502, 9
        %v529 = vpop.permute.xlu0 %528
        %530 = vrot.lane.b32.xlu0 %v503, 9
        %v531 = vpop.permute.xlu0 %530
        %532 = vrot.lane.b32.xlu0 %v504, 9
        %v533 = vpop.permute.xlu0 %532
        %534 = vrot.lane.b32.xlu0 %v505, 9
        %v535 = vpop.permute.xlu0 %534
        %536 = vrot.lane.b32.xlu0 %v506, 9
        %v537 = vpop.permute.xlu0 %536
        %538 = vrot.lane.b32.xlu0 %v507, 9
        %v539 = vpop.permute.xlu0 %538
        %540 = vrot.lane.b32.xlu0 %v508, 9
        %v541 = vpop.permute.xlu0 %540
        %542 = vrot.lane.b32.xlu0 %v509, 9
        %v543 = vpop.permute.xlu0 %542
        %544 = vrot.lane.b32.xlu0 %v510, 9
        %v545 = vpop.permute.xlu0 %544
        %546 = vrot.lane.b32.xlu0 %v511, 9
        %v547 = vpop.permute.xlu0 %546
        %548 = vrot.lane.b32.xlu0 %v512, 9
        %v549 = vpop.permute.xlu0 %548
        %550 = vrot.lane.b32.xlu0 %v513, 9
        %v551 = vpop.permute.xlu0 %550
        %552 = vrot.lane.b32.xlu0 %v514, 9
        %v553 = vpop.permute.xlu0 %552
        %554 = vrot.lane.b32.xlu0 %v515, 9
        %v555 = vpop.permute.xlu0 %554
        %556 = vrot.lane.b32.xlu0 %v516, 9
        %v557 = vpop.permute.xlu0 %556
        %558 = vrot.lane.b32.xlu0 %v517, 9
        %v559 = vpop.permute.xlu0 %558
        %560 = vrot.lane.b32.xlu0 %v518, 9
        %v561 = vpop.permute.xlu0 %560
        %562 = vrot.lane.b32.xlu0 %v519, 9
        %v563 = vpop.permute.xlu0 %562
        %564 = vrot.lane.b32.xlu0 %v520, 9
        %v565 = vpop.permute.xlu0 %564
        %566 = vrot.lane.b32.xlu0 %v521, 9
        %v567 = vpop.permute.xlu0 %566
        %568 = vrot.lane.b32.xlu0 %v522, 9
        %v569 = vpop.permute.xlu0 %568
        %570 = vrot.lane.b32.xlu0 %v523, 9
        %v571 = vpop.permute.xlu0 %570
        %572 = vrot.lane.b32.xlu0 %v524, 9
        %v573 = vpop.permute.xlu0 %572
        %574 = vrot.lane.b32.xlu0 %v525, 9
        %v575 = vpop.permute.xlu0 %574
        %v577 = vlaneseq
        %v578 = vshrl.u32 %v577, 7
        %v579 = vsub.s32 0, %v578
        %v580 = vrot.slane %v486, %v579
        %v582 = vmul.f32 %v527, %v580
        %v583 = vmul.f32 %v529, %v580
        %v584 = vmul.f32 %v531, %v580
        %v585 = vmul.f32 %v533, %v580
        %v586 = vmul.f32 %v535, %v580
        %v587 = vmul.f32 %v537, %v580
        %v588 = vmul.f32 %v539, %v580
        %v589 = vmul.f32 %v541, %v580
        %v590 = vmul.f32 %v543, %v580
        %v591 = vmul.f32 %v545, %v580
        %v592 = vmul.f32 %v547, %v580
        %v593 = vmul.f32 %v549, %v580
        %v594 = vmul.f32 %v551, %v580
        %v595 = vmul.f32 %v553, %v580
        %v596 = vmul.f32 %v555, %v580
        %v597 = vmul.f32 %v557, %v580
        %v598 = vmul.f32 %v559, %v580
        %v599 = vmul.f32 %v561, %v580
        %v600 = vmul.f32 %v563, %v580
        %v601 = vmul.f32 %v565, %v580
        %v602 = vmul.f32 %v567, %v580
        %v603 = vmul.f32 %v569, %v580
        %v604 = vmul.f32 %v571, %v580
        %v605 = vmul.f32 %v573, %v580
        %v606 = vmul.f32 %v575, %v580
        %v607 = vld [vmem:[%s2] sm:$0xff]
        %v608 = vld [vmem:[%s2 + $0x8] sm:$0xff]
        %v609 = vld [vmem:[%s2 + $0x10] sm:$0xff]
        %v610 = vld [vmem:[%s2 + $0x18] sm:$0xff]
        %v611 = vld [vmem:[%s2 + $0x20] sm:$0xff]
        %v612 = vld [vmem:[%s2 + $0x28] sm:$0xff]
        %v613 = vld [vmem:[%s2 + $0x30] sm:$0xff]
        %v614 = vld [vmem:[%s2 + $0x38] sm:$0xff]
        %v615 = vpack.c.bf16 %v583, %v582
        %v616 = vpack.c.bf16 %v585, %v584
        %v617 = vpack.c.bf16 %v587, %v586
        %v618 = vpack.c.bf16 %v589, %v588
        %v619 = vpack.c.bf16 %v591, %v590
        %v620 = vpack.c.bf16 %v593, %v592
        %v621 = vpack.c.bf16 %v595, %v594
        %v622 = vpack.c.bf16 %v597, %v596
        %v623 = vpack.c.bf16 %v599, %v598
        %v624 = vpack.c.bf16 %v601, %v600
        %v625 = vpack.c.bf16 %v603, %v602
        %v626 = vpack.c.bf16 %v605, %v604
        %v627 = vpack.c.bf16 %v606, %v606
        %628 = vrot.lane.b32.xlu0 %v501, 8
        %v629 = vpop.permute.xlu0 %628
        %630 = vrot.lane.b32.xlu0 %v502, 8
        %v631 = vpop.permute.xlu0 %630
        %632 = vrot.lane.b32.xlu0 %v503, 8
        %v633 = vpop.permute.xlu0 %632
        %634 = vrot.lane.b32.xlu0 %v504, 8
        %v635 = vpop.permute.xlu0 %634
        %636 = vrot.lane.b32.xlu0 %v505, 8
        %v637 = vpop.permute.xlu0 %636
        %638 = vrot.lane.b32.xlu0 %v506, 8
        %v639 = vpop.permute.xlu0 %638
        %640 = vrot.lane.b32.xlu0 %v507, 8
        %v641 = vpop.permute.xlu0 %640
        %642 = vrot.lane.b32.xlu0 %v508, 8
        %v643 = vpop.permute.xlu0 %642
        %644 = vrot.lane.b32.xlu0 %v509, 8
        %v645 = vpop.permute.xlu0 %644
        %646 = vrot.lane.b32.xlu0 %v510, 8
        %v647 = vpop.permute.xlu0 %646
        %648 = vrot.lane.b32.xlu0 %v511, 8
        %v649 = vpop.permute.xlu0 %648
        %650 = vrot.lane.b32.xlu0 %v512, 8
        %v651 = vpop.permute.xlu0 %650
        %652 = vrot.lane.b32.xlu0 %v513, 8
        %v653 = vpop.permute.xlu0 %652
        %654 = vrot.lane.b32.xlu0 %v514, 8
        %v655 = vpop.permute.xlu0 %654
        %656 = vrot.lane.b32.xlu0 %v515, 8
        %v657 = vpop.permute.xlu0 %656
        %658 = vrot.lane.b32.xlu0 %v516, 8
        %v659 = vpop.permute.xlu0 %658
        %660 = vrot.lane.b32.xlu0 %v517, 8
        %v661 = vpop.permute.xlu0 %660
        %662 = vrot.lane.b32.xlu0 %v518, 8
        %v663 = vpop.permute.xlu0 %662
        %664 = vrot.lane.b32.xlu0 %v519, 8
        %v665 = vpop.permute.xlu0 %664
        %666 = vrot.lane.b32.xlu0 %v520, 8
        %v667 = vpop.permute.xlu0 %666
        %668 = vrot.lane.b32.xlu0 %v521, 8
        %v669 = vpop.permute.xlu0 %668
        %670 = vrot.lane.b32.xlu0 %v522, 8
        %v671 = vpop.permute.xlu0 %670
        %672 = vrot.lane.b32.xlu0 %v523, 8
        %v673 = vpop.permute.xlu0 %672
        %674 = vrot.lane.b32.xlu0 %v524, 8
        %v675 = vpop.permute.xlu0 %674
        %676 = vrot.lane.b32.xlu0 %v525, 8
        %v677 = vpop.permute.xlu0 %676
        %v679 = vlaneseq
        %v680 = vshrl.u32 %v679, 7
        %v681 = vsub.s32 0, %v680
        %v682 = vrot.slane %v488, %v681
        %v684 = vmul.f32 %v629, %v682
        %v685 = vmul.f32 %v631, %v682
        %v686 = vmul.f32 %v633, %v682
        %v687 = vmul.f32 %v635, %v682
        %v688 = vmul.f32 %v637, %v682
        %v689 = vmul.f32 %v639, %v682
        %v690 = vmul.f32 %v641, %v682
        %v691 = vmul.f32 %v643, %v682
        %v692 = vmul.f32 %v645, %v682
        %v693 = vmul.f32 %v647, %v682
        %v694 = vmul.f32 %v649, %v682
        %v695 = vmul.f32 %v651, %v682
        %v696 = vmul.f32 %v653, %v682
        %v697 = vmul.f32 %v655, %v682
        %v698 = vmul.f32 %v657, %v682
        %v699 = vmul.f32 %v659, %v682
        %v700 = vmul.f32 %v661, %v682
        %v701 = vmul.f32 %v663, %v682
        %v702 = vmul.f32 %v665, %v682
        %v703 = vmul.f32 %v667, %v682
        %v704 = vmul.f32 %v669, %v682
        %v705 = vmul.f32 %v671, %v682
        %v706 = vmul.f32 %v673, %v682
        %v707 = vmul.f32 %v675, %v682
        %v708 = vmul.f32 %v677, %v682
        %s709 = scalar_lea.vmem %s2, 64
        %v710 = vld [vmem:[%s709] sm:$0xff]
        %v711 = vld [vmem:[%s709 + $0x8] sm:$0xff]
        %v712 = vld [vmem:[%s709 + $0x10] sm:$0xff]
        %v713 = vld [vmem:[%s709 + $0x18] sm:$0xff]
        %v714 = vld [vmem:[%s709 + $0x20] sm:$0xff]
        %v715 = vld [vmem:[%s709 + $0x28] sm:$0xff]
        %v716 = vld [vmem:[%s709 + $0x30] sm:$0xff]
        %v717 = vld [vmem:[%s709 + $0x38] sm:$0xff]
        %v718 = vpack.c.bf16 %v685, %v684
        %v719 = vpack.c.bf16 %v687, %v686
        %v720 = vpack.c.bf16 %v689, %v688
        %v721 = vpack.c.bf16 %v691, %v690
        %v722 = vpack.c.bf16 %v693, %v692
        %v723 = vpack.c.bf16 %v695, %v694
        %v724 = vpack.c.bf16 %v697, %v696
        %v725 = vpack.c.bf16 %v699, %v698
        %v726 = vpack.c.bf16 %v701, %v700
        %v727 = vpack.c.bf16 %v703, %v702
        %v728 = vpack.c.bf16 %v705, %v704
        %v729 = vpack.c.bf16 %v707, %v706
        %v730 = vpack.c.bf16 %v708, %v708
        %v739 = vunpack.c.l.b16 %v710
        %v740 = vunpack.c.h.b16 %v710
        %v741 = vunpack.c.l.b16 %v711
        %v742 = vunpack.c.h.b16 %v711
        %v743 = vunpack.c.l.b16 %v712
        %v744 = vunpack.c.h.b16 %v712
        %v745 = vunpack.c.l.b16 %v713
        %v746 = vunpack.c.h.b16 %v713
        %v747 = vunpack.c.l.b16 %v714
        %v748 = vunpack.c.h.b16 %v714
        %v749 = vunpack.c.l.b16 %v715
        %v750 = vunpack.c.h.b16 %v715
        %v751 = vunpack.c.l.b16 %v716
        %v752 = vunpack.c.h.b16 %v716
        %v753 = vunpack.c.l.b16 %v717
        %v754 = vunpack.c.h.b16 %v717
        %v755 = vpack.c.b16 %v741, %v739
        %v756 = vpack.c.b16 %v742, %v740
        %v757 = vpack.c.b16 %v745, %v743
        %v758 = vpack.c.b16 %v746, %v744
        %v759 = vpack.c.b16 %v749, %v747
        %v760 = vpack.c.b16 %v750, %v748
        %v761 = vpack.c.b16 %v753, %v751
        %v762 = vpack.c.b16 %v754, %v752
        %vm767 = vcmask 588800
        %v769 = vsel %vm767, %v756, 0
        %v772 = vsel %vm767, %v758, 0
        %v775 = vsel %vm767, %v760, 0
        %v778 = vsel %vm767, %v762, 0
        %vm780 = vcmask 1043456
        %v782 = vsel %vm780, %v730, 0
        %784 = vmatprep.subr.bf16.mxu0 0
        %785 = vmatpush1.bf16.msra.mxu0 %v725
        %786 = vmatprep.subr.bf16.mxu0 0
        %787 = vmatpush1.bf16.msra.mxu0 %v724
        %788 = vmatprep.subr.bf16.mxu0 0
        %789 = vmatpush1.bf16.msra.mxu0 %v723
        %790 = vmatprep.subr.bf16.mxu0 0
        %791 = vmatpush1.bf16.msra.mxu0 %v722
        %792 = vmatprep.subr.bf16.mxu0 0
        %793 = vmatpush1.bf16.msra.mxu0 %v721
        %794 = vmatprep.subr.bf16.mxu0 0
        %795 = vmatpush1.bf16.msra.mxu0 %v720
        %796 = vmatprep.subr.bf16.mxu0 0
        %797 = vmatpush1.bf16.msra.mxu0 %v719
        %798 = vmatprep.subr.bf16.mxu0 0
        %799 = vmatpush1.bf16.msra.mxu0 %v718
        %800 = vmatprep.subr.bf16.mxu0 0
        %801 = vmatpush2.bf16.msra.mxu0 0
        %802 = vmatprep.subr.bf16.mxu0 0
        %803 = vmatpush2.bf16.msra.mxu0 0
        %804 = vmatprep.subr.bf16.mxu0 0
        %805 = vmatpush2.bf16.msra.mxu0 0
        %806 = vmatprep.subr.bf16.mxu0 0
        %807 = vmatpush2.bf16.msra.mxu0 %v782
        %808 = vmatprep.subr.bf16.mxu0 0
        %809 = vmatpush2.bf16.msra.mxu0 %v729
        %810 = vmatprep.subr.bf16.mxu0 0
        %811 = vmatpush2.bf16.msra.mxu0 %v728
        %812 = vmatprep.subr.bf16.mxu0 0
        %813 = vmatpush2.bf16.msra.mxu0 %v727
        %814 = vmatprep.subr.bf16.mxu0 0
        %815 = vmatpush2.bf16.msra.mxu0 %v726
        %816 = vmatprep.mubr.bf16.mxu0 %v769
        %817 = vmatmul.mubr.bf16.gmra.mxu0 %v755
        %v818 = vpop.f32.mrf.mxu0
        %v819 = vadd.f32 0.0, %v818
        %v820 = vpop.f32.mrf.mxu0
        %v821 = vpop.f32.mrf.mxu0
        %v822 = vadd.f32 0.0, %v821
        %v823 = vpop.f32.mrf.mxu0
        %824 = vmatprep.mubr.bf16.mxu0 %v772
        %825 = vmatmul.mubr.bf16.gmra.mxu0 %v757
        %v826 = vpop.f32.mrf.mxu0
        %v827 = vadd.f32 0.0, %v826
        %v828 = vpop.f32.mrf.mxu0
        %v829 = vpop.f32.mrf.mxu0
        %v830 = vadd.f32 0.0, %v829
        %v831 = vpop.f32.mrf.mxu0
        %832 = vmatprep.mubr.bf16.mxu0 %v775
        %833 = vmatmul.mubr.bf16.gmra.mxu0 %v759
        %v834 = vpop.f32.mrf.mxu0
        %v835 = vadd.f32 0.0, %v834
        %v836 = vpop.f32.mrf.mxu0
        %v837 = vpop.f32.mrf.mxu0
        %v838 = vadd.f32 0.0, %v837
        %v839 = vpop.f32.mrf.mxu0
        %840 = vmatprep.mubr.bf16.mxu0 %v778
        %841 = vmatmul.mubr.bf16.gmra.mxu0 %v761
        %v842 = vpop.f32.mrf.mxu0
        %v843 = vadd.f32 0.0, %v842
        %v844 = vpop.f32.mrf.mxu0
        %v845 = vpop.f32.mrf.mxu0
        %v846 = vadd.f32 0.0, %v845
        %v847 = vpop.f32.mrf.mxu0
        %848 = vdwg.mxu0
        %v857 = vunpack.c.l.b16 %v607
        %v858 = vunpack.c.h.b16 %v607
        %v859 = vunpack.c.l.b16 %v608
        %v860 = vunpack.c.h.b16 %v608
        %v861 = vunpack.c.l.b16 %v609
        %v862 = vunpack.c.h.b16 %v609
        %v863 = vunpack.c.l.b16 %v610
        %v864 = vunpack.c.h.b16 %v610
        %v865 = vunpack.c.l.b16 %v611
        %v866 = vunpack.c.h.b16 %v611
        %v867 = vunpack.c.l.b16 %v612
        %v868 = vunpack.c.h.b16 %v612
        %v869 = vunpack.c.l.b16 %v613
        %v870 = vunpack.c.h.b16 %v613
        %v871 = vunpack.c.l.b16 %v614
        %v872 = vunpack.c.h.b16 %v614
        %v873 = vpack.c.b16 %v859, %v857
        %v874 = vpack.c.b16 %v860, %v858
        %v875 = vpack.c.b16 %v863, %v861
        %v876 = vpack.c.b16 %v864, %v862
        %v877 = vpack.c.b16 %v867, %v865
        %v878 = vpack.c.b16 %v868, %v866
        %v879 = vpack.c.b16 %v871, %v869
        %v880 = vpack.c.b16 %v872, %v870
        %v886 = vsel %vm767, %v874, 0
        %v889 = vsel %vm767, %v876, 0
        %v892 = vsel %vm767, %v878, 0
        %v895 = vsel %vm767, %v880, 0
        %v898 = vsel %vm780, %v627, 0
        %900 = vmatprep.subr.bf16.mxu0 0
        %901 = vmatpush1.bf16.msra.mxu0 %v622
        %902 = vmatprep.subr.bf16.mxu0 0
        %903 = vmatpush1.bf16.msra.mxu0 %v621
        %904 = vmatprep.subr.bf16.mxu0 0
        %905 = vmatpush1.bf16.msra.mxu0 %v620
        %906 = vmatprep.subr.bf16.mxu0 0
        %907 = vmatpush1.bf16.msra.mxu0 %v619
        %908 = vmatprep.subr.bf16.mxu0 0
        %909 = vmatpush1.bf16.msra.mxu0 %v618
        %910 = vmatprep.subr.bf16.mxu0 0
        %911 = vmatpush1.bf16.msra.mxu0 %v617
        %912 = vmatprep.subr.bf16.mxu0 0
        %913 = vmatpush1.bf16.msra.mxu0 %v616
        %914 = vmatprep.subr.bf16.mxu0 0
        %915 = vmatpush1.bf16.msra.mxu0 %v615
        %916 = vmatprep.subr.bf16.mxu0 0
        %917 = vmatpush2.bf16.msra.mxu0 0
        %918 = vmatprep.subr.bf16.mxu0 0
        %919 = vmatpush2.bf16.msra.mxu0 0
        %920 = vmatprep.subr.bf16.mxu0 0
        %921 = vmatpush2.bf16.msra.mxu0 0
        %922 = vmatprep.subr.bf16.mxu0 0
        %923 = vmatpush2.bf16.msra.mxu0 %v898
        %924 = vmatprep.subr.bf16.mxu0 0
        %925 = vmatpush2.bf16.msra.mxu0 %v626
        %926 = vmatprep.subr.bf16.mxu0 0
        %927 = vmatpush2.bf16.msra.mxu0 %v625
        %928 = vmatprep.subr.bf16.mxu0 0
        %929 = vmatpush2.bf16.msra.mxu0 %v624
        %930 = vmatprep.subr.bf16.mxu0 0
        %931 = vmatpush2.bf16.msra.mxu0 %v623
        %932 = vmatprep.mubr.bf16.mxu0 %v886
        %933 = vmatmul.mubr.bf16.gmra.mxu0 %v873
        %v934 = vpop.f32.mrf.mxu0
        %v935 = vadd.f32 %v819, %v934
        %v936 = vpop.f32.mrf.mxu0
        %v937 = vpop.f32.mrf.mxu0
        %v938 = vadd.f32 %v822, %v937
        %v939 = vpop.f32.mrf.mxu0
        %940 = vmatprep.mubr.bf16.mxu0 %v889
        %941 = vmatmul.mubr.bf16.gmra.mxu0 %v875
        %v942 = vpop.f32.mrf.mxu0
        %v943 = vadd.f32 %v827, %v942
        %v944 = vpop.f32.mrf.mxu0
        %v945 = vpop.f32.mrf.mxu0
        %v946 = vadd.f32 %v830, %v945
        %v947 = vpop.f32.mrf.mxu0
        %948 = vmatprep.mubr.bf16.mxu0 %v892
        %949 = vmatmul.mubr.bf16.gmra.mxu0 %v877
        %v950 = vpop.f32.mrf.mxu0
        %v951 = vadd.f32 %v835, %v950
        %v952 = vpop.f32.mrf.mxu0
        %v953 = vpop.f32.mrf.mxu0
        %v954 = vadd.f32 %v838, %v953
        %v955 = vpop.f32.mrf.mxu0
        %956 = vmatprep.mubr.bf16.mxu0 %v895
        %957 = vmatmul.mubr.bf16.gmra.mxu0 %v879
        %v958 = vpop.f32.mrf.mxu0
        %v959 = vadd.f32 %v843, %v958
        %v960 = vpop.f32.mrf.mxu0
        %v961 = vpop.f32.mrf.mxu0
        %v962 = vadd.f32 %v846, %v961
        %v963 = vpop.f32.mrf.mxu0
        %964 = vdwg.mxu0
        %965 = vrot.lane.b32.xlu0 %v501, 7
        %v966 = vpop.permute.xlu0 %965
        %967 = vrot.lane.b32.xlu0 %v502, 7
        %v968 = vpop.permute.xlu0 %967
        %969 = vrot.lane.b32.xlu0 %v503, 7
        %v970 = vpop.permute.xlu0 %969
        %971 = vrot.lane.b32.xlu0 %v504, 7
        %v972 = vpop.permute.xlu0 %971
        %973 = vrot.lane.b32.xlu0 %v505, 7
        %v974 = vpop.permute.xlu0 %973
        %975 = vrot.lane.b32.xlu0 %v506, 7
        %v976 = vpop.permute.xlu0 %975
        %977 = vrot.lane.b32.xlu0 %v507, 7
        %v978 = vpop.permute.xlu0 %977
        %979 = vrot.lane.b32.xlu0 %v508, 7
        %v980 = vpop.permute.xlu0 %979
        %981 = vrot.lane.b32.xlu0 %v509, 7
        %v982 = vpop.permute.xlu0 %981
        %983 = vrot.lane.b32.xlu0 %v510, 7
        %v984 = vpop.permute.xlu0 %983
        %985 = vrot.lane.b32.xlu0 %v511, 7
        %v986 = vpop.permute.xlu0 %985
        %987 = vrot.lane.b32.xlu0 %v512, 7
        %v988 = vpop.permute.xlu0 %987
        %989 = vrot.lane.b32.xlu0 %v513, 7
        %v990 = vpop.permute.xlu0 %989
        %991 = vrot.lane.b32.xlu0 %v514, 7
        %v992 = vpop.permute.xlu0 %991
        %993 = vrot.lane.b32.xlu0 %v515, 7
        %v994 = vpop.permute.xlu0 %993
        %995 = vrot.lane.b32.xlu0 %v516, 7
        %v996 = vpop.permute.xlu0 %995
        %997 = vrot.lane.b32.xlu0 %v517, 7
        %v998 = vpop.permute.xlu0 %997
        %999 = vrot.lane.b32.xlu0 %v518, 7
        %v1000 = vpop.permute.xlu0 %999
        %1001 = vrot.lane.b32.xlu0 %v519, 7
        %v1002 = vpop.permute.xlu0 %1001
        %1003 = vrot.lane.b32.xlu0 %v520, 7
        %v1004 = vpop.permute.xlu0 %1003
        %1005 = vrot.lane.b32.xlu0 %v521, 7
        %v1006 = vpop.permute.xlu0 %1005
        %1007 = vrot.lane.b32.xlu0 %v522, 7
        %v1008 = vpop.permute.xlu0 %1007
        %1009 = vrot.lane.b32.xlu0 %v523, 7
        %v1010 = vpop.permute.xlu0 %1009
        %1011 = vrot.lane.b32.xlu0 %v524, 7
        %v1012 = vpop.permute.xlu0 %1011
        %1013 = vrot.lane.b32.xlu0 %v525, 7
        %v1014 = vpop.permute.xlu0 %1013
        %v1016 = vlaneseq
        %v1017 = vshrl.u32 %v1016, 7
        %v1018 = vsub.s32 0, %v1017
        %v1019 = vrot.slane %v490, %v1018
        %v1021 = vmul.f32 %v966, %v1019
        %v1022 = vmul.f32 %v968, %v1019
        %v1023 = vmul.f32 %v970, %v1019
        %v1024 = vmul.f32 %v972, %v1019
        %v1025 = vmul.f32 %v974, %v1019
        %v1026 = vmul.f32 %v976, %v1019
        %v1027 = vmul.f32 %v978, %v1019
        %v1028 = vmul.f32 %v980, %v1019
        %v1029 = vmul.f32 %v982, %v1019
        %v1030 = vmul.f32 %v984, %v1019
        %v1031 = vmul.f32 %v986, %v1019
        %v1032 = vmul.f32 %v988, %v1019
        %v1033 = vmul.f32 %v990, %v1019
        %v1034 = vmul.f32 %v992, %v1019
        %v1035 = vmul.f32 %v994, %v1019
        %v1036 = vmul.f32 %v996, %v1019
        %v1037 = vmul.f32 %v998, %v1019
        %v1038 = vmul.f32 %v1000, %v1019
        %v1039 = vmul.f32 %v1002, %v1019
        %v1040 = vmul.f32 %v1004, %v1019
        %v1041 = vmul.f32 %v1006, %v1019
        %v1042 = vmul.f32 %v1008, %v1019
        %v1043 = vmul.f32 %v1010, %v1019
        %v1044 = vmul.f32 %v1012, %v1019
        %v1045 = vmul.f32 %v1014, %v1019
        %s1046 = scalar_lea.vmem %s2, 128
        %v1047 = vld [vmem:[%s1046] sm:$0xff]
        %v1048 = vld [vmem:[%s1046 + $0x8] sm:$0xff]
        %v1049 = vld [vmem:[%s1046 + $0x10] sm:$0xff]
        %v1050 = vld [vmem:[%s1046 + $0x18] sm:$0xff]
        %v1051 = vld [vmem:[%s1046 + $0x20] sm:$0xff]
        %v1052 = vld [vmem:[%s1046 + $0x28] sm:$0xff]
        %v1053 = vld [vmem:[%s1046 + $0x30] sm:$0xff]
        %v1054 = vld [vmem:[%s1046 + $0x38] sm:$0xff]
        %v1055 = vpack.c.bf16 %v1022, %v1021
        %v1056 = vpack.c.bf16 %v1024, %v1023
        %v1057 = vpack.c.bf16 %v1026, %v1025
        %v1058 = vpack.c.bf16 %v1028, %v1027
        %v1059 = vpack.c.bf16 %v1030, %v1029
        %v1060 = vpack.c.bf16 %v1032, %v1031
        %v1061 = vpack.c.bf16 %v1034, %v1033
        %v1062 = vpack.c.bf16 %v1036, %v1035
        %v1063 = vpack.c.bf16 %v1038, %v1037
        %v1064 = vpack.c.bf16 %v1040, %v1039
        %v1065 = vpack.c.bf16 %v1042, %v1041
        %v1066 = vpack.c.bf16 %v1044, %v1043
        %v1067 = vpack.c.bf16 %v1045, %v1045
        %v1076 = vunpack.c.l.b16 %v1047
        %v1077 = vunpack.c.h.b16 %v1047
        %v1078 = vunpack.c.l.b16 %v1048
        %v1079 = vunpack.c.h.b16 %v1048
        %v1080 = vunpack.c.l.b16 %v1049
        %v1081 = vunpack.c.h.b16 %v1049
        %v1082 = vunpack.c.l.b16 %v1050
        %v1083 = vunpack.c.h.b16 %v1050
        %v1084 = vunpack.c.l.b16 %v1051
        %v1085 = vunpack.c.h.b16 %v1051
        %v1086 = vunpack.c.l.b16 %v1052
        %v1087 = vunpack.c.h.b16 %v1052
        %v1088 = vunpack.c.l.b16 %v1053
        %v1089 = vunpack.c.h.b16 %v1053
        %v1090 = vunpack.c.l.b16 %v1054
        %v1091 = vunpack.c.h.b16 %v1054
        %v1092 = vpack.c.b16 %v1078, %v1076
        %v1093 = vpack.c.b16 %v1079, %v1077
        %v1094 = vpack.c.b16 %v1082, %v1080
        %v1095 = vpack.c.b16 %v1083, %v1081
        %v1096 = vpack.c.b16 %v1086, %v1084
        %v1097 = vpack.c.b16 %v1087, %v1085
        %v1098 = vpack.c.b16 %v1090, %v1088
        %v1099 = vpack.c.b16 %v1091, %v1089
        %v1105 = vsel %vm767, %v1093, 0
        %v1108 = vsel %vm767, %v1095, 0
        %v1111 = vsel %vm767, %v1097, 0
        %v1114 = vsel %vm767, %v1099, 0
        %v1117 = vsel %vm780, %v1067, 0
        %1119 = vmatprep.subr.bf16.mxu0 0
        %1120 = vmatpush1.bf16.msra.mxu0 %v1062
        %1121 = vmatprep.subr.bf16.mxu0 0
        %1122 = vmatpush1.bf16.msra.mxu0 %v1061
        %1123 = vmatprep.subr.bf16.mxu0 0
        %1124 = vmatpush1.bf16.msra.mxu0 %v1060
        %1125 = vmatprep.subr.bf16.mxu0 0
        %1126 = vmatpush1.bf16.msra.mxu0 %v1059
        %1127 = vmatprep.subr.bf16.mxu0 0
        %1128 = vmatpush1.bf16.msra.mxu0 %v1058
        %1129 = vmatprep.subr.bf16.mxu0 0
        %1130 = vmatpush1.bf16.msra.mxu0 %v1057
        %1131 = vmatprep.subr.bf16.mxu0 0
        %1132 = vmatpush1.bf16.msra.mxu0 %v1056
        %1133 = vmatprep.subr.bf16.mxu0 0
        %1134 = vmatpush1.bf16.msra.mxu0 %v1055
        %1135 = vmatprep.subr.bf16.mxu0 0
        %1136 = vmatpush2.bf16.msra.mxu0 0
        %1137 = vmatprep.subr.bf16.mxu0 0
        %1138 = vmatpush2.bf16.msra.mxu0 0
        %1139 = vmatprep.subr.bf16.mxu0 0
        %1140 = vmatpush2.bf16.msra.mxu0 0
        %1141 = vmatprep.subr.bf16.mxu0 0
        %1142 = vmatpush2.bf16.msra.mxu0 %v1117
        %1143 = vmatprep.subr.bf16.mxu0 0
        %1144 = vmatpush2.bf16.msra.mxu0 %v1066
        %1145 = vmatprep.subr.bf16.mxu0 0
        %1146 = vmatpush2.bf16.msra.mxu0 %v1065
        %1147 = vmatprep.subr.bf16.mxu0 0
        %1148 = vmatpush2.bf16.msra.mxu0 %v1064
        %1149 = vmatprep.subr.bf16.mxu0 0
        %1150 = vmatpush2.bf16.msra.mxu0 %v1063
        %1151 = vmatprep.mubr.bf16.mxu0 %v1105
        %1152 = vmatmul.mubr.bf16.gmra.mxu0 %v1092
        %v1153 = vpop.f32.mrf.mxu0
        %v1154 = vadd.f32 0.0, %v1153
        %v1155 = vpop.f32.mrf.mxu0
        %v1156 = vpop.f32.mrf.mxu0
        %v1157 = vadd.f32 0.0, %v1156
        %v1158 = vpop.f32.mrf.mxu0
        %1159 = vmatprep.mubr.bf16.mxu0 %v1108
        %1160 = vmatmul.mubr.bf16.gmra.mxu0 %v1094
        %v1161 = vpop.f32.mrf.mxu0
        %v1162 = vadd.f32 0.0, %v1161
        %v1163 = vpop.f32.mrf.mxu0
        %v1164 = vpop.f32.mrf.mxu0
        %v1165 = vadd.f32 0.0, %v1164
        %v1166 = vpop.f32.mrf.mxu0
        %1167 = vmatprep.mubr.bf16.mxu0 %v1111
        %1168 = vmatmul.mubr.bf16.gmra.mxu0 %v1096
        %v1169 = vpop.f32.mrf.mxu0
        %v1170 = vadd.f32 0.0, %v1169
        %v1171 = vpop.f32.mrf.mxu0
        %v1172 = vpop.f32.mrf.mxu0
        %v1173 = vadd.f32 0.0, %v1172
        %v1174 = vpop.f32.mrf.mxu0
        %1175 = vmatprep.mubr.bf16.mxu0 %v1114
        %1176 = vmatmul.mubr.bf16.gmra.mxu0 %v1098
        %v1177 = vpop.f32.mrf.mxu0
        %v1178 = vadd.f32 0.0, %v1177
        %v1179 = vpop.f32.mrf.mxu0
        %v1180 = vpop.f32.mrf.mxu0
        %v1181 = vadd.f32 0.0, %v1180
        %v1182 = vpop.f32.mrf.mxu0
        %1183 = vdwg.mxu0
        %v1184 = vadd.f32 %v935, %v1154
        %v1185 = vadd.f32 %v938, %v1157
        %v1186 = vadd.f32 %v943, %v1162
        %v1187 = vadd.f32 %v946, %v1165
        %v1188 = vadd.f32 %v951, %v1170
        %v1189 = vadd.f32 %v954, %v1173
        %v1190 = vadd.f32 %v959, %v1178
        %v1191 = vadd.f32 %v962, %v1181
        %1192 = vrot.lane.b32.xlu0 %v501, 1
        %v1193 = vpop.permute.xlu0 %1192
        %1194 = vrot.lane.b32.xlu0 %v502, 1
        %v1195 = vpop.permute.xlu0 %1194
        %1196 = vrot.lane.b32.xlu0 %v503, 1
        %v1197 = vpop.permute.xlu0 %1196
        %1198 = vrot.lane.b32.xlu0 %v504, 1
        %v1199 = vpop.permute.xlu0 %1198
        %1200 = vrot.lane.b32.xlu0 %v505, 1
        %v1201 = vpop.permute.xlu0 %1200
        %1202 = vrot.lane.b32.xlu0 %v506, 1
        %v1203 = vpop.permute.xlu0 %1202
        %1204 = vrot.lane.b32.xlu0 %v507, 1
        %v1205 = vpop.permute.xlu0 %1204
        %1206 = vrot.lane.b32.xlu0 %v508, 1
        %v1207 = vpop.permute.xlu0 %1206
        %1208 = vrot.lane.b32.xlu0 %v509, 1
        %v1209 = vpop.permute.xlu0 %1208
        %1210 = vrot.lane.b32.xlu0 %v510, 1
        %v1211 = vpop.permute.xlu0 %1210
        %1212 = vrot.lane.b32.xlu0 %v511, 1
        %v1213 = vpop.permute.xlu0 %1212
        %1214 = vrot.lane.b32.xlu0 %v512, 1
        %v1215 = vpop.permute.xlu0 %1214
        %1216 = vrot.lane.b32.xlu0 %v513, 1
        %v1217 = vpop.permute.xlu0 %1216
        %1218 = vrot.lane.b32.xlu0 %v514, 1
        %v1219 = vpop.permute.xlu0 %1218
        %1220 = vrot.lane.b32.xlu0 %v515, 1
        %v1221 = vpop.permute.xlu0 %1220
        %1222 = vrot.lane.b32.xlu0 %v516, 1
        %v1223 = vpop.permute.xlu0 %1222
        %1224 = vrot.lane.b32.xlu0 %v517, 1
        %v1225 = vpop.permute.xlu0 %1224
        %1226 = vrot.lane.b32.xlu0 %v518, 1
        %v1227 = vpop.permute.xlu0 %1226
        %1228 = vrot.lane.b32.xlu0 %v519, 1
        %v1229 = vpop.permute.xlu0 %1228
        %1230 = vrot.lane.b32.xlu0 %v520, 1
        %v1231 = vpop.permute.xlu0 %1230
        %1232 = vrot.lane.b32.xlu0 %v521, 1
        %v1233 = vpop.permute.xlu0 %1232
        %1234 = vrot.lane.b32.xlu0 %v522, 1
        %v1235 = vpop.permute.xlu0 %1234
        %1236 = vrot.lane.b32.xlu0 %v523, 1
        %v1237 = vpop.permute.xlu0 %1236
        %1238 = vrot.lane.b32.xlu0 %v524, 1
        %v1239 = vpop.permute.xlu0 %1238
        %1240 = vrot.lane.b32.xlu0 %v525, 1
        %v1241 = vpop.permute.xlu0 %1240
        %v1243 = vlaneseq
        %v1244 = vshrl.u32 %v1243, 7
        %v1245 = vsub.s32 0, %v1244
        %v1246 = vrot.slane %v492, %v1245
        %v1248 = vmul.f32 %v1193, %v1246
        %v1249 = vmul.f32 %v1195, %v1246
        %v1250 = vmul.f32 %v1197, %v1246
        %v1251 = vmul.f32 %v1199, %v1246
        %v1252 = vmul.f32 %v1201, %v1246
        %v1253 = vmul.f32 %v1203, %v1246
        %v1254 = vmul.f32 %v1205, %v1246
        %v1255 = vmul.f32 %v1207, %v1246
        %v1256 = vmul.f32 %v1209, %v1246
        %v1257 = vmul.f32 %v1211, %v1246
        %v1258 = vmul.f32 %v1213, %v1246
        %v1259 = vmul.f32 %v1215, %v1246
        %v1260 = vmul.f32 %v1217, %v1246
        %v1261 = vmul.f32 %v1219, %v1246
        %v1262 = vmul.f32 %v1221, %v1246
        %v1263 = vmul.f32 %v1223, %v1246
        %v1264 = vmul.f32 %v1225, %v1246
        %v1265 = vmul.f32 %v1227, %v1246
        %v1266 = vmul.f32 %v1229, %v1246
        %v1267 = vmul.f32 %v1231, %v1246
        %v1268 = vmul.f32 %v1233, %v1246
        %v1269 = vmul.f32 %v1235, %v1246
        %v1270 = vmul.f32 %v1237, %v1246
        %v1271 = vmul.f32 %v1239, %v1246
        %v1272 = vmul.f32 %v1241, %v1246
        %s1273 = scalar_lea.vmem %s2, 192
        %v1274 = vld [vmem:[%s1273] sm:$0xff]
        %v1275 = vld [vmem:[%s1273 + $0x8] sm:$0xff]
        %v1276 = vld [vmem:[%s1273 + $0x10] sm:$0xff]
        %v1277 = vld [vmem:[%s1273 + $0x18] sm:$0xff]
        %v1278 = vld [vmem:[%s1273 + $0x20] sm:$0xff]
        %v1279 = vld [vmem:[%s1273 + $0x28] sm:$0xff]
        %v1280 = vld [vmem:[%s1273 + $0x30] sm:$0xff]
        %v1281 = vld [vmem:[%s1273 + $0x38] sm:$0xff]
        %v1282 = vpack.c.bf16 %v1249, %v1248
        %v1283 = vpack.c.bf16 %v1251, %v1250
        %v1284 = vpack.c.bf16 %v1253, %v1252
        %v1285 = vpack.c.bf16 %v1255, %v1254
        %v1286 = vpack.c.bf16 %v1257, %v1256
        %v1287 = vpack.c.bf16 %v1259, %v1258
        %v1288 = vpack.c.bf16 %v1261, %v1260
        %v1289 = vpack.c.bf16 %v1263, %v1262
        %v1290 = vpack.c.bf16 %v1265, %v1264
        %v1291 = vpack.c.bf16 %v1267, %v1266
        %v1292 = vpack.c.bf16 %v1269, %v1268
        %v1293 = vpack.c.bf16 %v1271, %v1270
        %v1294 = vpack.c.bf16 %v1272, %v1272
        %v1303 = vunpack.c.l.b16 %v1274
        %v1304 = vunpack.c.h.b16 %v1274
        %v1305 = vunpack.c.l.b16 %v1275
        %v1306 = vunpack.c.h.b16 %v1275
        %v1307 = vunpack.c.l.b16 %v1276
        %v1308 = vunpack.c.h.b16 %v1276
        %v1309 = vunpack.c.l.b16 %v1277
        %v1310 = vunpack.c.h.b16 %v1277
        %v1311 = vunpack.c.l.b16 %v1278
        %v1312 = vunpack.c.h.b16 %v1278
        %v1313 = vunpack.c.l.b16 %v1279
        %v1314 = vunpack.c.h.b16 %v1279
        %v1315 = vunpack.c.l.b16 %v1280
        %v1316 = vunpack.c.h.b16 %v1280
        %v1317 = vunpack.c.l.b16 %v1281
        %v1318 = vunpack.c.h.b16 %v1281
        %v1319 = vpack.c.b16 %v1305, %v1303
        %v1320 = vpack.c.b16 %v1306, %v1304
        %v1321 = vpack.c.b16 %v1309, %v1307
        %v1322 = vpack.c.b16 %v1310, %v1308
        %v1323 = vpack.c.b16 %v1313, %v1311
        %v1324 = vpack.c.b16 %v1314, %v1312
        %v1325 = vpack.c.b16 %v1317, %v1315
        %v1326 = vpack.c.b16 %v1318, %v1316
        %v1332 = vsel %vm767, %v1320, 0
        %v1335 = vsel %vm767, %v1322, 0
        %v1338 = vsel %vm767, %v1324, 0
        %v1341 = vsel %vm767, %v1326, 0
        %v1344 = vsel %vm780, %v1294, 0
        %1346 = vmatprep.subr.bf16.mxu0 0
        %1347 = vmatpush1.bf16.msra.mxu0 %v1289
        %1348 = vmatprep.subr.bf16.mxu0 0
        %1349 = vmatpush1.bf16.msra.mxu0 %v1288
        %1350 = vmatprep.subr.bf16.mxu0 0
        %1351 = vmatpush1.bf16.msra.mxu0 %v1287
        %1352 = vmatprep.subr.bf16.mxu0 0
        %1353 = vmatpush1.bf16.msra.mxu0 %v1286
        %1354 = vmatprep.subr.bf16.mxu0 0
        %1355 = vmatpush1.bf16.msra.mxu0 %v1285
        %1356 = vmatprep.subr.bf16.mxu0 0
        %1357 = vmatpush1.bf16.msra.mxu0 %v1284
        %1358 = vmatprep.subr.bf16.mxu0 0
        %1359 = vmatpush1.bf16.msra.mxu0 %v1283
        %1360 = vmatprep.subr.bf16.mxu0 0
        %1361 = vmatpush1.bf16.msra.mxu0 %v1282
        %1362 = vmatprep.subr.bf16.mxu0 0
        %1363 = vmatpush2.bf16.msra.mxu0 0
        %1364 = vmatprep.subr.bf16.mxu0 0
        %1365 = vmatpush2.bf16.msra.mxu0 0
        %1366 = vmatprep.subr.bf16.mxu0 0
        %1367 = vmatpush2.bf16.msra.mxu0 0
        %1368 = vmatprep.subr.bf16.mxu0 0
        %1369 = vmatpush2.bf16.msra.mxu0 %v1344
        %1370 = vmatprep.subr.bf16.mxu0 0
        %1371 = vmatpush2.bf16.msra.mxu0 %v1293
        %1372 = vmatprep.subr.bf16.mxu0 0
        %1373 = vmatpush2.bf16.msra.mxu0 %v1292
        %1374 = vmatprep.subr.bf16.mxu0 0
        %1375 = vmatpush2.bf16.msra.mxu0 %v1291
        %1376 = vmatprep.subr.bf16.mxu0 0
        %1377 = vmatpush2.bf16.msra.mxu0 %v1290
        %1378 = vmatprep.mubr.bf16.mxu0 %v1332
        %1379 = vmatmul.mubr.bf16.gmra.mxu0 %v1319
        %v1380 = vpop.f32.mrf.mxu0
        %v1381 = vadd.f32 0.0, %v1380
        %v1382 = vpop.f32.mrf.mxu0
        %v1383 = vpop.f32.mrf.mxu0
        %v1384 = vadd.f32 0.0, %v1383
        %v1385 = vpop.f32.mrf.mxu0
        %1386 = vmatprep.mubr.bf16.mxu0 %v1335
        %1387 = vmatmul.mubr.bf16.gmra.mxu0 %v1321
        %v1388 = vpop.f32.mrf.mxu0
        %v1389 = vadd.f32 0.0, %v1388
        %v1390 = vpop.f32.mrf.mxu0
        %v1391 = vpop.f32.mrf.mxu0
        %v1392 = vadd.f32 0.0, %v1391
        %v1393 = vpop.f32.mrf.mxu0
        %1394 = vmatprep.mubr.bf16.mxu0 %v1338
        %1395 = vmatmul.mubr.bf16.gmra.mxu0 %v1323
        %v1396 = vpop.f32.mrf.mxu0
        %v1397 = vadd.f32 0.0, %v1396
        %v1398 = vpop.f32.mrf.mxu0
        %v1399 = vpop.f32.mrf.mxu0
        %v1400 = vadd.f32 0.0, %v1399
        %v1401 = vpop.f32.mrf.mxu0
        %1402 = vmatprep.mubr.bf16.mxu0 %v1341
        %1403 = vmatmul.mubr.bf16.gmra.mxu0 %v1325
        %v1404 = vpop.f32.mrf.mxu0
        %v1405 = vadd.f32 0.0, %v1404
        %v1406 = vpop.f32.mrf.mxu0
        %v1407 = vpop.f32.mrf.mxu0
        %v1408 = vadd.f32 0.0, %v1407
        %v1409 = vpop.f32.mrf.mxu0
        %1410 = vdwg.mxu0
        %v1411 = vadd.f32 %v1184, %v1381
        %v1412 = vadd.f32 %v1185, %v1384
        %v1413 = vadd.f32 %v1186, %v1389
        %v1414 = vadd.f32 %v1187, %v1392
        %v1415 = vadd.f32 %v1188, %v1397
        %v1416 = vadd.f32 %v1189, %v1400
        %v1417 = vadd.f32 %v1190, %v1405
        %v1418 = vadd.f32 %v1191, %v1408
        %s1419 = scalar_lea.vmem %s2, 256
        %v1420 = vld [vmem:[%s1419] sm:$0xff]
        %v1421 = vld [vmem:[%s1419 + $0x8] sm:$0xff]
        %v1422 = vld [vmem:[%s1419 + $0x10] sm:$0xff]
        %v1423 = vld [vmem:[%s1419 + $0x18] sm:$0xff]
        %v1424 = vld [vmem:[%s1419 + $0x20] sm:$0xff]
        %v1425 = vld [vmem:[%s1419 + $0x28] sm:$0xff]
        %v1426 = vld [vmem:[%s1419 + $0x30] sm:$0xff]
        %v1427 = vld [vmem:[%s1419 + $0x38] sm:$0xff]
        %v1428 = vpack.c.bf16 %v502, %v501
        %v1429 = vpack.c.bf16 %v504, %v503
        %v1430 = vpack.c.bf16 %v506, %v505
        %v1431 = vpack.c.bf16 %v508, %v507
        %v1432 = vpack.c.bf16 %v510, %v509
        %v1433 = vpack.c.bf16 %v512, %v511
        %v1434 = vpack.c.bf16 %v514, %v513
        %v1435 = vpack.c.bf16 %v516, %v515
        %v1436 = vpack.c.bf16 %v518, %v517
        %v1437 = vpack.c.bf16 %v520, %v519
        %v1438 = vpack.c.bf16 %v522, %v521
        %v1439 = vpack.c.bf16 %v524, %v523
        %v1440 = vpack.c.bf16 %v525, %v525
        %v1449 = vunpack.c.l.b16 %v1420
        %v1450 = vunpack.c.h.b16 %v1420
        %v1451 = vunpack.c.l.b16 %v1421
        %v1452 = vunpack.c.h.b16 %v1421
        %v1453 = vunpack.c.l.b16 %v1422
        %v1454 = vunpack.c.h.b16 %v1422
        %v1455 = vunpack.c.l.b16 %v1423
        %v1456 = vunpack.c.h.b16 %v1423
        %v1457 = vunpack.c.l.b16 %v1424
        %v1458 = vunpack.c.h.b16 %v1424
        %v1459 = vunpack.c.l.b16 %v1425
        %v1460 = vunpack.c.h.b16 %v1425
        %v1461 = vunpack.c.l.b16 %v1426
        %v1462 = vunpack.c.h.b16 %v1426
        %v1463 = vunpack.c.l.b16 %v1427
        %v1464 = vunpack.c.h.b16 %v1427
        %v1465 = vpack.c.b16 %v1451, %v1449
        %v1466 = vpack.c.b16 %v1452, %v1450
        %v1467 = vpack.c.b16 %v1455, %v1453
        %v1468 = vpack.c.b16 %v1456, %v1454
        %v1469 = vpack.c.b16 %v1459, %v1457
        %v1470 = vpack.c.b16 %v1460, %v1458
        %v1471 = vpack.c.b16 %v1463, %v1461
        %v1472 = vpack.c.b16 %v1464, %v1462
        %v1478 = vsel %vm767, %v1466, 0
        %v1481 = vsel %vm767, %v1468, 0
        %v1484 = vsel %vm767, %v1470, 0
        %v1487 = vsel %vm767, %v1472, 0
        %v1490 = vsel %vm780, %v1440, 0
        %1492 = vmatprep.subr.bf16.mxu0 0
        %1493 = vmatpush1.bf16.msra.mxu0 %v1435
        %1494 = vmatprep.subr.bf16.mxu0 0
        %1495 = vmatpush1.bf16.msra.mxu0 %v1434
        %1496 = vmatprep.subr.bf16.mxu0 0
        %1497 = vmatpush1.bf16.msra.mxu0 %v1433
        %1498 = vmatprep.subr.bf16.mxu0 0
        %1499 = vmatpush1.bf16.msra.mxu0 %v1432
        %1500 = vmatprep.subr.bf16.mxu0 0
        %1501 = vmatpush1.bf16.msra.mxu0 %v1431
        %1502 = vmatprep.subr.bf16.mxu0 0
        %1503 = vmatpush1.bf16.msra.mxu0 %v1430
        %1504 = vmatprep.subr.bf16.mxu0 0
        %1505 = vmatpush1.bf16.msra.mxu0 %v1429
        %1506 = vmatprep.subr.bf16.mxu0 0
        %1507 = vmatpush1.bf16.msra.mxu0 %v1428
        %1508 = vmatprep.subr.bf16.mxu0 0
        %1509 = vmatpush2.bf16.msra.mxu0 0
        %1510 = vmatprep.subr.bf16.mxu0 0
        %1511 = vmatpush2.bf16.msra.mxu0 0
        %1512 = vmatprep.subr.bf16.mxu0 0
        %1513 = vmatpush2.bf16.msra.mxu0 0
        %1514 = vmatprep.subr.bf16.mxu0 0
        %1515 = vmatpush2.bf16.msra.mxu0 %v1490
        %1516 = vmatprep.subr.bf16.mxu0 0
        %1517 = vmatpush2.bf16.msra.mxu0 %v1439
        %1518 = vmatprep.subr.bf16.mxu0 0
        %1519 = vmatpush2.bf16.msra.mxu0 %v1438
        %1520 = vmatprep.subr.bf16.mxu0 0
        %1521 = vmatpush2.bf16.msra.mxu0 %v1437
        %1522 = vmatprep.subr.bf16.mxu0 0
        %1523 = vmatpush2.bf16.msra.mxu0 %v1436
        %1524 = vmatprep.mubr.bf16.mxu0 %v1478
        %1525 = vmatmul.mubr.bf16.gmra.mxu0 %v1465
        %v1526 = vpop.f32.mrf.mxu0
        %v1527 = vadd.f32 0.0, %v1526
        %v1528 = vpop.f32.mrf.mxu0
        %v1529 = vpop.f32.mrf.mxu0
        %v1530 = vadd.f32 0.0, %v1529
        %v1531 = vpop.f32.mrf.mxu0
        %1532 = vmatprep.mubr.bf16.mxu0 %v1481
        %1533 = vmatmul.mubr.bf16.gmra.mxu0 %v1467
        %v1534 = vpop.f32.mrf.mxu0
        %v1535 = vadd.f32 0.0, %v1534
        %v1536 = vpop.f32.mrf.mxu0
        %v1537 = vpop.f32.mrf.mxu0
        %v1538 = vadd.f32 0.0, %v1537
        %v1539 = vpop.f32.mrf.mxu0
        %1540 = vmatprep.mubr.bf16.mxu0 %v1484
        %1541 = vmatmul.mubr.bf16.gmra.mxu0 %v1469
        %v1542 = vpop.f32.mrf.mxu0
        %v1543 = vadd.f32 0.0, %v1542
        %v1544 = vpop.f32.mrf.mxu0
        %v1545 = vpop.f32.mrf.mxu0
        %v1546 = vadd.f32 0.0, %v1545
        %v1547 = vpop.f32.mrf.mxu0
        %1548 = vmatprep.mubr.bf16.mxu0 %v1487
        %1549 = vmatmul.mubr.bf16.gmra.mxu0 %v1471
        %v1550 = vpop.f32.mrf.mxu0
        %v1551 = vadd.f32 0.0, %v1550
        %v1552 = vpop.f32.mrf.mxu0
        %v1553 = vpop.f32.mrf.mxu0
        %v1554 = vadd.f32 0.0, %v1553
        %v1555 = vpop.f32.mrf.mxu0
        %1556 = vdwg.mxu0
        %v1557 = vadd.f32 %v1411, %v1527
        %v1558 = vadd.f32 %v1412, %v1530
        %v1559 = vadd.f32 %v1413, %v1535
        %v1560 = vadd.f32 %v1414, %v1538
        %v1561 = vadd.f32 %v1415, %v1543
        %v1562 = vadd.f32 %v1416, %v1546
        %v1563 = vadd.f32 %v1417, %v1551
        %v1564 = vadd.f32 %v1418, %v1554
        %1565 = vrot.lane.b32.xlu0 %v501, 127
        %v1566 = vpop.permute.xlu0 %1565
        %1567 = vrot.lane.b32.xlu0 %v502, 127
        %v1568 = vpop.permute.xlu0 %1567
        %1569 = vrot.lane.b32.xlu0 %v503, 127
        %v1570 = vpop.permute.xlu0 %1569
        %1571 = vrot.lane.b32.xlu0 %v504, 127
        %v1572 = vpop.permute.xlu0 %1571
        %1573 = vrot.lane.b32.xlu0 %v505, 127
        %v1574 = vpop.permute.xlu0 %1573
        %1575 = vrot.lane.b32.xlu0 %v506, 127
        %v1576 = vpop.permute.xlu0 %1575
        %1577 = vrot.lane.b32.xlu0 %v507, 127
        %v1578 = vpop.permute.xlu0 %1577
        %1579 = vrot.lane.b32.xlu0 %v508, 127
        %v1580 = vpop.permute.xlu0 %1579
        %1581 = vrot.lane.b32.xlu0 %v509, 127
        %v1582 = vpop.permute.xlu0 %1581
        %1583 = vrot.lane.b32.xlu0 %v510, 127
        %v1584 = vpop.permute.xlu0 %1583
        %1585 = vrot.lane.b32.xlu0 %v511, 127
        %v1586 = vpop.permute.xlu0 %1585
        %1587 = vrot.lane.b32.xlu0 %v512, 127
        %v1588 = vpop.permute.xlu0 %1587
        %1589 = vrot.lane.b32.xlu0 %v513, 127
        %v1590 = vpop.permute.xlu0 %1589
        %1591 = vrot.lane.b32.xlu0 %v514, 127
        %v1592 = vpop.permute.xlu0 %1591
        %1593 = vrot.lane.b32.xlu0 %v515, 127
        %v1594 = vpop.permute.xlu0 %1593
        %1595 = vrot.lane.b32.xlu0 %v516, 127
        %v1596 = vpop.permute.xlu0 %1595
        %1597 = vrot.lane.b32.xlu0 %v517, 127
        %v1598 = vpop.permute.xlu0 %1597
        %1599 = vrot.lane.b32.xlu0 %v518, 127
        %v1600 = vpop.permute.xlu0 %1599
        %1601 = vrot.lane.b32.xlu0 %v519, 127
        %v1602 = vpop.permute.xlu0 %1601
        %1603 = vrot.lane.b32.xlu0 %v520, 127
        %v1604 = vpop.permute.xlu0 %1603
        %1605 = vrot.lane.b32.xlu0 %v521, 127
        %v1606 = vpop.permute.xlu0 %1605
        %1607 = vrot.lane.b32.xlu0 %v522, 127
        %v1608 = vpop.permute.xlu0 %1607
        %1609 = vrot.lane.b32.xlu0 %v523, 127
        %v1610 = vpop.permute.xlu0 %1609
        %1611 = vrot.lane.b32.xlu0 %v524, 127
        %v1612 = vpop.permute.xlu0 %1611
        %1613 = vrot.lane.b32.xlu0 %v525, 127
        %v1614 = vpop.permute.xlu0 %1613
        %v1616 = vlaneseq
        %v1617 = vshrl.u32 %v1616, 7
        %v1618 = vsub.s32 0, %v1617
        %v1619 = vrot.slane %v494, %v1618
        %v1621 = vmul.f32 %v1566, %v1619
        %v1622 = vmul.f32 %v1568, %v1619
        %v1623 = vmul.f32 %v1570, %v1619
        %v1624 = vmul.f32 %v1572, %v1619
        %v1625 = vmul.f32 %v1574, %v1619
        %v1626 = vmul.f32 %v1576, %v1619
        %v1627 = vmul.f32 %v1578, %v1619
        %v1628 = vmul.f32 %v1580, %v1619
        %v1629 = vmul.f32 %v1582, %v1619
        %v1630 = vmul.f32 %v1584, %v1619
        %v1631 = vmul.f32 %v1586, %v1619
        %v1632 = vmul.f32 %v1588, %v1619
        %v1633 = vmul.f32 %v1590, %v1619
        %v1634 = vmul.f32 %v1592, %v1619
        %v1635 = vmul.f32 %v1594, %v1619
        %v1636 = vmul.f32 %v1596, %v1619
        %v1637 = vmul.f32 %v1598, %v1619
        %v1638 = vmul.f32 %v1600, %v1619
        %v1639 = vmul.f32 %v1602, %v1619
        %v1640 = vmul.f32 %v1604, %v1619
        %v1641 = vmul.f32 %v1606, %v1619
        %v1642 = vmul.f32 %v1608, %v1619
        %v1643 = vmul.f32 %v1610, %v1619
        %v1644 = vmul.f32 %v1612, %v1619
        %v1645 = vmul.f32 %v1614, %v1619
        %s1646 = scalar_lea.vmem %s2, 320
        %v1647 = vld [vmem:[%s1646] sm:$0xff]
        %v1648 = vld [vmem:[%s1646 + $0x8] sm:$0xff]
        %v1649 = vld [vmem:[%s1646 + $0x10] sm:$0xff]
        %v1650 = vld [vmem:[%s1646 + $0x18] sm:$0xff]
        %v1651 = vld [vmem:[%s1646 + $0x20] sm:$0xff]
        %v1652 = vld [vmem:[%s1646 + $0x28] sm:$0xff]
        %v1653 = vld [vmem:[%s1646 + $0x30] sm:$0xff]
        %v1654 = vld [vmem:[%s1646 + $0x38] sm:$0xff]
        %v1655 = vpack.c.bf16 %v1622, %v1621
        %v1656 = vpack.c.bf16 %v1624, %v1623
        %v1657 = vpack.c.bf16 %v1626, %v1625
        %v1658 = vpack.c.bf16 %v1628, %v1627
        %v1659 = vpack.c.bf16 %v1630, %v1629
        %v1660 = vpack.c.bf16 %v1632, %v1631
        %v1661 = vpack.c.bf16 %v1634, %v1633
        %v1662 = vpack.c.bf16 %v1636, %v1635
        %v1663 = vpack.c.bf16 %v1638, %v1637
        %v1664 = vpack.c.bf16 %v1640, %v1639
        %v1665 = vpack.c.bf16 %v1642, %v1641
        %v1666 = vpack.c.bf16 %v1644, %v1643
        %v1667 = vpack.c.bf16 %v1645, %v1645
        %v1676 = vunpack.c.l.b16 %v1647
        %v1677 = vunpack.c.h.b16 %v1647
        %v1678 = vunpack.c.l.b16 %v1648
        %v1679 = vunpack.c.h.b16 %v1648
        %v1680 = vunpack.c.l.b16 %v1649
        %v1681 = vunpack.c.h.b16 %v1649
        %v1682 = vunpack.c.l.b16 %v1650
        %v1683 = vunpack.c.h.b16 %v1650
        %v1684 = vunpack.c.l.b16 %v1651
        %v1685 = vunpack.c.h.b16 %v1651
        %v1686 = vunpack.c.l.b16 %v1652
        %v1687 = vunpack.c.h.b16 %v1652
        %v1688 = vunpack.c.l.b16 %v1653
        %v1689 = vunpack.c.h.b16 %v1653
        %v1690 = vunpack.c.l.b16 %v1654
        %v1691 = vunpack.c.h.b16 %v1654
        %v1692 = vpack.c.b16 %v1678, %v1676
        %v1693 = vpack.c.b16 %v1679, %v1677
        %v1694 = vpack.c.b16 %v1682, %v1680
        %v1695 = vpack.c.b16 %v1683, %v1681
        %v1696 = vpack.c.b16 %v1686, %v1684
        %v1697 = vpack.c.b16 %v1687, %v1685
        %v1698 = vpack.c.b16 %v1690, %v1688
        %v1699 = vpack.c.b16 %v1691, %v1689
        %v1705 = vsel %vm767, %v1693, 0
        %v1708 = vsel %vm767, %v1695, 0
        %v1711 = vsel %vm767, %v1697, 0
        %v1714 = vsel %vm767, %v1699, 0
        %v1717 = vsel %vm780, %v1667, 0
        %1719 = vmatprep.subr.bf16.mxu0 0
        %1720 = vmatpush1.bf16.msra.mxu0 %v1662
        %1721 = vmatprep.subr.bf16.mxu0 0
        %1722 = vmatpush1.bf16.msra.mxu0 %v1661
        %1723 = vmatprep.subr.bf16.mxu0 0
        %1724 = vmatpush1.bf16.msra.mxu0 %v1660
        %1725 = vmatprep.subr.bf16.mxu0 0
        %1726 = vmatpush1.bf16.msra.mxu0 %v1659
        %1727 = vmatprep.subr.bf16.mxu0 0
        %1728 = vmatpush1.bf16.msra.mxu0 %v1658
        %1729 = vmatprep.subr.bf16.mxu0 0
        %1730 = vmatpush1.bf16.msra.mxu0 %v1657
        %1731 = vmatprep.subr.bf16.mxu0 0
        %1732 = vmatpush1.bf16.msra.mxu0 %v1656
        %1733 = vmatprep.subr.bf16.mxu0 0
        %1734 = vmatpush1.bf16.msra.mxu0 %v1655
        %1735 = vmatprep.subr.bf16.mxu0 0
        %1736 = vmatpush2.bf16.msra.mxu0 0
        %1737 = vmatprep.subr.bf16.mxu0 0
        %1738 = vmatpush2.bf16.msra.mxu0 0
        %1739 = vmatprep.subr.bf16.mxu0 0
        %1740 = vmatpush2.bf16.msra.mxu0 0
        %1741 = vmatprep.subr.bf16.mxu0 0
        %1742 = vmatpush2.bf16.msra.mxu0 %v1717
        %1743 = vmatprep.subr.bf16.mxu0 0
        %1744 = vmatpush2.bf16.msra.mxu0 %v1666
        %1745 = vmatprep.subr.bf16.mxu0 0
        %1746 = vmatpush2.bf16.msra.mxu0 %v1665
        %1747 = vmatprep.subr.bf16.mxu0 0
        %1748 = vmatpush2.bf16.msra.mxu0 %v1664
        %1749 = vmatprep.subr.bf16.mxu0 0
        %1750 = vmatpush2.bf16.msra.mxu0 %v1663
        %1751 = vmatprep.mubr.bf16.mxu0 %v1705
        %1752 = vmatmul.mubr.bf16.gmra.mxu0 %v1692
        %v1753 = vpop.f32.mrf.mxu0
        %v1754 = vadd.f32 0.0, %v1753
        %v1755 = vpop.f32.mrf.mxu0
        %v1756 = vpop.f32.mrf.mxu0
        %v1757 = vadd.f32 0.0, %v1756
        %v1758 = vpop.f32.mrf.mxu0
        %1759 = vmatprep.mubr.bf16.mxu0 %v1708
        %1760 = vmatmul.mubr.bf16.gmra.mxu0 %v1694
        %v1761 = vpop.f32.mrf.mxu0
        %v1762 = vadd.f32 0.0, %v1761
        %v1763 = vpop.f32.mrf.mxu0
        %v1764 = vpop.f32.mrf.mxu0
        %v1765 = vadd.f32 0.0, %v1764
        %v1766 = vpop.f32.mrf.mxu0
        %1767 = vmatprep.mubr.bf16.mxu0 %v1711
        %1768 = vmatmul.mubr.bf16.gmra.mxu0 %v1696
        %v1769 = vpop.f32.mrf.mxu0
        %v1770 = vadd.f32 0.0, %v1769
        %v1771 = vpop.f32.mrf.mxu0
        %v1772 = vpop.f32.mrf.mxu0
        %v1773 = vadd.f32 0.0, %v1772
        %v1774 = vpop.f32.mrf.mxu0
        %1775 = vmatprep.mubr.bf16.mxu0 %v1714
        %1776 = vmatmul.mubr.bf16.gmra.mxu0 %v1698
        %v1777 = vpop.f32.mrf.mxu0
        %v1778 = vadd.f32 0.0, %v1777
        %v1779 = vpop.f32.mrf.mxu0
        %v1780 = vpop.f32.mrf.mxu0
        %v1781 = vadd.f32 0.0, %v1780
        %v1782 = vpop.f32.mrf.mxu0
        %1783 = vdwg.mxu0
        %v1784 = vadd.f32 %v1557, %v1754
        %v1785 = vadd.f32 %v1558, %v1757
        %v1786 = vadd.f32 %v1559, %v1762
        %v1787 = vadd.f32 %v1560, %v1765
        %v1788 = vadd.f32 %v1561, %v1770
        %v1789 = vadd.f32 %v1562, %v1773
        %v1790 = vadd.f32 %v1563, %v1778
        %v1791 = vadd.f32 %v1564, %v1781
        %1792 = vrot.lane.b32.xlu0 %v501, 121
        %v1793 = vpop.permute.xlu0 %1792
        %1794 = vrot.lane.b32.xlu0 %v502, 121
        %v1795 = vpop.permute.xlu0 %1794
        %1796 = vrot.lane.b32.xlu0 %v503, 121
        %v1797 = vpop.permute.xlu0 %1796
        %1798 = vrot.lane.b32.xlu0 %v504, 121
        %v1799 = vpop.permute.xlu0 %1798
        %1800 = vrot.lane.b32.xlu0 %v505, 121
        %v1801 = vpop.permute.xlu0 %1800
        %1802 = vrot.lane.b32.xlu0 %v506, 121
        %v1803 = vpop.permute.xlu0 %1802
        %1804 = vrot.lane.b32.xlu0 %v507, 121
        %v1805 = vpop.permute.xlu0 %1804
        %1806 = vrot.lane.b32.xlu0 %v508, 121
        %v1807 = vpop.permute.xlu0 %1806
        %1808 = vrot.lane.b32.xlu0 %v509, 121
        %v1809 = vpop.permute.xlu0 %1808
        %1810 = vrot.lane.b32.xlu0 %v510, 121
        %v1811 = vpop.permute.xlu0 %1810
        %1812 = vrot.lane.b32.xlu0 %v511, 121
        %v1813 = vpop.permute.xlu0 %1812
        %1814 = vrot.lane.b32.xlu0 %v512, 121
        %v1815 = vpop.permute.xlu0 %1814
        %1816 = vrot.lane.b32.xlu0 %v513, 121
        %v1817 = vpop.permute.xlu0 %1816
        %1818 = vrot.lane.b32.xlu0 %v514, 121
        %v1819 = vpop.permute.xlu0 %1818
        %1820 = vrot.lane.b32.xlu0 %v515, 121
        %v1821 = vpop.permute.xlu0 %1820
        %1822 = vrot.lane.b32.xlu0 %v516, 121
        %v1823 = vpop.permute.xlu0 %1822
        %1824 = vrot.lane.b32.xlu0 %v517, 121
        %v1825 = vpop.permute.xlu0 %1824
        %1826 = vrot.lane.b32.xlu0 %v518, 121
        %v1827 = vpop.permute.xlu0 %1826
        %1828 = vrot.lane.b32.xlu0 %v519, 121
        %v1829 = vpop.permute.xlu0 %1828
        %1830 = vrot.lane.b32.xlu0 %v520, 121
        %v1831 = vpop.permute.xlu0 %1830
        %1832 = vrot.lane.b32.xlu0 %v521, 121
        %v1833 = vpop.permute.xlu0 %1832
        %1834 = vrot.lane.b32.xlu0 %v522, 121
        %v1835 = vpop.permute.xlu0 %1834
        %1836 = vrot.lane.b32.xlu0 %v523, 121
        %v1837 = vpop.permute.xlu0 %1836
        %1838 = vrot.lane.b32.xlu0 %v524, 121
        %v1839 = vpop.permute.xlu0 %1838
        %1840 = vrot.lane.b32.xlu0 %v525, 121
        %v1841 = vpop.permute.xlu0 %1840
        %v1843 = vlaneseq
        %v1844 = vshrl.u32 %v1843, 7
        %v1845 = vsub.s32 0, %v1844
        %v1846 = vrot.slane %v496, %v1845
        %v1848 = vmul.f32 %v1793, %v1846
        %v1849 = vmul.f32 %v1795, %v1846
        %v1850 = vmul.f32 %v1797, %v1846
        %v1851 = vmul.f32 %v1799, %v1846
        %v1852 = vmul.f32 %v1801, %v1846
        %v1853 = vmul.f32 %v1803, %v1846
        %v1854 = vmul.f32 %v1805, %v1846
        %v1855 = vmul.f32 %v1807, %v1846
        %v1856 = vmul.f32 %v1809, %v1846
        %v1857 = vmul.f32 %v1811, %v1846
        %v1858 = vmul.f32 %v1813, %v1846
        %v1859 = vmul.f32 %v1815, %v1846
        %v1860 = vmul.f32 %v1817, %v1846
        %v1861 = vmul.f32 %v1819, %v1846
        %v1862 = vmul.f32 %v1821, %v1846
        %v1863 = vmul.f32 %v1823, %v1846
        %v1864 = vmul.f32 %v1825, %v1846
        %v1865 = vmul.f32 %v1827, %v1846
        %v1866 = vmul.f32 %v1829, %v1846
        %v1867 = vmul.f32 %v1831, %v1846
        %v1868 = vmul.f32 %v1833, %v1846
        %v1869 = vmul.f32 %v1835, %v1846
        %v1870 = vmul.f32 %v1837, %v1846
        %v1871 = vmul.f32 %v1839, %v1846
        %v1872 = vmul.f32 %v1841, %v1846
        %s1873 = scalar_lea.vmem %s2, 384
        %v1874 = vld [vmem:[%s1873] sm:$0xff]
        %v1875 = vld [vmem:[%s1873 + $0x8] sm:$0xff]
        %v1876 = vld [vmem:[%s1873 + $0x10] sm:$0xff]
        %v1877 = vld [vmem:[%s1873 + $0x18] sm:$0xff]
        %v1878 = vld [vmem:[%s1873 + $0x20] sm:$0xff]
        %v1879 = vld [vmem:[%s1873 + $0x28] sm:$0xff]
        %v1880 = vld [vmem:[%s1873 + $0x30] sm:$0xff]
        %v1881 = vld [vmem:[%s1873 + $0x38] sm:$0xff]
        %v1882 = vpack.c.bf16 %v1849, %v1848
        %v1883 = vpack.c.bf16 %v1851, %v1850
        %v1884 = vpack.c.bf16 %v1853, %v1852
        %v1885 = vpack.c.bf16 %v1855, %v1854
        %v1886 = vpack.c.bf16 %v1857, %v1856
        %v1887 = vpack.c.bf16 %v1859, %v1858
        %v1888 = vpack.c.bf16 %v1861, %v1860
        %v1889 = vpack.c.bf16 %v1863, %v1862
        %v1890 = vpack.c.bf16 %v1865, %v1864
        %v1891 = vpack.c.bf16 %v1867, %v1866
        %v1892 = vpack.c.bf16 %v1869, %v1868
        %v1893 = vpack.c.bf16 %v1871, %v1870
        %v1894 = vpack.c.bf16 %v1872, %v1872
        %v1903 = vunpack.c.l.b16 %v1874
        %v1904 = vunpack.c.h.b16 %v1874
        %v1905 = vunpack.c.l.b16 %v1875
        %v1906 = vunpack.c.h.b16 %v1875
        %v1907 = vunpack.c.l.b16 %v1876
        %v1908 = vunpack.c.h.b16 %v1876
        %v1909 = vunpack.c.l.b16 %v1877
        %v1910 = vunpack.c.h.b16 %v1877
        %v1911 = vunpack.c.l.b16 %v1878
        %v1912 = vunpack.c.h.b16 %v1878
        %v1913 = vunpack.c.l.b16 %v1879
        %v1914 = vunpack.c.h.b16 %v1879
        %v1915 = vunpack.c.l.b16 %v1880
        %v1916 = vunpack.c.h.b16 %v1880
        %v1917 = vunpack.c.l.b16 %v1881
        %v1918 = vunpack.c.h.b16 %v1881
        %v1919 = vpack.c.b16 %v1905, %v1903
        %v1920 = vpack.c.b16 %v1906, %v1904
        %v1921 = vpack.c.b16 %v1909, %v1907
        %v1922 = vpack.c.b16 %v1910, %v1908
        %v1923 = vpack.c.b16 %v1913, %v1911
        %v1924 = vpack.c.b16 %v1914, %v1912
        %v1925 = vpack.c.b16 %v1917, %v1915
        %v1926 = vpack.c.b16 %v1918, %v1916
        %v1932 = vsel %vm767, %v1920, 0
        %v1935 = vsel %vm767, %v1922, 0
        %v1938 = vsel %vm767, %v1924, 0
        %v1941 = vsel %vm767, %v1926, 0
        %v1944 = vsel %vm780, %v1894, 0
        %1946 = vmatprep.subr.bf16.mxu0 0
        %1947 = vmatpush1.bf16.msra.mxu0 %v1889
        %1948 = vmatprep.subr.bf16.mxu0 0
        %1949 = vmatpush1.bf16.msra.mxu0 %v1888
        %1950 = vmatprep.subr.bf16.mxu0 0
        %1951 = vmatpush1.bf16.msra.mxu0 %v1887
        %1952 = vmatprep.subr.bf16.mxu0 0
        %1953 = vmatpush1.bf16.msra.mxu0 %v1886
        %1954 = vmatprep.subr.bf16.mxu0 0
        %1955 = vmatpush1.bf16.msra.mxu0 %v1885
        %1956 = vmatprep.subr.bf16.mxu0 0
        %1957 = vmatpush1.bf16.msra.mxu0 %v1884
        %1958 = vmatprep.subr.bf16.mxu0 0
        %1959 = vmatpush1.bf16.msra.mxu0 %v1883
        %1960 = vmatprep.subr.bf16.mxu0 0
        %1961 = vmatpush1.bf16.msra.mxu0 %v1882
        %1962 = vmatprep.subr.bf16.mxu0 0
        %1963 = vmatpush2.bf16.msra.mxu0 0
        %1964 = vmatprep.subr.bf16.mxu0 0
        %1965 = vmatpush2.bf16.msra.mxu0 0
        %1966 = vmatprep.subr.bf16.mxu0 0
        %1967 = vmatpush2.bf16.msra.mxu0 0
        %1968 = vmatprep.subr.bf16.mxu0 0
        %1969 = vmatpush2.bf16.msra.mxu0 %v1944
        %1970 = vmatprep.subr.bf16.mxu0 0
        %1971 = vmatpush2.bf16.msra.mxu0 %v1893
        %1972 = vmatprep.subr.bf16.mxu0 0
        %1973 = vmatpush2.bf16.msra.mxu0 %v1892
        %1974 = vmatprep.subr.bf16.mxu0 0
        %1975 = vmatpush2.bf16.msra.mxu0 %v1891
        %1976 = vmatprep.subr.bf16.mxu0 0
        %1977 = vmatpush2.bf16.msra.mxu0 %v1890
        %1978 = vmatprep.mubr.bf16.mxu0 %v1932
        %1979 = vmatmul.mubr.bf16.gmra.mxu0 %v1919
        %v1980 = vpop.f32.mrf.mxu0
        %v1981 = vadd.f32 0.0, %v1980
        %v1982 = vpop.f32.mrf.mxu0
        %v1983 = vpop.f32.mrf.mxu0
        %v1984 = vadd.f32 0.0, %v1983
        %v1985 = vpop.f32.mrf.mxu0
        %1986 = vmatprep.mubr.bf16.mxu0 %v1935
        %1987 = vmatmul.mubr.bf16.gmra.mxu0 %v1921
        %v1988 = vpop.f32.mrf.mxu0
        %v1989 = vadd.f32 0.0, %v1988
        %v1990 = vpop.f32.mrf.mxu0
        %v1991 = vpop.f32.mrf.mxu0
        %v1992 = vadd.f32 0.0, %v1991
        %v1993 = vpop.f32.mrf.mxu0
        %1994 = vmatprep.mubr.bf16.mxu0 %v1938
        %1995 = vmatmul.mubr.bf16.gmra.mxu0 %v1923
        %v1996 = vpop.f32.mrf.mxu0
        %v1997 = vadd.f32 0.0, %v1996
        %v1998 = vpop.f32.mrf.mxu0
        %v1999 = vpop.f32.mrf.mxu0
        %v2000 = vadd.f32 0.0, %v1999
        %v2001 = vpop.f32.mrf.mxu0
        %2002 = vmatprep.mubr.bf16.mxu0 %v1941
        %2003 = vmatmul.mubr.bf16.gmra.mxu0 %v1925
        %v2004 = vpop.f32.mrf.mxu0
        %v2005 = vadd.f32 0.0, %v2004
        %v2006 = vpop.f32.mrf.mxu0
        %v2007 = vpop.f32.mrf.mxu0
        %v2008 = vadd.f32 0.0, %v2007
        %v2009 = vpop.f32.mrf.mxu0
        %2010 = vdwg.mxu0
        %v2011 = vadd.f32 %v1784, %v1981
        %v2012 = vadd.f32 %v1785, %v1984
        %v2013 = vadd.f32 %v1786, %v1989
        %v2014 = vadd.f32 %v1787, %v1992
        %v2015 = vadd.f32 %v1788, %v1997
        %v2016 = vadd.f32 %v1789, %v2000
        %v2017 = vadd.f32 %v1790, %v2005
        %v2018 = vadd.f32 %v1791, %v2008
        %2019 = vrot.lane.b32.xlu0 %v501, 120
        %v2020 = vpop.permute.xlu0 %2019
        %2021 = vrot.lane.b32.xlu0 %v502, 120
        %v2022 = vpop.permute.xlu0 %2021
        %2023 = vrot.lane.b32.xlu0 %v503, 120
        %v2024 = vpop.permute.xlu0 %2023
        %2025 = vrot.lane.b32.xlu0 %v504, 120
        %v2026 = vpop.permute.xlu0 %2025
        %2027 = vrot.lane.b32.xlu0 %v505, 120
        %v2028 = vpop.permute.xlu0 %2027
        %2029 = vrot.lane.b32.xlu0 %v506, 120
        %v2030 = vpop.permute.xlu0 %2029
        %2031 = vrot.lane.b32.xlu0 %v507, 120
        %v2032 = vpop.permute.xlu0 %2031
        %2033 = vrot.lane.b32.xlu0 %v508, 120
        %v2034 = vpop.permute.xlu0 %2033
        %2035 = vrot.lane.b32.xlu0 %v509, 120
        %v2036 = vpop.permute.xlu0 %2035
        %2037 = vrot.lane.b32.xlu0 %v510, 120
        %v2038 = vpop.permute.xlu0 %2037
        %2039 = vrot.lane.b32.xlu0 %v511, 120
        %v2040 = vpop.permute.xlu0 %2039
        %2041 = vrot.lane.b32.xlu0 %v512, 120
        %v2042 = vpop.permute.xlu0 %2041
        %2043 = vrot.lane.b32.xlu0 %v513, 120
        %v2044 = vpop.permute.xlu0 %2043
        %2045 = vrot.lane.b32.xlu0 %v514, 120
        %v2046 = vpop.permute.xlu0 %2045
        %2047 = vrot.lane.b32.xlu0 %v515, 120
        %v2048 = vpop.permute.xlu0 %2047
        %2049 = vrot.lane.b32.xlu0 %v516, 120
        %v2050 = vpop.permute.xlu0 %2049
        %2051 = vrot.lane.b32.xlu0 %v517, 120
        %v2052 = vpop.permute.xlu0 %2051
        %2053 = vrot.lane.b32.xlu0 %v518, 120
        %v2054 = vpop.permute.xlu0 %2053
        %2055 = vrot.lane.b32.xlu0 %v519, 120
        %v2056 = vpop.permute.xlu0 %2055
        %2057 = vrot.lane.b32.xlu0 %v520, 120
        %v2058 = vpop.permute.xlu0 %2057
        %2059 = vrot.lane.b32.xlu0 %v521, 120
        %v2060 = vpop.permute.xlu0 %2059
        %2061 = vrot.lane.b32.xlu0 %v522, 120
        %v2062 = vpop.permute.xlu0 %2061
        %2063 = vrot.lane.b32.xlu0 %v523, 120
        %v2064 = vpop.permute.xlu0 %2063
        %2065 = vrot.lane.b32.xlu0 %v524, 120
        %v2066 = vpop.permute.xlu0 %2065
        %2067 = vrot.lane.b32.xlu0 %v525, 120
        %v2068 = vpop.permute.xlu0 %2067
        %v2070 = vlaneseq
        %v2071 = vshrl.u32 %v2070, 7
        %v2072 = vsub.s32 0, %v2071
        %v2073 = vrot.slane %v498, %v2072
        %v2075 = vmul.f32 %v2020, %v2073
        %v2076 = vmul.f32 %v2022, %v2073
        %v2077 = vmul.f32 %v2024, %v2073
        %v2078 = vmul.f32 %v2026, %v2073
        %v2079 = vmul.f32 %v2028, %v2073
        %v2080 = vmul.f32 %v2030, %v2073
        %v2081 = vmul.f32 %v2032, %v2073
        %v2082 = vmul.f32 %v2034, %v2073
        %v2083 = vmul.f32 %v2036, %v2073
        %v2084 = vmul.f32 %v2038, %v2073
        %v2085 = vmul.f32 %v2040, %v2073
        %v2086 = vmul.f32 %v2042, %v2073
        %v2087 = vmul.f32 %v2044, %v2073
        %v2088 = vmul.f32 %v2046, %v2073
        %v2089 = vmul.f32 %v2048, %v2073
        %v2090 = vmul.f32 %v2050, %v2073
        %v2091 = vmul.f32 %v2052, %v2073
        %v2092 = vmul.f32 %v2054, %v2073
        %v2093 = vmul.f32 %v2056, %v2073
        %v2094 = vmul.f32 %v2058, %v2073
        %v2095 = vmul.f32 %v2060, %v2073
        %v2096 = vmul.f32 %v2062, %v2073
        %v2097 = vmul.f32 %v2064, %v2073
        %v2098 = vmul.f32 %v2066, %v2073
        %v2099 = vmul.f32 %v2068, %v2073
        %s2100 = scalar_lea.vmem %s2, 448
        %v2101 = vld [vmem:[%s2100] sm:$0xff]
        %v2102 = vld [vmem:[%s2100 + $0x8] sm:$0xff]
        %v2103 = vld [vmem:[%s2100 + $0x10] sm:$0xff]
        %v2104 = vld [vmem:[%s2100 + $0x18] sm:$0xff]
        %v2105 = vld [vmem:[%s2100 + $0x20] sm:$0xff]
        %v2106 = vld [vmem:[%s2100 + $0x28] sm:$0xff]
        %v2107 = vld [vmem:[%s2100 + $0x30] sm:$0xff]
        %v2108 = vld [vmem:[%s2100 + $0x38] sm:$0xff]
        %v2109 = vpack.c.bf16 %v2076, %v2075
        %v2110 = vpack.c.bf16 %v2078, %v2077
        %v2111 = vpack.c.bf16 %v2080, %v2079
        %v2112 = vpack.c.bf16 %v2082, %v2081
        %v2113 = vpack.c.bf16 %v2084, %v2083
        %v2114 = vpack.c.bf16 %v2086, %v2085
        %v2115 = vpack.c.bf16 %v2088, %v2087
        %v2116 = vpack.c.bf16 %v2090, %v2089
        %v2117 = vpack.c.bf16 %v2092, %v2091
        %v2118 = vpack.c.bf16 %v2094, %v2093
        %v2119 = vpack.c.bf16 %v2096, %v2095
        %v2120 = vpack.c.bf16 %v2098, %v2097
        %v2121 = vpack.c.bf16 %v2099, %v2099
        %v2130 = vunpack.c.l.b16 %v2101
        %v2131 = vunpack.c.h.b16 %v2101
        %v2132 = vunpack.c.l.b16 %v2102
        %v2133 = vunpack.c.h.b16 %v2102
        %v2134 = vunpack.c.l.b16 %v2103
        %v2135 = vunpack.c.h.b16 %v2103
        %v2136 = vunpack.c.l.b16 %v2104
        %v2137 = vunpack.c.h.b16 %v2104
        %v2138 = vunpack.c.l.b16 %v2105
        %v2139 = vunpack.c.h.b16 %v2105
        %v2140 = vunpack.c.l.b16 %v2106
        %v2141 = vunpack.c.h.b16 %v2106
        %v2142 = vunpack.c.l.b16 %v2107
        %v2143 = vunpack.c.h.b16 %v2107
        %v2144 = vunpack.c.l.b16 %v2108
        %v2145 = vunpack.c.h.b16 %v2108
        %v2146 = vpack.c.b16 %v2132, %v2130
        %v2147 = vpack.c.b16 %v2133, %v2131
        %v2148 = vpack.c.b16 %v2136, %v2134
        %v2149 = vpack.c.b16 %v2137, %v2135
        %v2150 = vpack.c.b16 %v2140, %v2138
        %v2151 = vpack.c.b16 %v2141, %v2139
        %v2152 = vpack.c.b16 %v2144, %v2142
        %v2153 = vpack.c.b16 %v2145, %v2143
        %v2159 = vsel %vm767, %v2147, 0
        %v2162 = vsel %vm767, %v2149, 0
        %v2165 = vsel %vm767, %v2151, 0
        %v2168 = vsel %vm767, %v2153, 0
        %v2171 = vsel %vm780, %v2121, 0
        %2173 = vmatprep.subr.bf16.mxu0 0
        %2174 = vmatpush1.bf16.msra.mxu0 %v2116
        %2175 = vmatprep.subr.bf16.mxu0 0
        %2176 = vmatpush1.bf16.msra.mxu0 %v2115
        %2177 = vmatprep.subr.bf16.mxu0 0
        %2178 = vmatpush1.bf16.msra.mxu0 %v2114
        %2179 = vmatprep.subr.bf16.mxu0 0
        %2180 = vmatpush1.bf16.msra.mxu0 %v2113
        %2181 = vmatprep.subr.bf16.mxu0 0
        %2182 = vmatpush1.bf16.msra.mxu0 %v2112
        %2183 = vmatprep.subr.bf16.mxu0 0
        %2184 = vmatpush1.bf16.msra.mxu0 %v2111
        %2185 = vmatprep.subr.bf16.mxu0 0
        %2186 = vmatpush1.bf16.msra.mxu0 %v2110
        %2187 = vmatprep.subr.bf16.mxu0 0
        %2188 = vmatpush1.bf16.msra.mxu0 %v2109
        %2189 = vmatprep.subr.bf16.mxu0 0
        %2190 = vmatpush2.bf16.msra.mxu0 0
        %2191 = vmatprep.subr.bf16.mxu0 0
        %2192 = vmatpush2.bf16.msra.mxu0 0
        %2193 = vmatprep.subr.bf16.mxu0 0
        %2194 = vmatpush2.bf16.msra.mxu0 0
        %2195 = vmatprep.subr.bf16.mxu0 0
        %2196 = vmatpush2.bf16.msra.mxu0 %v2171
        %2197 = vmatprep.subr.bf16.mxu0 0
        %2198 = vmatpush2.bf16.msra.mxu0 %v2120
        %2199 = vmatprep.subr.bf16.mxu0 0
        %2200 = vmatpush2.bf16.msra.mxu0 %v2119
        %2201 = vmatprep.subr.bf16.mxu0 0
        %2202 = vmatpush2.bf16.msra.mxu0 %v2118
        %2203 = vmatprep.subr.bf16.mxu0 0
        %2204 = vmatpush2.bf16.msra.mxu0 %v2117
        %2205 = vmatprep.mubr.bf16.mxu0 %v2159
        %2206 = vmatmul.mubr.bf16.gmra.mxu0 %v2146
        %v2207 = vpop.f32.mrf.mxu0
        %v2208 = vadd.f32 0.0, %v2207
        %v2209 = vpop.f32.mrf.mxu0
        %v2210 = vpop.f32.mrf.mxu0
        %v2211 = vadd.f32 0.0, %v2210
        %v2212 = vpop.f32.mrf.mxu0
        %2213 = vmatprep.mubr.bf16.mxu0 %v2162
        %2214 = vmatmul.mubr.bf16.gmra.mxu0 %v2148
        %v2215 = vpop.f32.mrf.mxu0
        %v2216 = vadd.f32 0.0, %v2215
        %v2217 = vpop.f32.mrf.mxu0
        %v2218 = vpop.f32.mrf.mxu0
        %v2219 = vadd.f32 0.0, %v2218
        %v2220 = vpop.f32.mrf.mxu0
        %2221 = vmatprep.mubr.bf16.mxu0 %v2165
        %2222 = vmatmul.mubr.bf16.gmra.mxu0 %v2150
        %v2223 = vpop.f32.mrf.mxu0
        %v2224 = vadd.f32 0.0, %v2223
        %v2225 = vpop.f32.mrf.mxu0
        %v2226 = vpop.f32.mrf.mxu0
        %v2227 = vadd.f32 0.0, %v2226
        %v2228 = vpop.f32.mrf.mxu0
        %2229 = vmatprep.mubr.bf16.mxu0 %v2168
        %2230 = vmatmul.mubr.bf16.gmra.mxu0 %v2152
        %v2231 = vpop.f32.mrf.mxu0
        %v2232 = vadd.f32 0.0, %v2231
        %v2233 = vpop.f32.mrf.mxu0
        %v2234 = vpop.f32.mrf.mxu0
        %v2235 = vadd.f32 0.0, %v2234
        %v2236 = vpop.f32.mrf.mxu0
        %2237 = vdwg.mxu0
        %v2238 = vadd.f32 %v2011, %v2208
        %v2239 = vadd.f32 %v2012, %v2211
        %v2240 = vadd.f32 %v2013, %v2216
        %v2241 = vadd.f32 %v2014, %v2219
        %v2242 = vadd.f32 %v2015, %v2224
        %v2243 = vadd.f32 %v2016, %v2227
        %v2244 = vadd.f32 %v2017, %v2232
        %v2245 = vadd.f32 %v2018, %v2235
        %2246 = vrot.lane.b32.xlu0 %v501, 119
        %v2247 = vpop.permute.xlu0 %2246
        %2248 = vrot.lane.b32.xlu0 %v502, 119
        %v2249 = vpop.permute.xlu0 %2248
        %2250 = vrot.lane.b32.xlu0 %v503, 119
        %v2251 = vpop.permute.xlu0 %2250
        %2252 = vrot.lane.b32.xlu0 %v504, 119
        %v2253 = vpop.permute.xlu0 %2252
        %2254 = vrot.lane.b32.xlu0 %v505, 119
        %v2255 = vpop.permute.xlu0 %2254
        %2256 = vrot.lane.b32.xlu0 %v506, 119
        %v2257 = vpop.permute.xlu0 %2256
        %2258 = vrot.lane.b32.xlu0 %v507, 119
        %v2259 = vpop.permute.xlu0 %2258
        %2260 = vrot.lane.b32.xlu0 %v508, 119
        %v2261 = vpop.permute.xlu0 %2260
        %2262 = vrot.lane.b32.xlu0 %v509, 119
        %v2263 = vpop.permute.xlu0 %2262
        %2264 = vrot.lane.b32.xlu0 %v510, 119
        %v2265 = vpop.permute.xlu0 %2264
        %2266 = vrot.lane.b32.xlu0 %v511, 119
        %v2267 = vpop.permute.xlu0 %2266
        %2268 = vrot.lane.b32.xlu0 %v512, 119
        %v2269 = vpop.permute.xlu0 %2268
        %2270 = vrot.lane.b32.xlu0 %v513, 119
        %v2271 = vpop.permute.xlu0 %2270
        %2272 = vrot.lane.b32.xlu0 %v514, 119
        %v2273 = vpop.permute.xlu0 %2272
        %2274 = vrot.lane.b32.xlu0 %v515, 119
        %v2275 = vpop.permute.xlu0 %2274
        %2276 = vrot.lane.b32.xlu0 %v516, 119
        %v2277 = vpop.permute.xlu0 %2276
        %2278 = vrot.lane.b32.xlu0 %v517, 119
        %v2279 = vpop.permute.xlu0 %2278
        %2280 = vrot.lane.b32.xlu0 %v518, 119
        %v2281 = vpop.permute.xlu0 %2280
        %2282 = vrot.lane.b32.xlu0 %v519, 119
        %v2283 = vpop.permute.xlu0 %2282
        %2284 = vrot.lane.b32.xlu0 %v520, 119
        %v2285 = vpop.permute.xlu0 %2284
        %2286 = vrot.lane.b32.xlu0 %v521, 119
        %v2287 = vpop.permute.xlu0 %2286
        %2288 = vrot.lane.b32.xlu0 %v522, 119
        %v2289 = vpop.permute.xlu0 %2288
        %2290 = vrot.lane.b32.xlu0 %v523, 119
        %v2291 = vpop.permute.xlu0 %2290
        %2292 = vrot.lane.b32.xlu0 %v524, 119
        %v2293 = vpop.permute.xlu0 %2292
        %2294 = vrot.lane.b32.xlu0 %v525, 119
        %v2295 = vpop.permute.xlu0 %2294
        %v2297 = vlaneseq
        %v2298 = vshrl.u32 %v2297, 7
        %v2299 = vsub.s32 0, %v2298
        %v2300 = vrot.slane %v500, %v2299
        %v2302 = vmul.f32 %v2247, %v2300
        %v2303 = vmul.f32 %v2249, %v2300
        %v2304 = vmul.f32 %v2251, %v2300
        %v2305 = vmul.f32 %v2253, %v2300
        %v2306 = vmul.f32 %v2255, %v2300
        %v2307 = vmul.f32 %v2257, %v2300
        %v2308 = vmul.f32 %v2259, %v2300
        %v2309 = vmul.f32 %v2261, %v2300
        %v2310 = vmul.f32 %v2263, %v2300
        %v2311 = vmul.f32 %v2265, %v2300
        %v2312 = vmul.f32 %v2267, %v2300
        %v2313 = vmul.f32 %v2269, %v2300
        %v2314 = vmul.f32 %v2271, %v2300
        %v2315 = vmul.f32 %v2273, %v2300
        %v2316 = vmul.f32 %v2275, %v2300
        %v2317 = vmul.f32 %v2277, %v2300
        %v2318 = vmul.f32 %v2279, %v2300
        %v2319 = vmul.f32 %v2281, %v2300
        %v2320 = vmul.f32 %v2283, %v2300
        %v2321 = vmul.f32 %v2285, %v2300
        %v2322 = vmul.f32 %v2287, %v2300
        %v2323 = vmul.f32 %v2289, %v2300
        %v2324 = vmul.f32 %v2291, %v2300
        %v2325 = vmul.f32 %v2293, %v2300
        %v2326 = vmul.f32 %v2295, %v2300
        %s2327 = scalar_lea.vmem %s2, 512
        %v2328 = vld [vmem:[%s2327] sm:$0xff]
        %v2329 = vld [vmem:[%s2327 + $0x8] sm:$0xff]
        %v2330 = vld [vmem:[%s2327 + $0x10] sm:$0xff]
        %v2331 = vld [vmem:[%s2327 + $0x18] sm:$0xff]
        %v2332 = vld [vmem:[%s2327 + $0x20] sm:$0xff]
        %v2333 = vld [vmem:[%s2327 + $0x28] sm:$0xff]
        %v2334 = vld [vmem:[%s2327 + $0x30] sm:$0xff]
        %v2335 = vld [vmem:[%s2327 + $0x38] sm:$0xff]
        %v2336 = vpack.c.bf16 %v2303, %v2302
        %v2337 = vpack.c.bf16 %v2305, %v2304
        %v2338 = vpack.c.bf16 %v2307, %v2306
        %v2339 = vpack.c.bf16 %v2309, %v2308
        %v2340 = vpack.c.bf16 %v2311, %v2310
        %v2341 = vpack.c.bf16 %v2313, %v2312
        %v2342 = vpack.c.bf16 %v2315, %v2314
        %v2343 = vpack.c.bf16 %v2317, %v2316
        %v2344 = vpack.c.bf16 %v2319, %v2318
        %v2345 = vpack.c.bf16 %v2321, %v2320
        %v2346 = vpack.c.bf16 %v2323, %v2322
        %v2347 = vpack.c.bf16 %v2325, %v2324
        %v2348 = vpack.c.bf16 %v2326, %v2326
        %v2357 = vunpack.c.l.b16 %v2328
        %v2358 = vunpack.c.h.b16 %v2328
        %v2359 = vunpack.c.l.b16 %v2329
        %v2360 = vunpack.c.h.b16 %v2329
        %v2361 = vunpack.c.l.b16 %v2330
        %v2362 = vunpack.c.h.b16 %v2330
        %v2363 = vunpack.c.l.b16 %v2331
        %v2364 = vunpack.c.h.b16 %v2331
        %v2365 = vunpack.c.l.b16 %v2332
        %v2366 = vunpack.c.h.b16 %v2332
        %v2367 = vunpack.c.l.b16 %v2333
        %v2368 = vunpack.c.h.b16 %v2333
        %v2369 = vunpack.c.l.b16 %v2334
        %v2370 = vunpack.c.h.b16 %v2334
        %v2371 = vunpack.c.l.b16 %v2335
        %v2372 = vunpack.c.h.b16 %v2335
        %v2373 = vpack.c.b16 %v2359, %v2357
        %v2374 = vpack.c.b16 %v2360, %v2358
        %v2375 = vpack.c.b16 %v2363, %v2361
        %v2376 = vpack.c.b16 %v2364, %v2362
        %v2377 = vpack.c.b16 %v2367, %v2365
        %v2378 = vpack.c.b16 %v2368, %v2366
        %v2379 = vpack.c.b16 %v2371, %v2369
        %v2380 = vpack.c.b16 %v2372, %v2370
        %v2386 = vsel %vm767, %v2374, 0
        %v2389 = vsel %vm767, %v2376, 0
        %v2392 = vsel %vm767, %v2378, 0
        %v2395 = vsel %vm767, %v2380, 0
        %v2398 = vsel %vm780, %v2348, 0
        %2400 = vmatprep.subr.bf16.mxu0 0
        %2401 = vmatpush1.bf16.msra.mxu0 %v2343
        %2402 = vmatprep.subr.bf16.mxu0 0
        %2403 = vmatpush1.bf16.msra.mxu0 %v2342
        %2404 = vmatprep.subr.bf16.mxu0 0
        %2405 = vmatpush1.bf16.msra.mxu0 %v2341
        %2406 = vmatprep.subr.bf16.mxu0 0
        %2407 = vmatpush1.bf16.msra.mxu0 %v2340
        %2408 = vmatprep.subr.bf16.mxu0 0
        %2409 = vmatpush1.bf16.msra.mxu0 %v2339
        %2410 = vmatprep.subr.bf16.mxu0 0
        %2411 = vmatpush1.bf16.msra.mxu0 %v2338
        %2412 = vmatprep.subr.bf16.mxu0 0
        %2413 = vmatpush1.bf16.msra.mxu0 %v2337
        %2414 = vmatprep.subr.bf16.mxu0 0
        %2415 = vmatpush1.bf16.msra.mxu0 %v2336
        %2416 = vmatprep.subr.bf16.mxu0 0
        %2417 = vmatpush2.bf16.msra.mxu0 0
        %2418 = vmatprep.subr.bf16.mxu0 0
        %2419 = vmatpush2.bf16.msra.mxu0 0
        %2420 = vmatprep.subr.bf16.mxu0 0
        %2421 = vmatpush2.bf16.msra.mxu0 0
        %2422 = vmatprep.subr.bf16.mxu0 0
        %2423 = vmatpush2.bf16.msra.mxu0 %v2398
        %2424 = vmatprep.subr.bf16.mxu0 0
        %2425 = vmatpush2.bf16.msra.mxu0 %v2347
        %2426 = vmatprep.subr.bf16.mxu0 0
        %2427 = vmatpush2.bf16.msra.mxu0 %v2346
        %2428 = vmatprep.subr.bf16.mxu0 0
        %2429 = vmatpush2.bf16.msra.mxu0 %v2345
        %2430 = vmatprep.subr.bf16.mxu0 0
        %2431 = vmatpush2.bf16.msra.mxu0 %v2344
        %2432 = vmatprep.mubr.bf16.mxu0 %v2386
        %2433 = vmatmul.mubr.bf16.gmra.mxu0 %v2373
        %v2434 = vpop.f32.mrf.mxu0
        %v2435 = vadd.f32 0.0, %v2434
        %v2436 = vpop.f32.mrf.mxu0
        %v2437 = vpop.f32.mrf.mxu0
        %v2438 = vadd.f32 0.0, %v2437
        %v2439 = vpop.f32.mrf.mxu0
        %2440 = vmatprep.mubr.bf16.mxu0 %v2389
        %2441 = vmatmul.mubr.bf16.gmra.mxu0 %v2375
        %v2442 = vpop.f32.mrf.mxu0
        %v2443 = vadd.f32 0.0, %v2442
        %v2444 = vpop.f32.mrf.mxu0
        %v2445 = vpop.f32.mrf.mxu0
        %v2446 = vadd.f32 0.0, %v2445
        %v2447 = vpop.f32.mrf.mxu0
        %2448 = vmatprep.mubr.bf16.mxu0 %v2392
        %2449 = vmatmul.mubr.bf16.gmra.mxu0 %v2377
        %v2450 = vpop.f32.mrf.mxu0
        %v2451 = vadd.f32 0.0, %v2450
        %v2452 = vpop.f32.mrf.mxu0
        %v2453 = vpop.f32.mrf.mxu0
        %v2454 = vadd.f32 0.0, %v2453
        %v2455 = vpop.f32.mrf.mxu0
        %2456 = vmatprep.mubr.bf16.mxu0 %v2395
        %2457 = vmatmul.mubr.bf16.gmra.mxu0 %v2379
        %v2458 = vpop.f32.mrf.mxu0
        %v2459 = vadd.f32 0.0, %v2458
        %v2460 = vpop.f32.mrf.mxu0
        %v2461 = vpop.f32.mrf.mxu0
        %v2462 = vadd.f32 0.0, %v2461
        %v2463 = vpop.f32.mrf.mxu0
        %2464 = vdwg.mxu0
        %v2465 = vadd.f32 %v2238, %v2435
        %v2466 = vadd.f32 %v2239, %v2438
        %v2467 = vadd.f32 %v2240, %v2443
        %v2468 = vadd.f32 %v2241, %v2446
        %v2469 = vadd.f32 %v2242, %v2451
        %v2470 = vadd.f32 %v2243, %v2454
        %v2471 = vadd.f32 %v2244, %v2459
        %v2472 = vadd.f32 %v2245, %v2462
        %v2473 = vld [vmem:[%s3] sm:$0xff]
        %v2474 = vld [vmem:[%s3 + $0x8] sm:$0xff]
        %v2475 = vld [vmem:[%s3 + $0x10] sm:$0xff]
        %v2476 = vld [vmem:[%s3 + $0x18] sm:$0xff]
        %v2477 = vld [vmem:[%s3 + $0x20] sm:$0xff]
        %v2478 = vld [vmem:[%s3 + $0x28] sm:$0xff]
        %v2479 = vld [vmem:[%s3 + $0x30] sm:$0xff]
        %v2480 = vld [vmem:[%s3 + $0x38] sm:$0xff]
        %2482 = vset.pattern.permute.xlu0 0
        %2483 = vperm.xlu0 %2482, %v2473
        %v2484 = vpop.permute.xlu0 %2483
        %2487 = vset.pattern.permute.xlu0 0
        %2488 = vperm.xlu0 %2487, %v2474
        %v2489 = vpop.permute.xlu0 %2488
        %2492 = vset.pattern.permute.xlu0 0
        %2493 = vperm.xlu0 %2492, %v2475
        %v2494 = vpop.permute.xlu0 %2493
        %2497 = vset.pattern.permute.xlu0 0
        %2498 = vperm.xlu0 %2497, %v2476
        %v2499 = vpop.permute.xlu0 %2498
        %2502 = vset.pattern.permute.xlu0 0
        %2503 = vperm.xlu0 %2502, %v2477
        %v2504 = vpop.permute.xlu0 %2503
        %2507 = vset.pattern.permute.xlu0 0
        %2508 = vperm.xlu0 %2507, %v2478
        %v2509 = vpop.permute.xlu0 %2508
        %2512 = vset.pattern.permute.xlu0 0
        %2513 = vperm.xlu0 %2512, %v2479
        %v2514 = vpop.permute.xlu0 %2513
        %2517 = vset.pattern.permute.xlu0 0
        %2518 = vperm.xlu0 %2517, %v2480
        %v2519 = vpop.permute.xlu0 %2518
        %v2521 = vmul.f32 %v2465, %v2484
        %v2522 = vmul.f32 %v2466, %v2489
        %v2523 = vmul.f32 %v2467, %v2494
        %v2524 = vmul.f32 %v2468, %v2499
        %v2525 = vmul.f32 %v2469, %v2504
        %v2526 = vmul.f32 %v2470, %v2509
        %v2527 = vmul.f32 %v2471, %v2514
        %v2528 = vmul.f32 %v2472, %v2519
        %v2529 = vld [vmem:[%s4] sm:$0xff]
        %v2530 = vld [vmem:[%s4 + $0x8] sm:$0xff]
        %v2531 = vld [vmem:[%s4 + $0x10] sm:$0xff]
        %v2532 = vld [vmem:[%s4 + $0x18] sm:$0xff]
        %v2533 = vld [vmem:[%s4 + $0x20] sm:$0xff]
        %v2534 = vld [vmem:[%s4 + $0x28] sm:$0xff]
        %v2535 = vld [vmem:[%s4 + $0x30] sm:$0xff]
        %v2536 = vld [vmem:[%s4 + $0x38] sm:$0xff]
        %2538 = vset.pattern.permute.xlu0 0
        %2539 = vperm.xlu0 %2538, %v2529
        %v2540 = vpop.permute.xlu0 %2539
        %2543 = vset.pattern.permute.xlu0 0
        %2544 = vperm.xlu0 %2543, %v2530
        %v2545 = vpop.permute.xlu0 %2544
        %2548 = vset.pattern.permute.xlu0 0
        %2549 = vperm.xlu0 %2548, %v2531
        %v2550 = vpop.permute.xlu0 %2549
        %2553 = vset.pattern.permute.xlu0 0
        %2554 = vperm.xlu0 %2553, %v2532
        %v2555 = vpop.permute.xlu0 %2554
        %2558 = vset.pattern.permute.xlu0 0
        %2559 = vperm.xlu0 %2558, %v2533
        %v2560 = vpop.permute.xlu0 %2559
        %2563 = vset.pattern.permute.xlu0 0
        %2564 = vperm.xlu0 %2563, %v2534
        %v2565 = vpop.permute.xlu0 %2564
        %2568 = vset.pattern.permute.xlu0 0
        %2569 = vperm.xlu0 %2568, %v2535
        %v2570 = vpop.permute.xlu0 %2569
        %2573 = vset.pattern.permute.xlu0 0
        %2574 = vperm.xlu0 %2573, %v2536
        %v2575 = vpop.permute.xlu0 %2574
        %v2577 = vadd.f32 %v2521, %v2540
        %v2578 = vadd.f32 %v2522, %v2545
        %v2579 = vadd.f32 %v2523, %v2550
        %v2580 = vadd.f32 %v2524, %v2555
        %v2581 = vadd.f32 %v2525, %v2560
        %v2582 = vadd.f32 %v2526, %v2565
        %v2583 = vadd.f32 %v2527, %v2570
        %v2584 = vadd.f32 %v2528, %v2575
        %2585 = vst [vmem:[#allocation2] sm:$0xff] %v2577
        %2586 = vst [vmem:[#allocation2 + $0x8] sm:$0xff] %v2578
        %2587 = vst [vmem:[#allocation2 + $0x10] sm:$0xff] %v2579
        %2588 = vst [vmem:[#allocation2 + $0x18] sm:$0xff] %v2580
        %2589 = vst [vmem:[#allocation2 + $0x20] sm:$0xff] %v2581
        %2590 = vst [vmem:[#allocation2 + $0x28] sm:$0xff] %v2582
        %2591 = vst [vmem:[#allocation2 + $0x30] sm:$0xff] %v2583
        %2592 = vst [vmem:[#allocation2 + $0x38] sm:$0xff] %v2584
        %v2593 = vld [vmem:[#allocation2] sm:$0xff]
        %v2594 = vld [vmem:[#allocation2 + $0x8] sm:$0xff]
        %v2595 = vld [vmem:[#allocation2 + $0x10] sm:$0xff]
        %v2596 = vld [vmem:[#allocation2 + $0x18] sm:$0xff]
        %v2597 = vld [vmem:[#allocation2 + $0x20] sm:$0xff]
        %v2598 = vld [vmem:[#allocation2 + $0x28] sm:$0xff]
        %v2599 = vld [vmem:[#allocation2 + $0x30] sm:$0xff]
        %v2600 = vld [vmem:[#allocation2 + $0x38] sm:$0xff]
        %2601 = vrot.lane.b32.xlu0 %v2593, 9
        %v2602 = vpop.permute.xlu0 %2601
        %2603 = vrot.lane.b32.xlu0 %v2594, 9
        %v2604 = vpop.permute.xlu0 %2603
        %2605 = vrot.lane.b32.xlu0 %v2595, 9
        %v2606 = vpop.permute.xlu0 %2605
        %2607 = vrot.lane.b32.xlu0 %v2596, 9
        %v2608 = vpop.permute.xlu0 %2607
        %2609 = vrot.lane.b32.xlu0 %v2597, 9
        %v2610 = vpop.permute.xlu0 %2609
        %2611 = vrot.lane.b32.xlu0 %v2598, 9
        %v2612 = vpop.permute.xlu0 %2611
        %2613 = vrot.lane.b32.xlu0 %v2599, 9
        %v2614 = vpop.permute.xlu0 %2613
        %2615 = vrot.lane.b32.xlu0 %v2600, 9
        %v2616 = vpop.permute.xlu0 %2615
        %v2617 = vmul.f32 %v2602, %v580
        %v2618 = vmul.f32 %v2604, %v580
        %v2619 = vmul.f32 %v2606, %v580
        %v2620 = vmul.f32 %v2608, %v580
        %v2621 = vmul.f32 %v2610, %v580
        %v2622 = vmul.f32 %v2612, %v580
        %v2623 = vmul.f32 %v2614, %v580
        %v2624 = vmul.f32 %v2616, %v580
        %v2625 = vld [vmem:[%s5] sm:$0xf]
        %v2626 = vld [vmem:[%s5 + $0x4] sm:$0xf]
        %v2627 = vld [vmem:[%s5 + $0x8] sm:$0xf]
        %v2628 = vld [vmem:[%s5 + $0xc] sm:$0xf]
        %v2629 = vld [vmem:[%s5 + $0x10] sm:$0xf]
        %v2630 = vld [vmem:[%s5 + $0x14] sm:$0xf]
        %v2631 = vld [vmem:[%s5 + $0x18] sm:$0xf]
        %v2632 = vld [vmem:[%s5 + $0x1c] sm:$0xf]
        %v2633 = vpack.c.bf16 %v2618, %v2617
        %v2634 = vpack.c.bf16 %v2620, %v2619
        %v2635 = vpack.c.bf16 %v2622, %v2621
        %v2636 = vpack.c.bf16 %v2624, %v2623
        %2637 = vrot.lane.b32.xlu0 %v2593, 8
        %v2638 = vpop.permute.xlu0 %2637
        %2639 = vrot.lane.b32.xlu0 %v2594, 8
        %v2640 = vpop.permute.xlu0 %2639
        %2641 = vrot.lane.b32.xlu0 %v2595, 8
        %v2642 = vpop.permute.xlu0 %2641
        %2643 = vrot.lane.b32.xlu0 %v2596, 8
        %v2644 = vpop.permute.xlu0 %2643
        %2645 = vrot.lane.b32.xlu0 %v2597, 8
        %v2646 = vpop.permute.xlu0 %2645
        %2647 = vrot.lane.b32.xlu0 %v2598, 8
        %v2648 = vpop.permute.xlu0 %2647
        %2649 = vrot.lane.b32.xlu0 %v2599, 8
        %v2650 = vpop.permute.xlu0 %2649
        %2651 = vrot.lane.b32.xlu0 %v2600, 8
        %v2652 = vpop.permute.xlu0 %2651
        %v2653 = vmul.f32 %v2638, %v682
        %v2654 = vmul.f32 %v2640, %v682
        %v2655 = vmul.f32 %v2642, %v682
        %v2656 = vmul.f32 %v2644, %v682
        %v2657 = vmul.f32 %v2646, %v682
        %v2658 = vmul.f32 %v2648, %v682
        %v2659 = vmul.f32 %v2650, %v682
        %v2660 = vmul.f32 %v2652, %v682
        %s2661 = scalar_lea.vmem %s5, 32
        %v2662 = vld [vmem:[%s2661] sm:$0xf]
        %v2663 = vld [vmem:[%s2661 + $0x4] sm:$0xf]
        %v2664 = vld [vmem:[%s2661 + $0x8] sm:$0xf]
        %v2665 = vld [vmem:[%s2661 + $0xc] sm:$0xf]
        %v2666 = vld [vmem:[%s2661 + $0x10] sm:$0xf]
        %v2667 = vld [vmem:[%s2661 + $0x14] sm:$0xf]
        %v2668 = vld [vmem:[%s2661 + $0x18] sm:$0xf]
        %v2669 = vld [vmem:[%s2661 + $0x1c] sm:$0xf]
        %v2670 = vpack.c.bf16 %v2654, %v2653
        %v2671 = vpack.c.bf16 %v2656, %v2655
        %v2672 = vpack.c.bf16 %v2658, %v2657
        %v2673 = vpack.c.bf16 %v2660, %v2659
        %v2682 = vunpack.c.l.b16 %v2662
        %v2683 = vunpack.c.l.b16 %v2663
        %v2684 = vunpack.c.l.b16 %v2664
        %v2685 = vunpack.c.l.b16 %v2665
        %v2686 = vunpack.c.l.b16 %v2666
        %v2687 = vunpack.c.l.b16 %v2667
        %v2688 = vunpack.c.l.b16 %v2668
        %v2689 = vunpack.c.l.b16 %v2669
        %v2690 = vpack.c.b16 %v2683, %v2682
        %v2691 = vpack.c.b16 %v2685, %v2684
        %v2692 = vpack.c.b16 %v2687, %v2686
        %v2693 = vpack.c.b16 %v2689, %v2688
        %vm2694 = vcmask 523264
        %v2696 = vsel %vm2694, %v2690, 0
        %v2699 = vsel %vm2694, %v2691, 0
        %v2702 = vsel %vm2694, %v2692, 0
        %v2705 = vsel %vm2694, %v2693, 0
        %2707 = vmatprep.subr.bf16.mxu0 0
        %2708 = vmatpush1.bf16.msra.mxu0 0
        %2709 = vmatprep.subr.bf16.mxu0 0
        %2710 = vmatpush1.bf16.msra.mxu0 0
        %2711 = vmatprep.subr.bf16.mxu0 0
        %2712 = vmatpush1.bf16.msra.mxu0 0
        %2713 = vmatprep.subr.bf16.mxu0 0
        %2714 = vmatpush1.bf16.msra.mxu0 0
        %2715 = vmatprep.subr.bf16.mxu0 0
        %2716 = vmatpush1.bf16.msra.mxu0 %v2673
        %2717 = vmatprep.subr.bf16.mxu0 0
        %2718 = vmatpush1.bf16.msra.mxu0 %v2672
        %2719 = vmatprep.subr.bf16.mxu0 0
        %2720 = vmatpush1.bf16.msra.mxu0 %v2671
        %2721 = vmatprep.subr.bf16.mxu0 0
        %2722 = vmatpush1.bf16.msra.mxu0 %v2670
        %2723 = vmatprep.subr.bf16.mxu0 0
        %2724 = vmatpush2.bf16.msra.mxu0 0
        %2725 = vmatprep.subr.bf16.mxu0 0
        %2726 = vmatpush2.bf16.msra.mxu0 0
        %2727 = vmatprep.subr.bf16.mxu0 0
        %2728 = vmatpush2.bf16.msra.mxu0 0
        %2729 = vmatprep.subr.bf16.mxu0 0
        %2730 = vmatpush2.bf16.msra.mxu0 0
        %2731 = vmatprep.subr.bf16.mxu0 0
        %2732 = vmatpush2.bf16.msra.mxu0 0
        %2733 = vmatprep.subr.bf16.mxu0 0
        %2734 = vmatpush2.bf16.msra.mxu0 0
        %2735 = vmatprep.subr.bf16.mxu0 0
        %2736 = vmatpush2.bf16.msra.mxu0 0
        %2737 = vmatprep.subr.bf16.mxu0 0
        %2738 = vmatpush2.bf16.msra.mxu0 0
        %2739 = vmatprep.mubr.bf16.mxu0 0
        %2740 = vmatmul.mubr.bf16.gmra.mxu0 %v2696
        %v2741 = vpop.f32.mrf.mxu0
        %v2742 = vadd.f32 0.0, %v2741
        %v2743 = vpop.f32.mrf.mxu0
        %v2744 = vpop.f32.mrf.mxu0
        %v2745 = vadd.f32 0.0, %v2744
        %v2746 = vpop.f32.mrf.mxu0
        %2747 = vmatprep.mubr.bf16.mxu0 0
        %2748 = vmatmul.mubr.bf16.gmra.mxu0 %v2699
        %v2749 = vpop.f32.mrf.mxu0
        %v2750 = vadd.f32 0.0, %v2749
        %v2751 = vpop.f32.mrf.mxu0
        %v2752 = vpop.f32.mrf.mxu0
        %v2753 = vadd.f32 0.0, %v2752
        %v2754 = vpop.f32.mrf.mxu0
        %2755 = vmatprep.mubr.bf16.mxu0 0
        %2756 = vmatmul.mubr.bf16.gmra.mxu0 %v2702
        %v2757 = vpop.f32.mrf.mxu0
        %v2758 = vadd.f32 0.0, %v2757
        %v2759 = vpop.f32.mrf.mxu0
        %v2760 = vpop.f32.mrf.mxu0
        %v2761 = vadd.f32 0.0, %v2760
        %v2762 = vpop.f32.mrf.mxu0
        %2763 = vmatprep.mubr.bf16.mxu0 0
        %2764 = vmatmul.mubr.bf16.gmra.mxu0 %v2705
        %v2765 = vpop.f32.mrf.mxu0
        %v2766 = vadd.f32 0.0, %v2765
        %v2767 = vpop.f32.mrf.mxu0
        %v2768 = vpop.f32.mrf.mxu0
        %v2769 = vadd.f32 0.0, %v2768
        %v2770 = vpop.f32.mrf.mxu0
        %2771 = vdwg.mxu0
        %v2780 = vunpack.c.l.b16 %v2625
        %v2781 = vunpack.c.l.b16 %v2626
        %v2782 = vunpack.c.l.b16 %v2627
        %v2783 = vunpack.c.l.b16 %v2628
        %v2784 = vunpack.c.l.b16 %v2629
        %v2785 = vunpack.c.l.b16 %v2630
        %v2786 = vunpack.c.l.b16 %v2631
        %v2787 = vunpack.c.l.b16 %v2632
        %v2788 = vpack.c.b16 %v2781, %v2780
        %v2789 = vpack.c.b16 %v2783, %v2782
        %v2790 = vpack.c.b16 %v2785, %v2784
        %v2791 = vpack.c.b16 %v2787, %v2786
        %v2793 = vsel %vm2694, %v2788, 0
        %v2796 = vsel %vm2694, %v2789, 0
        %v2799 = vsel %vm2694, %v2790, 0
        %v2802 = vsel %vm2694, %v2791, 0
        %2804 = vmatprep.subr.bf16.mxu0 0
        %2805 = vmatpush1.bf16.msra.mxu0 0
        %2806 = vmatprep.subr.bf16.mxu0 0
        %2807 = vmatpush1.bf16.msra.mxu0 0
        %2808 = vmatprep.subr.bf16.mxu0 0
        %2809 = vmatpush1.bf16.msra.mxu0 0
        %2810 = vmatprep.subr.bf16.mxu0 0
        %2811 = vmatpush1.bf16.msra.mxu0 0
        %2812 = vmatprep.subr.bf16.mxu0 0
        %2813 = vmatpush1.bf16.msra.mxu0 %v2636
        %2814 = vmatprep.subr.bf16.mxu0 0
        %2815 = vmatpush1.bf16.msra.mxu0 %v2635
        %2816 = vmatprep.subr.bf16.mxu0 0
        %2817 = vmatpush1.bf16.msra.mxu0 %v2634
        %2818 = vmatprep.subr.bf16.mxu0 0
        %2819 = vmatpush1.bf16.msra.mxu0 %v2633
        %2820 = vmatprep.subr.bf16.mxu0 0
        %2821 = vmatpush2.bf16.msra.mxu0 0
        %2822 = vmatprep.subr.bf16.mxu0 0
        %2823 = vmatpush2.bf16.msra.mxu0 0
        %2824 = vmatprep.subr.bf16.mxu0 0
        %2825 = vmatpush2.bf16.msra.mxu0 0
        %2826 = vmatprep.subr.bf16.mxu0 0
        %2827 = vmatpush2.bf16.msra.mxu0 0
        %2828 = vmatprep.subr.bf16.mxu0 0
        %2829 = vmatpush2.bf16.msra.mxu0 0
        %2830 = vmatprep.subr.bf16.mxu0 0
        %2831 = vmatpush2.bf16.msra.mxu0 0
        %2832 = vmatprep.subr.bf16.mxu0 0
        %2833 = vmatpush2.bf16.msra.mxu0 0
        %2834 = vmatprep.subr.bf16.mxu0 0
        %2835 = vmatpush2.bf16.msra.mxu0 0
        %2836 = vmatprep.mubr.bf16.mxu0 0
        %2837 = vmatmul.mubr.bf16.gmra.mxu0 %v2793
        %v2838 = vpop.f32.mrf.mxu0
        %v2839 = vadd.f32 %v2742, %v2838
        %v2840 = vpop.f32.mrf.mxu0
        %v2841 = vpop.f32.mrf.mxu0
        %v2842 = vadd.f32 %v2745, %v2841
        %v2843 = vpop.f32.mrf.mxu0
        %2844 = vmatprep.mubr.bf16.mxu0 0
        %2845 = vmatmul.mubr.bf16.gmra.mxu0 %v2796
        %v2846 = vpop.f32.mrf.mxu0
        %v2847 = vadd.f32 %v2750, %v2846
        %v2848 = vpop.f32.mrf.mxu0
        %v2849 = vpop.f32.mrf.mxu0
        %v2850 = vadd.f32 %v2753, %v2849
        %v2851 = vpop.f32.mrf.mxu0
        %2852 = vmatprep.mubr.bf16.mxu0 0
        %2853 = vmatmul.mubr.bf16.gmra.mxu0 %v2799
        %v2854 = vpop.f32.mrf.mxu0
        %v2855 = vadd.f32 %v2758, %v2854
        %v2856 = vpop.f32.mrf.mxu0
        %v2857 = vpop.f32.mrf.mxu0
        %v2858 = vadd.f32 %v2761, %v2857
        %v2859 = vpop.f32.mrf.mxu0
        %2860 = vmatprep.mubr.bf16.mxu0 0
        %2861 = vmatmul.mubr.bf16.gmra.mxu0 %v2802
        %v2862 = vpop.f32.mrf.mxu0
        %v2863 = vadd.f32 %v2766, %v2862
        %v2864 = vpop.f32.mrf.mxu0
        %v2865 = vpop.f32.mrf.mxu0
        %v2866 = vadd.f32 %v2769, %v2865
        %v2867 = vpop.f32.mrf.mxu0
        %2868 = vdwg.mxu0
        %2869 = vrot.lane.b32.xlu0 %v2593, 7
        %v2870 = vpop.permute.xlu0 %2869
        %2871 = vrot.lane.b32.xlu0 %v2594, 7
        %v2872 = vpop.permute.xlu0 %2871
        %2873 = vrot.lane.b32.xlu0 %v2595, 7
        %v2874 = vpop.permute.xlu0 %2873
        %2875 = vrot.lane.b32.xlu0 %v2596, 7
        %v2876 = vpop.permute.xlu0 %2875
        %2877 = vrot.lane.b32.xlu0 %v2597, 7
        %v2878 = vpop.permute.xlu0 %2877
        %2879 = vrot.lane.b32.xlu0 %v2598, 7
        %v2880 = vpop.permute.xlu0 %2879
        %2881 = vrot.lane.b32.xlu0 %v2599, 7
        %v2882 = vpop.permute.xlu0 %2881
        %2883 = vrot.lane.b32.xlu0 %v2600, 7
        %v2884 = vpop.permute.xlu0 %2883
        %v2885 = vmul.f32 %v2870, %v1019
        %v2886 = vmul.f32 %v2872, %v1019
        %v2887 = vmul.f32 %v2874, %v1019
        %v2888 = vmul.f32 %v2876, %v1019
        %v2889 = vmul.f32 %v2878, %v1019
        %v2890 = vmul.f32 %v2880, %v1019
        %v2891 = vmul.f32 %v2882, %v1019
        %v2892 = vmul.f32 %v2884, %v1019
        %s2893 = scalar_lea.vmem %s5, 64
        %v2894 = vld [vmem:[%s2893] sm:$0xf]
        %v2895 = vld [vmem:[%s2893 + $0x4] sm:$0xf]
        %v2896 = vld [vmem:[%s2893 + $0x8] sm:$0xf]
        %v2897 = vld [vmem:[%s2893 + $0xc] sm:$0xf]
        %v2898 = vld [vmem:[%s2893 + $0x10] sm:$0xf]
        %v2899 = vld [vmem:[%s2893 + $0x14] sm:$0xf]
        %v2900 = vld [vmem:[%s2893 + $0x18] sm:$0xf]
        %v2901 = vld [vmem:[%s2893 + $0x1c] sm:$0xf]
        %v2902 = vpack.c.bf16 %v2886, %v2885
        %v2903 = vpack.c.bf16 %v2888, %v2887
        %v2904 = vpack.c.bf16 %v2890, %v2889
        %v2905 = vpack.c.bf16 %v2892, %v2891
        %v2914 = vunpack.c.l.b16 %v2894
        %v2915 = vunpack.c.l.b16 %v2895
        %v2916 = vunpack.c.l.b16 %v2896
        %v2917 = vunpack.c.l.b16 %v2897
        %v2918 = vunpack.c.l.b16 %v2898
        %v2919 = vunpack.c.l.b16 %v2899
        %v2920 = vunpack.c.l.b16 %v2900
        %v2921 = vunpack.c.l.b16 %v2901
        %v2922 = vpack.c.b16 %v2915, %v2914
        %v2923 = vpack.c.b16 %v2917, %v2916
        %v2924 = vpack.c.b16 %v2919, %v2918
        %v2925 = vpack.c.b16 %v2921, %v2920
        %v2927 = vsel %vm2694, %v2922, 0
        %v2930 = vsel %vm2694, %v2923, 0
        %v2933 = vsel %vm2694, %v2924, 0
        %v2936 = vsel %vm2694, %v2925, 0
        %2938 = vmatprep.subr.bf16.mxu0 0
        %2939 = vmatpush1.bf16.msra.mxu0 0
        %2940 = vmatprep.subr.bf16.mxu0 0
        %2941 = vmatpush1.bf16.msra.mxu0 0
        %2942 = vmatprep.subr.bf16.mxu0 0
        %2943 = vmatpush1.bf16.msra.mxu0 0
        %2944 = vmatprep.subr.bf16.mxu0 0
        %2945 = vmatpush1.bf16.msra.mxu0 0
        %2946 = vmatprep.subr.bf16.mxu0 0
        %2947 = vmatpush1.bf16.msra.mxu0 %v2905
        %2948 = vmatprep.subr.bf16.mxu0 0
        %2949 = vmatpush1.bf16.msra.mxu0 %v2904
        %2950 = vmatprep.subr.bf16.mxu0 0
        %2951 = vmatpush1.bf16.msra.mxu0 %v2903
        %2952 = vmatprep.subr.bf16.mxu0 0
        %2953 = vmatpush1.bf16.msra.mxu0 %v2902
        %2954 = vmatprep.subr.bf16.mxu0 0
        %2955 = vmatpush2.bf16.msra.mxu0 0
        %2956 = vmatprep.subr.bf16.mxu0 0
        %2957 = vmatpush2.bf16.msra.mxu0 0
        %2958 = vmatprep.subr.bf16.mxu0 0
        %2959 = vmatpush2.bf16.msra.mxu0 0
        %2960 = vmatprep.subr.bf16.mxu0 0
        %2961 = vmatpush2.bf16.msra.mxu0 0
        %2962 = vmatprep.subr.bf16.mxu0 0
        %2963 = vmatpush2.bf16.msra.mxu0 0
        %2964 = vmatprep.subr.bf16.mxu0 0
        %2965 = vmatpush2.bf16.msra.mxu0 0
        %2966 = vmatprep.subr.bf16.mxu0 0
        %2967 = vmatpush2.bf16.msra.mxu0 0
        %2968 = vmatprep.subr.bf16.mxu0 0
        %2969 = vmatpush2.bf16.msra.mxu0 0
        %2970 = vmatprep.mubr.bf16.mxu0 0
        %2971 = vmatmul.mubr.bf16.gmra.mxu0 %v2927
        %v2972 = vpop.f32.mrf.mxu0
        %v2973 = vadd.f32 0.0, %v2972
        %v2974 = vpop.f32.mrf.mxu0
        %v2975 = vpop.f32.mrf.mxu0
        %v2976 = vadd.f32 0.0, %v2975
        %v2977 = vpop.f32.mrf.mxu0
        %2978 = vmatprep.mubr.bf16.mxu0 0
        %2979 = vmatmul.mubr.bf16.gmra.mxu0 %v2930
        %v2980 = vpop.f32.mrf.mxu0
        %v2981 = vadd.f32 0.0, %v2980
        %v2982 = vpop.f32.mrf.mxu0
        %v2983 = vpop.f32.mrf.mxu0
        %v2984 = vadd.f32 0.0, %v2983
        %v2985 = vpop.f32.mrf.mxu0
        %2986 = vmatprep.mubr.bf16.mxu0 0
        %2987 = vmatmul.mubr.bf16.gmra.mxu0 %v2933
        %v2988 = vpop.f32.mrf.mxu0
        %v2989 = vadd.f32 0.0, %v2988
        %v2990 = vpop.f32.mrf.mxu0
        %v2991 = vpop.f32.mrf.mxu0
        %v2992 = vadd.f32 0.0, %v2991
        %v2993 = vpop.f32.mrf.mxu0
        %2994 = vmatprep.mubr.bf16.mxu0 0
        %2995 = vmatmul.mubr.bf16.gmra.mxu0 %v2936
        %v2996 = vpop.f32.mrf.mxu0
        %v2997 = vadd.f32 0.0, %v2996
        %v2998 = vpop.f32.mrf.mxu0
        %v2999 = vpop.f32.mrf.mxu0
        %v3000 = vadd.f32 0.0, %v2999
        %v3001 = vpop.f32.mrf.mxu0
        %3002 = vdwg.mxu0
        %v3003 = vadd.f32 %v2839, %v2973
        %v3004 = vadd.f32 %v2842, %v2976
        %v3005 = vadd.f32 %v2847, %v2981
        %v3006 = vadd.f32 %v2850, %v2984
        %v3007 = vadd.f32 %v2855, %v2989
        %v3008 = vadd.f32 %v2858, %v2992
        %v3009 = vadd.f32 %v2863, %v2997
        %v3010 = vadd.f32 %v2866, %v3000
        %3011 = vrot.lane.b32.xlu0 %v2593, 1
        %v3012 = vpop.permute.xlu0 %3011
        %3013 = vrot.lane.b32.xlu0 %v2594, 1
        %v3014 = vpop.permute.xlu0 %3013
        %3015 = vrot.lane.b32.xlu0 %v2595, 1
        %v3016 = vpop.permute.xlu0 %3015
        %3017 = vrot.lane.b32.xlu0 %v2596, 1
        %v3018 = vpop.permute.xlu0 %3017
        %3019 = vrot.lane.b32.xlu0 %v2597, 1
        %v3020 = vpop.permute.xlu0 %3019
        %3021 = vrot.lane.b32.xlu0 %v2598, 1
        %v3022 = vpop.permute.xlu0 %3021
        %3023 = vrot.lane.b32.xlu0 %v2599, 1
        %v3024 = vpop.permute.xlu0 %3023
        %3025 = vrot.lane.b32.xlu0 %v2600, 1
        %v3026 = vpop.permute.xlu0 %3025
        %v3027 = vmul.f32 %v3012, %v1246
        %v3028 = vmul.f32 %v3014, %v1246
        %v3029 = vmul.f32 %v3016, %v1246
        %v3030 = vmul.f32 %v3018, %v1246
        %v3031 = vmul.f32 %v3020, %v1246
        %v3032 = vmul.f32 %v3022, %v1246
        %v3033 = vmul.f32 %v3024, %v1246
        %v3034 = vmul.f32 %v3026, %v1246
        %s3035 = scalar_lea.vmem %s5, 96
        %v3036 = vld [vmem:[%s3035] sm:$0xf]
        %v3037 = vld [vmem:[%s3035 + $0x4] sm:$0xf]
        %v3038 = vld [vmem:[%s3035 + $0x8] sm:$0xf]
        %v3039 = vld [vmem:[%s3035 + $0xc] sm:$0xf]
        %v3040 = vld [vmem:[%s3035 + $0x10] sm:$0xf]
        %v3041 = vld [vmem:[%s3035 + $0x14] sm:$0xf]
        %v3042 = vld [vmem:[%s3035 + $0x18] sm:$0xf]
        %v3043 = vld [vmem:[%s3035 + $0x1c] sm:$0xf]
        %v3044 = vpack.c.bf16 %v3028, %v3027
        %v3045 = vpack.c.bf16 %v3030, %v3029
        %v3046 = vpack.c.bf16 %v3032, %v3031
        %v3047 = vpack.c.bf16 %v3034, %v3033
        %v3056 = vunpack.c.l.b16 %v3036
        %v3057 = vunpack.c.l.b16 %v3037
        %v3058 = vunpack.c.l.b16 %v3038
        %v3059 = vunpack.c.l.b16 %v3039
        %v3060 = vunpack.c.l.b16 %v3040
        %v3061 = vunpack.c.l.b16 %v3041
        %v3062 = vunpack.c.l.b16 %v3042
        %v3063 = vunpack.c.l.b16 %v3043
        %v3064 = vpack.c.b16 %v3057, %v3056
        %v3065 = vpack.c.b16 %v3059, %v3058
        %v3066 = vpack.c.b16 %v3061, %v3060
        %v3067 = vpack.c.b16 %v3063, %v3062
        %v3069 = vsel %vm2694, %v3064, 0
        %v3072 = vsel %vm2694, %v3065, 0
        %v3075 = vsel %vm2694, %v3066, 0
        %v3078 = vsel %vm2694, %v3067, 0
        %3080 = vmatprep.subr.bf16.mxu0 0
        %3081 = vmatpush1.bf16.msra.mxu0 0
        %3082 = vmatprep.subr.bf16.mxu0 0
        %3083 = vmatpush1.bf16.msra.mxu0 0
        %3084 = vmatprep.subr.bf16.mxu0 0
        %3085 = vmatpush1.bf16.msra.mxu0 0
        %3086 = vmatprep.subr.bf16.mxu0 0
        %3087 = vmatpush1.bf16.msra.mxu0 0
        %3088 = vmatprep.subr.bf16.mxu0 0
        %3089 = vmatpush1.bf16.msra.mxu0 %v3047
        %3090 = vmatprep.subr.bf16.mxu0 0
        %3091 = vmatpush1.bf16.msra.mxu0 %v3046
        %3092 = vmatprep.subr.bf16.mxu0 0
        %3093 = vmatpush1.bf16.msra.mxu0 %v3045
        %3094 = vmatprep.subr.bf16.mxu0 0
        %3095 = vmatpush1.bf16.msra.mxu0 %v3044
        %3096 = vmatprep.subr.bf16.mxu0 0
        %3097 = vmatpush2.bf16.msra.mxu0 0
        %3098 = vmatprep.subr.bf16.mxu0 0
        %3099 = vmatpush2.bf16.msra.mxu0 0
        %3100 = vmatprep.subr.bf16.mxu0 0
        %3101 = vmatpush2.bf16.msra.mxu0 0
        %3102 = vmatprep.subr.bf16.mxu0 0
        %3103 = vmatpush2.bf16.msra.mxu0 0
        %3104 = vmatprep.subr.bf16.mxu0 0
        %3105 = vmatpush2.bf16.msra.mxu0 0
        %3106 = vmatprep.subr.bf16.mxu0 0
        %3107 = vmatpush2.bf16.msra.mxu0 0
        %3108 = vmatprep.subr.bf16.mxu0 0
        %3109 = vmatpush2.bf16.msra.mxu0 0
        %3110 = vmatprep.subr.bf16.mxu0 0
        %3111 = vmatpush2.bf16.msra.mxu0 0
        %3112 = vmatprep.mubr.bf16.mxu0 0
        %3113 = vmatmul.mubr.bf16.gmra.mxu0 %v3069
        %v3114 = vpop.f32.mrf.mxu0
        %v3115 = vadd.f32 0.0, %v3114
        %v3116 = vpop.f32.mrf.mxu0
        %v3117 = vpop.f32.mrf.mxu0
        %v3118 = vadd.f32 0.0, %v3117
        %v3119 = vpop.f32.mrf.mxu0
        %3120 = vmatprep.mubr.bf16.mxu0 0
        %3121 = vmatmul.mubr.bf16.gmra.mxu0 %v3072
        %v3122 = vpop.f32.mrf.mxu0
        %v3123 = vadd.f32 0.0, %v3122
        %v3124 = vpop.f32.mrf.mxu0
        %v3125 = vpop.f32.mrf.mxu0
        %v3126 = vadd.f32 0.0, %v3125
        %v3127 = vpop.f32.mrf.mxu0
        %3128 = vmatprep.mubr.bf16.mxu0 0
        %3129 = vmatmul.mubr.bf16.gmra.mxu0 %v3075
        %v3130 = vpop.f32.mrf.mxu0
        %v3131 = vadd.f32 0.0, %v3130
        %v3132 = vpop.f32.mrf.mxu0
        %v3133 = vpop.f32.mrf.mxu0
        %v3134 = vadd.f32 0.0, %v3133
        %v3135 = vpop.f32.mrf.mxu0
        %3136 = vmatprep.mubr.bf16.mxu0 0
        %3137 = vmatmul.mubr.bf16.gmra.mxu0 %v3078
        %v3138 = vpop.f32.mrf.mxu0
        %v3139 = vadd.f32 0.0, %v3138
        %v3140 = vpop.f32.mrf.mxu0
        %v3141 = vpop.f32.mrf.mxu0
        %v3142 = vadd.f32 0.0, %v3141
        %v3143 = vpop.f32.mrf.mxu0
        %3144 = vdwg.mxu0
        %v3145 = vadd.f32 %v3003, %v3115
        %v3146 = vadd.f32 %v3004, %v3118
        %v3147 = vadd.f32 %v3005, %v3123
        %v3148 = vadd.f32 %v3006, %v3126
        %v3149 = vadd.f32 %v3007, %v3131
        %v3150 = vadd.f32 %v3008, %v3134
        %v3151 = vadd.f32 %v3009, %v3139
        %v3152 = vadd.f32 %v3010, %v3142
        %s3153 = scalar_lea.vmem %s5, 128
        %v3154 = vld [vmem:[%s3153] sm:$0xf]
        %v3155 = vld [vmem:[%s3153 + $0x4] sm:$0xf]
        %v3156 = vld [vmem:[%s3153 + $0x8] sm:$0xf]
        %v3157 = vld [vmem:[%s3153 + $0xc] sm:$0xf]
        %v3158 = vld [vmem:[%s3153 + $0x10] sm:$0xf]
        %v3159 = vld [vmem:[%s3153 + $0x14] sm:$0xf]
        %v3160 = vld [vmem:[%s3153 + $0x18] sm:$0xf]
        %v3161 = vld [vmem:[%s3153 + $0x1c] sm:$0xf]
        %v3162 = vpack.c.bf16 %v2594, %v2593
        %v3163 = vpack.c.bf16 %v2596, %v2595
        %v3164 = vpack.c.bf16 %v2598, %v2597
        %v3165 = vpack.c.bf16 %v2600, %v2599
        %v3174 = vunpack.c.l.b16 %v3154
        %v3175 = vunpack.c.l.b16 %v3155
        %v3176 = vunpack.c.l.b16 %v3156
        %v3177 = vunpack.c.l.b16 %v3157
        %v3178 = vunpack.c.l.b16 %v3158
        %v3179 = vunpack.c.l.b16 %v3159
        %v3180 = vunpack.c.l.b16 %v3160
        %v3181 = vunpack.c.l.b16 %v3161
        %v3182 = vpack.c.b16 %v3175, %v3174
        %v3183 = vpack.c.b16 %v3177, %v3176
        %v3184 = vpack.c.b16 %v3179, %v3178
        %v3185 = vpack.c.b16 %v3181, %v3180
        %v3187 = vsel %vm2694, %v3182, 0
        %v3190 = vsel %vm2694, %v3183, 0
        %v3193 = vsel %vm2694, %v3184, 0
        %v3196 = vsel %vm2694, %v3185, 0
        %3198 = vmatprep.subr.bf16.mxu0 0
        %3199 = vmatpush1.bf16.msra.mxu0 0
        %3200 = vmatprep.subr.bf16.mxu0 0
        %3201 = vmatpush1.bf16.msra.mxu0 0
        %3202 = vmatprep.subr.bf16.mxu0 0
        %3203 = vmatpush1.bf16.msra.mxu0 0
        %3204 = vmatprep.subr.bf16.mxu0 0
        %3205 = vmatpush1.bf16.msra.mxu0 0
        %3206 = vmatprep.subr.bf16.mxu0 0
        %3207 = vmatpush1.bf16.msra.mxu0 %v3165
        %3208 = vmatprep.subr.bf16.mxu0 0
        %3209 = vmatpush1.bf16.msra.mxu0 %v3164
        %3210 = vmatprep.subr.bf16.mxu0 0
        %3211 = vmatpush1.bf16.msra.mxu0 %v3163
        %3212 = vmatprep.subr.bf16.mxu0 0
        %3213 = vmatpush1.bf16.msra.mxu0 %v3162
        %3214 = vmatprep.subr.bf16.mxu0 0
        %3215 = vmatpush2.bf16.msra.mxu0 0
        %3216 = vmatprep.subr.bf16.mxu0 0
        %3217 = vmatpush2.bf16.msra.mxu0 0
        %3218 = vmatprep.subr.bf16.mxu0 0
        %3219 = vmatpush2.bf16.msra.mxu0 0
        %3220 = vmatprep.subr.bf16.mxu0 0
        %3221 = vmatpush2.bf16.msra.mxu0 0
        %3222 = vmatprep.subr.bf16.mxu0 0
        %3223 = vmatpush2.bf16.msra.mxu0 0
        %3224 = vmatprep.subr.bf16.mxu0 0
        %3225 = vmatpush2.bf16.msra.mxu0 0
        %3226 = vmatprep.subr.bf16.mxu0 0
        %3227 = vmatpush2.bf16.msra.mxu0 0
        %3228 = vmatprep.subr.bf16.mxu0 0
        %3229 = vmatpush2.bf16.msra.mxu0 0
        %3230 = vmatprep.mubr.bf16.mxu0 0
        %3231 = vmatmul.mubr.bf16.gmra.mxu0 %v3187
        %v3232 = vpop.f32.mrf.mxu0
        %v3233 = vadd.f32 0.0, %v3232
        %v3234 = vpop.f32.mrf.mxu0
        %v3235 = vpop.f32.mrf.mxu0
        %v3236 = vadd.f32 0.0, %v3235
        %v3237 = vpop.f32.mrf.mxu0
        %3238 = vmatprep.mubr.bf16.mxu0 0
        %3239 = vmatmul.mubr.bf16.gmra.mxu0 %v3190
        %v3240 = vpop.f32.mrf.mxu0
        %v3241 = vadd.f32 0.0, %v3240
        %v3242 = vpop.f32.mrf.mxu0
        %v3243 = vpop.f32.mrf.mxu0
        %v3244 = vadd.f32 0.0, %v3243
        %v3245 = vpop.f32.mrf.mxu0
        %3246 = vmatprep.mubr.bf16.mxu0 0
        %3247 = vmatmul.mubr.bf16.gmra.mxu0 %v3193
        %v3248 = vpop.f32.mrf.mxu0
        %v3249 = vadd.f32 0.0, %v3248
        %v3250 = vpop.f32.mrf.mxu0
        %v3251 = vpop.f32.mrf.mxu0
        %v3252 = vadd.f32 0.0, %v3251
        %v3253 = vpop.f32.mrf.mxu0
        %3254 = vmatprep.mubr.bf16.mxu0 0
        %3255 = vmatmul.mubr.bf16.gmra.mxu0 %v3196
        %v3256 = vpop.f32.mrf.mxu0
        %v3257 = vadd.f32 0.0, %v3256
        %v3258 = vpop.f32.mrf.mxu0
        %v3259 = vpop.f32.mrf.mxu0
        %v3260 = vadd.f32 0.0, %v3259
        %v3261 = vpop.f32.mrf.mxu0
        %3262 = vdwg.mxu0
        %v3263 = vadd.f32 %v3145, %v3233
        %v3264 = vadd.f32 %v3146, %v3236
        %v3265 = vadd.f32 %v3147, %v3241
        %v3266 = vadd.f32 %v3148, %v3244
        %v3267 = vadd.f32 %v3149, %v3249
        %v3268 = vadd.f32 %v3150, %v3252
        %v3269 = vadd.f32 %v3151, %v3257
        %v3270 = vadd.f32 %v3152, %v3260
        %3271 = vrot.lane.b32.xlu0 %v2593, 127
        %v3272 = vpop.permute.xlu0 %3271
        %3273 = vrot.lane.b32.xlu0 %v2594, 127
        %v3274 = vpop.permute.xlu0 %3273
        %3275 = vrot.lane.b32.xlu0 %v2595, 127
        %v3276 = vpop.permute.xlu0 %3275
        %3277 = vrot.lane.b32.xlu0 %v2596, 127
        %v3278 = vpop.permute.xlu0 %3277
        %3279 = vrot.lane.b32.xlu0 %v2597, 127
        %v3280 = vpop.permute.xlu0 %3279
        %3281 = vrot.lane.b32.xlu0 %v2598, 127
        %v3282 = vpop.permute.xlu0 %3281
        %3283 = vrot.lane.b32.xlu0 %v2599, 127
        %v3284 = vpop.permute.xlu0 %3283
        %3285 = vrot.lane.b32.xlu0 %v2600, 127
        %v3286 = vpop.permute.xlu0 %3285
        %v3287 = vmul.f32 %v3272, %v1619
        %v3288 = vmul.f32 %v3274, %v1619
        %v3289 = vmul.f32 %v3276, %v1619
        %v3290 = vmul.f32 %v3278, %v1619
        %v3291 = vmul.f32 %v3280, %v1619
        %v3292 = vmul.f32 %v3282, %v1619
        %v3293 = vmul.f32 %v3284, %v1619
        %v3294 = vmul.f32 %v3286, %v1619
        %s3295 = scalar_lea.vmem %s5, 160
        %v3296 = vld [vmem:[%s3295] sm:$0xf]
        %v3297 = vld [vmem:[%s3295 + $0x4] sm:$0xf]
        %v3298 = vld [vmem:[%s3295 + $0x8] sm:$0xf]
        %v3299 = vld [vmem:[%s3295 + $0xc] sm:$0xf]
        %v3300 = vld [vmem:[%s3295 + $0x10] sm:$0xf]
        %v3301 = vld [vmem:[%s3295 + $0x14] sm:$0xf]
        %v3302 = vld [vmem:[%s3295 + $0x18] sm:$0xf]
        %v3303 = vld [vmem:[%s3295 + $0x1c] sm:$0xf]
        %v3304 = vpack.c.bf16 %v3288, %v3287
        %v3305 = vpack.c.bf16 %v3290, %v3289
        %v3306 = vpack.c.bf16 %v3292, %v3291
        %v3307 = vpack.c.bf16 %v3294, %v3293
        %v3316 = vunpack.c.l.b16 %v3296
        %v3317 = vunpack.c.l.b16 %v3297
        %v3318 = vunpack.c.l.b16 %v3298
        %v3319 = vunpack.c.l.b16 %v3299
        %v3320 = vunpack.c.l.b16 %v3300
        %v3321 = vunpack.c.l.b16 %v3301
        %v3322 = vunpack.c.l.b16 %v3302
        %v3323 = vunpack.c.l.b16 %v3303
        %v3324 = vpack.c.b16 %v3317, %v3316
        %v3325 = vpack.c.b16 %v3319, %v3318
        %v3326 = vpack.c.b16 %v3321, %v3320
        %v3327 = vpack.c.b16 %v3323, %v3322
        %v3329 = vsel %vm2694, %v3324, 0
        %v3332 = vsel %vm2694, %v3325, 0
        %v3335 = vsel %vm2694, %v3326, 0
        %v3338 = vsel %vm2694, %v3327, 0
        %3340 = vmatprep.subr.bf16.mxu0 0
        %3341 = vmatpush1.bf16.msra.mxu0 0
        %3342 = vmatprep.subr.bf16.mxu0 0
        %3343 = vmatpush1.bf16.msra.mxu0 0
        %3344 = vmatprep.subr.bf16.mxu0 0
        %3345 = vmatpush1.bf16.msra.mxu0 0
        %3346 = vmatprep.subr.bf16.mxu0 0
        %3347 = vmatpush1.bf16.msra.mxu0 0
        %3348 = vmatprep.subr.bf16.mxu0 0
        %3349 = vmatpush1.bf16.msra.mxu0 %v3307
        %3350 = vmatprep.subr.bf16.mxu0 0
        %3351 = vmatpush1.bf16.msra.mxu0 %v3306
        %3352 = vmatprep.subr.bf16.mxu0 0
        %3353 = vmatpush1.bf16.msra.mxu0 %v3305
        %3354 = vmatprep.subr.bf16.mxu0 0
        %3355 = vmatpush1.bf16.msra.mxu0 %v3304
        %3356 = vmatprep.subr.bf16.mxu0 0
        %3357 = vmatpush2.bf16.msra.mxu0 0
        %3358 = vmatprep.subr.bf16.mxu0 0
        %3359 = vmatpush2.bf16.msra.mxu0 0
        %3360 = vmatprep.subr.bf16.mxu0 0
        %3361 = vmatpush2.bf16.msra.mxu0 0
        %3362 = vmatprep.subr.bf16.mxu0 0
        %3363 = vmatpush2.bf16.msra.mxu0 0
        %3364 = vmatprep.subr.bf16.mxu0 0
        %3365 = vmatpush2.bf16.msra.mxu0 0
        %3366 = vmatprep.subr.bf16.mxu0 0
        %3367 = vmatpush2.bf16.msra.mxu0 0
        %3368 = vmatprep.subr.bf16.mxu0 0
        %3369 = vmatpush2.bf16.msra.mxu0 0
        %3370 = vmatprep.subr.bf16.mxu0 0
        %3371 = vmatpush2.bf16.msra.mxu0 0
        %3372 = vmatprep.mubr.bf16.mxu0 0
        %3373 = vmatmul.mubr.bf16.gmra.mxu0 %v3329
        %v3374 = vpop.f32.mrf.mxu0
        %v3375 = vadd.f32 0.0, %v3374
        %v3376 = vpop.f32.mrf.mxu0
        %v3377 = vpop.f32.mrf.mxu0
        %v3378 = vadd.f32 0.0, %v3377
        %v3379 = vpop.f32.mrf.mxu0
        %3380 = vmatprep.mubr.bf16.mxu0 0
        %3381 = vmatmul.mubr.bf16.gmra.mxu0 %v3332
        %v3382 = vpop.f32.mrf.mxu0
        %v3383 = vadd.f32 0.0, %v3382
        %v3384 = vpop.f32.mrf.mxu0
        %v3385 = vpop.f32.mrf.mxu0
        %v3386 = vadd.f32 0.0, %v3385
        %v3387 = vpop.f32.mrf.mxu0
        %3388 = vmatprep.mubr.bf16.mxu0 0
        %3389 = vmatmul.mubr.bf16.gmra.mxu0 %v3335
        %v3390 = vpop.f32.mrf.mxu0
        %v3391 = vadd.f32 0.0, %v3390
        %v3392 = vpop.f32.mrf.mxu0
        %v3393 = vpop.f32.mrf.mxu0
        %v3394 = vadd.f32 0.0, %v3393
        %v3395 = vpop.f32.mrf.mxu0
        %3396 = vmatprep.mubr.bf16.mxu0 0
        %3397 = vmatmul.mubr.bf16.gmra.mxu0 %v3338
        %v3398 = vpop.f32.mrf.mxu0
        %v3399 = vadd.f32 0.0, %v3398
        %v3400 = vpop.f32.mrf.mxu0
        %v3401 = vpop.f32.mrf.mxu0
        %v3402 = vadd.f32 0.0, %v3401
        %v3403 = vpop.f32.mrf.mxu0
        %3404 = vdwg.mxu0
        %v3405 = vadd.f32 %v3263, %v3375
        %v3406 = vadd.f32 %v3264, %v3378
        %v3407 = vadd.f32 %v3265, %v3383
        %v3408 = vadd.f32 %v3266, %v3386
        %v3409 = vadd.f32 %v3267, %v3391
        %v3410 = vadd.f32 %v3268, %v3394
        %v3411 = vadd.f32 %v3269, %v3399
        %v3412 = vadd.f32 %v3270, %v3402
        %3413 = vrot.lane.b32.xlu0 %v2593, 121
        %v3414 = vpop.permute.xlu0 %3413
        %3415 = vrot.lane.b32.xlu0 %v2594, 121
        %v3416 = vpop.permute.xlu0 %3415
        %3417 = vrot.lane.b32.xlu0 %v2595, 121
        %v3418 = vpop.permute.xlu0 %3417
        %3419 = vrot.lane.b32.xlu0 %v2596, 121
        %v3420 = vpop.permute.xlu0 %3419
        %3421 = vrot.lane.b32.xlu0 %v2597, 121
        %v3422 = vpop.permute.xlu0 %3421
        %3423 = vrot.lane.b32.xlu0 %v2598, 121
        %v3424 = vpop.permute.xlu0 %3423
        %3425 = vrot.lane.b32.xlu0 %v2599, 121
        %v3426 = vpop.permute.xlu0 %3425
        %3427 = vrot.lane.b32.xlu0 %v2600, 121
        %v3428 = vpop.permute.xlu0 %3427
        %v3429 = vmul.f32 %v3414, %v1846
        %v3430 = vmul.f32 %v3416, %v1846
        %v3431 = vmul.f32 %v3418, %v1846
        %v3432 = vmul.f32 %v3420, %v1846
        %v3433 = vmul.f32 %v3422, %v1846
        %v3434 = vmul.f32 %v3424, %v1846
        %v3435 = vmul.f32 %v3426, %v1846
        %v3436 = vmul.f32 %v3428, %v1846
        %s3437 = scalar_lea.vmem %s5, 192
        %v3438 = vld [vmem:[%s3437] sm:$0xf]
        %v3439 = vld [vmem:[%s3437 + $0x4] sm:$0xf]
        %v3440 = vld [vmem:[%s3437 + $0x8] sm:$0xf]
        %v3441 = vld [vmem:[%s3437 + $0xc] sm:$0xf]
        %v3442 = vld [vmem:[%s3437 + $0x10] sm:$0xf]
        %v3443 = vld [vmem:[%s3437 + $0x14] sm:$0xf]
        %v3444 = vld [vmem:[%s3437 + $0x18] sm:$0xf]
        %v3445 = vld [vmem:[%s3437 + $0x1c] sm:$0xf]
        %v3446 = vpack.c.bf16 %v3430, %v3429
        %v3447 = vpack.c.bf16 %v3432, %v3431
        %v3448 = vpack.c.bf16 %v3434, %v3433
        %v3449 = vpack.c.bf16 %v3436, %v3435
        %v3458 = vunpack.c.l.b16 %v3438
        %v3459 = vunpack.c.l.b16 %v3439
        %v3460 = vunpack.c.l.b16 %v3440
        %v3461 = vunpack.c.l.b16 %v3441
        %v3462 = vunpack.c.l.b16 %v3442
        %v3463 = vunpack.c.l.b16 %v3443
        %v3464 = vunpack.c.l.b16 %v3444
        %v3465 = vunpack.c.l.b16 %v3445
        %v3466 = vpack.c.b16 %v3459, %v3458
        %v3467 = vpack.c.b16 %v3461, %v3460
        %v3468 = vpack.c.b16 %v3463, %v3462
        %v3469 = vpack.c.b16 %v3465, %v3464
        %v3471 = vsel %vm2694, %v3466, 0
        %v3474 = vsel %vm2694, %v3467, 0
        %v3477 = vsel %vm2694, %v3468, 0
        %v3480 = vsel %vm2694, %v3469, 0
        %3482 = vmatprep.subr.bf16.mxu0 0
        %3483 = vmatpush1.bf16.msra.mxu0 0
        %3484 = vmatprep.subr.bf16.mxu0 0
        %3485 = vmatpush1.bf16.msra.mxu0 0
        %3486 = vmatprep.subr.bf16.mxu0 0
        %3487 = vmatpush1.bf16.msra.mxu0 0
        %3488 = vmatprep.subr.bf16.mxu0 0
        %3489 = vmatpush1.bf16.msra.mxu0 0
        %3490 = vmatprep.subr.bf16.mxu0 0
        %3491 = vmatpush1.bf16.msra.mxu0 %v3449
        %3492 = vmatprep.subr.bf16.mxu0 0
        %3493 = vmatpush1.bf16.msra.mxu0 %v3448
        %3494 = vmatprep.subr.bf16.mxu0 0
        %3495 = vmatpush1.bf16.msra.mxu0 %v3447
        %3496 = vmatprep.subr.bf16.mxu0 0
        %3497 = vmatpush1.bf16.msra.mxu0 %v3446
        %3498 = vmatprep.subr.bf16.mxu0 0
        %3499 = vmatpush2.bf16.msra.mxu0 0
        %3500 = vmatprep.subr.bf16.mxu0 0
        %3501 = vmatpush2.bf16.msra.mxu0 0
        %3502 = vmatprep.subr.bf16.mxu0 0
        %3503 = vmatpush2.bf16.msra.mxu0 0
        %3504 = vmatprep.subr.bf16.mxu0 0
        %3505 = vmatpush2.bf16.msra.mxu0 0
        %3506 = vmatprep.subr.bf16.mxu0 0
        %3507 = vmatpush2.bf16.msra.mxu0 0
        %3508 = vmatprep.subr.bf16.mxu0 0
        %3509 = vmatpush2.bf16.msra.mxu0 0
        %3510 = vmatprep.subr.bf16.mxu0 0
        %3511 = vmatpush2.bf16.msra.mxu0 0
        %3512 = vmatprep.subr.bf16.mxu0 0
        %3513 = vmatpush2.bf16.msra.mxu0 0
        %3514 = vmatprep.mubr.bf16.mxu0 0
        %3515 = vmatmul.mubr.bf16.gmra.mxu0 %v3471
        %v3516 = vpop.f32.mrf.mxu0
        %v3517 = vadd.f32 0.0, %v3516
        %v3518 = vpop.f32.mrf.mxu0
        %v3519 = vpop.f32.mrf.mxu0
        %v3520 = vadd.f32 0.0, %v3519
        %v3521 = vpop.f32.mrf.mxu0
        %3522 = vmatprep.mubr.bf16.mxu0 0
        %3523 = vmatmul.mubr.bf16.gmra.mxu0 %v3474
        %v3524 = vpop.f32.mrf.mxu0
        %v3525 = vadd.f32 0.0, %v3524
        %v3526 = vpop.f32.mrf.mxu0
        %v3527 = vpop.f32.mrf.mxu0
        %v3528 = vadd.f32 0.0, %v3527
        %v3529 = vpop.f32.mrf.mxu0
        %3530 = vmatprep.mubr.bf16.mxu0 0
        %3531 = vmatmul.mubr.bf16.gmra.mxu0 %v3477
        %v3532 = vpop.f32.mrf.mxu0
        %v3533 = vadd.f32 0.0, %v3532
        %v3534 = vpop.f32.mrf.mxu0
        %v3535 = vpop.f32.mrf.mxu0
        %v3536 = vadd.f32 0.0, %v3535
        %v3537 = vpop.f32.mrf.mxu0
        %3538 = vmatprep.mubr.bf16.mxu0 0
        %3539 = vmatmul.mubr.bf16.gmra.mxu0 %v3480
        %v3540 = vpop.f32.mrf.mxu0
        %v3541 = vadd.f32 0.0, %v3540
        %v3542 = vpop.f32.mrf.mxu0
        %v3543 = vpop.f32.mrf.mxu0
        %v3544 = vadd.f32 0.0, %v3543
        %v3545 = vpop.f32.mrf.mxu0
        %3546 = vdwg.mxu0
        %v3547 = vadd.f32 %v3405, %v3517
        %v3548 = vadd.f32 %v3406, %v3520
        %v3549 = vadd.f32 %v3407, %v3525
        %v3550 = vadd.f32 %v3408, %v3528
        %v3551 = vadd.f32 %v3409, %v3533
        %v3552 = vadd.f32 %v3410, %v3536
        %v3553 = vadd.f32 %v3411, %v3541
        %v3554 = vadd.f32 %v3412, %v3544
        %3555 = vrot.lane.b32.xlu0 %v2593, 120
        %v3556 = vpop.permute.xlu0 %3555
        %3557 = vrot.lane.b32.xlu0 %v2594, 120
        %v3558 = vpop.permute.xlu0 %3557
        %3559 = vrot.lane.b32.xlu0 %v2595, 120
        %v3560 = vpop.permute.xlu0 %3559
        %3561 = vrot.lane.b32.xlu0 %v2596, 120
        %v3562 = vpop.permute.xlu0 %3561
        %3563 = vrot.lane.b32.xlu0 %v2597, 120
        %v3564 = vpop.permute.xlu0 %3563
        %3565 = vrot.lane.b32.xlu0 %v2598, 120
        %v3566 = vpop.permute.xlu0 %3565
        %3567 = vrot.lane.b32.xlu0 %v2599, 120
        %v3568 = vpop.permute.xlu0 %3567
        %3569 = vrot.lane.b32.xlu0 %v2600, 120
        %v3570 = vpop.permute.xlu0 %3569
        %v3571 = vmul.f32 %v3556, %v2073
        %v3572 = vmul.f32 %v3558, %v2073
        %v3573 = vmul.f32 %v3560, %v2073
        %v3574 = vmul.f32 %v3562, %v2073
        %v3575 = vmul.f32 %v3564, %v2073
        %v3576 = vmul.f32 %v3566, %v2073
        %v3577 = vmul.f32 %v3568, %v2073
        %v3578 = vmul.f32 %v3570, %v2073
        %s3579 = scalar_lea.vmem %s5, 224
        %v3580 = vld [vmem:[%s3579] sm:$0xf]
        %v3581 = vld [vmem:[%s3579 + $0x4] sm:$0xf]
        %v3582 = vld [vmem:[%s3579 + $0x8] sm:$0xf]
        %v3583 = vld [vmem:[%s3579 + $0xc] sm:$0xf]
        %v3584 = vld [vmem:[%s3579 + $0x10] sm:$0xf]
        %v3585 = vld [vmem:[%s3579 + $0x14] sm:$0xf]
        %v3586 = vld [vmem:[%s3579 + $0x18] sm:$0xf]
        %v3587 = vld [vmem:[%s3579 + $0x1c] sm:$0xf]
        %v3588 = vpack.c.bf16 %v3572, %v3571
        %v3589 = vpack.c.bf16 %v3574, %v3573
        %v3590 = vpack.c.bf16 %v3576, %v3575
        %v3591 = vpack.c.bf16 %v3578, %v3577
        %v3600 = vunpack.c.l.b16 %v3580
        %v3601 = vunpack.c.l.b16 %v3581
        %v3602 = vunpack.c.l.b16 %v3582
        %v3603 = vunpack.c.l.b16 %v3583
        %v3604 = vunpack.c.l.b16 %v3584
        %v3605 = vunpack.c.l.b16 %v3585
        %v3606 = vunpack.c.l.b16 %v3586
        %v3607 = vunpack.c.l.b16 %v3587
        %v3608 = vpack.c.b16 %v3601, %v3600
        %v3609 = vpack.c.b16 %v3603, %v3602
        %v3610 = vpack.c.b16 %v3605, %v3604
        %v3611 = vpack.c.b16 %v3607, %v3606
        %v3613 = vsel %vm2694, %v3608, 0
        %v3616 = vsel %vm2694, %v3609, 0
        %v3619 = vsel %vm2694, %v3610, 0
        %v3622 = vsel %vm2694, %v3611, 0
        %3624 = vmatprep.subr.bf16.mxu0 0
        %3625 = vmatpush1.bf16.msra.mxu0 0
        %3626 = vmatprep.subr.bf16.mxu0 0
        %3627 = vmatpush1.bf16.msra.mxu0 0
        %3628 = vmatprep.subr.bf16.mxu0 0
        %3629 = vmatpush1.bf16.msra.mxu0 0
        %3630 = vmatprep.subr.bf16.mxu0 0
        %3631 = vmatpush1.bf16.msra.mxu0 0
        %3632 = vmatprep.subr.bf16.mxu0 0
        %3633 = vmatpush1.bf16.msra.mxu0 %v3591
        %3634 = vmatprep.subr.bf16.mxu0 0
        %3635 = vmatpush1.bf16.msra.mxu0 %v3590
        %3636 = vmatprep.subr.bf16.mxu0 0
        %3637 = vmatpush1.bf16.msra.mxu0 %v3589
        %3638 = vmatprep.subr.bf16.mxu0 0
        %3639 = vmatpush1.bf16.msra.mxu0 %v3588
        %3640 = vmatprep.subr.bf16.mxu0 0
        %3641 = vmatpush2.bf16.msra.mxu0 0
        %3642 = vmatprep.subr.bf16.mxu0 0
        %3643 = vmatpush2.bf16.msra.mxu0 0
        %3644 = vmatprep.subr.bf16.mxu0 0
        %3645 = vmatpush2.bf16.msra.mxu0 0
        %3646 = vmatprep.subr.bf16.mxu0 0
        %3647 = vmatpush2.bf16.msra.mxu0 0
        %3648 = vmatprep.subr.bf16.mxu0 0
        %3649 = vmatpush2.bf16.msra.mxu0 0
        %3650 = vmatprep.subr.bf16.mxu0 0
        %3651 = vmatpush2.bf16.msra.mxu0 0
        %3652 = vmatprep.subr.bf16.mxu0 0
        %3653 = vmatpush2.bf16.msra.mxu0 0
        %3654 = vmatprep.subr.bf16.mxu0 0
        %3655 = vmatpush2.bf16.msra.mxu0 0
        %3656 = vmatprep.mubr.bf16.mxu0 0
        %3657 = vmatmul.mubr.bf16.gmra.mxu0 %v3613
        %v3658 = vpop.f32.mrf.mxu0
        %v3659 = vadd.f32 0.0, %v3658
        %v3660 = vpop.f32.mrf.mxu0
        %v3661 = vpop.f32.mrf.mxu0
        %v3662 = vadd.f32 0.0, %v3661
        %v3663 = vpop.f32.mrf.mxu0
        %3664 = vmatprep.mubr.bf16.mxu0 0
        %3665 = vmatmul.mubr.bf16.gmra.mxu0 %v3616
        %v3666 = vpop.f32.mrf.mxu0
        %v3667 = vadd.f32 0.0, %v3666
        %v3668 = vpop.f32.mrf.mxu0
        %v3669 = vpop.f32.mrf.mxu0
        %v3670 = vadd.f32 0.0, %v3669
        %v3671 = vpop.f32.mrf.mxu0
        %3672 = vmatprep.mubr.bf16.mxu0 0
        %3673 = vmatmul.mubr.bf16.gmra.mxu0 %v3619
        %v3674 = vpop.f32.mrf.mxu0
        %v3675 = vadd.f32 0.0, %v3674
        %v3676 = vpop.f32.mrf.mxu0
        %v3677 = vpop.f32.mrf.mxu0
        %v3678 = vadd.f32 0.0, %v3677
        %v3679 = vpop.f32.mrf.mxu0
        %3680 = vmatprep.mubr.bf16.mxu0 0
        %3681 = vmatmul.mubr.bf16.gmra.mxu0 %v3622
        %v3682 = vpop.f32.mrf.mxu0
        %v3683 = vadd.f32 0.0, %v3682
        %v3684 = vpop.f32.mrf.mxu0
        %v3685 = vpop.f32.mrf.mxu0
        %v3686 = vadd.f32 0.0, %v3685
        %v3687 = vpop.f32.mrf.mxu0
        %3688 = vdwg.mxu0
        %v3689 = vadd.f32 %v3547, %v3659
        %v3690 = vadd.f32 %v3548, %v3662
        %v3691 = vadd.f32 %v3549, %v3667
        %v3692 = vadd.f32 %v3550, %v3670
        %v3693 = vadd.f32 %v3551, %v3675
        %v3694 = vadd.f32 %v3552, %v3678
        %v3695 = vadd.f32 %v3553, %v3683
        %v3696 = vadd.f32 %v3554, %v3686
        %3697 = vrot.lane.b32.xlu0 %v2593, 119
        %v3698 = vpop.permute.xlu0 %3697
        %3699 = vrot.lane.b32.xlu0 %v2594, 119
        %v3700 = vpop.permute.xlu0 %3699
        %3701 = vrot.lane.b32.xlu0 %v2595, 119
        %v3702 = vpop.permute.xlu0 %3701
        %3703 = vrot.lane.b32.xlu0 %v2596, 119
        %v3704 = vpop.permute.xlu0 %3703
        %3705 = vrot.lane.b32.xlu0 %v2597, 119
        %v3706 = vpop.permute.xlu0 %3705
        %3707 = vrot.lane.b32.xlu0 %v2598, 119
        %v3708 = vpop.permute.xlu0 %3707
        %3709 = vrot.lane.b32.xlu0 %v2599, 119
        %v3710 = vpop.permute.xlu0 %3709
        %3711 = vrot.lane.b32.xlu0 %v2600, 119
        %v3712 = vpop.permute.xlu0 %3711
        %v3713 = vmul.f32 %v3698, %v2300
        %v3714 = vmul.f32 %v3700, %v2300
        %v3715 = vmul.f32 %v3702, %v2300
        %v3716 = vmul.f32 %v3704, %v2300
        %v3717 = vmul.f32 %v3706, %v2300
        %v3718 = vmul.f32 %v3708, %v2300
        %v3719 = vmul.f32 %v3710, %v2300
        %v3720 = vmul.f32 %v3712, %v2300
        %s3721 = scalar_lea.vmem %s5, 256
        %v3722 = vld [vmem:[%s3721] sm:$0xf]
        %v3723 = vld [vmem:[%s3721 + $0x4] sm:$0xf]
        %v3724 = vld [vmem:[%s3721 + $0x8] sm:$0xf]
        %v3725 = vld [vmem:[%s3721 + $0xc] sm:$0xf]
        %v3726 = vld [vmem:[%s3721 + $0x10] sm:$0xf]
        %v3727 = vld [vmem:[%s3721 + $0x14] sm:$0xf]
        %v3728 = vld [vmem:[%s3721 + $0x18] sm:$0xf]
        %v3729 = vld [vmem:[%s3721 + $0x1c] sm:$0xf]
        %v3730 = vpack.c.bf16 %v3714, %v3713
        %v3731 = vpack.c.bf16 %v3716, %v3715
        %v3732 = vpack.c.bf16 %v3718, %v3717
        %v3733 = vpack.c.bf16 %v3720, %v3719
        %v3742 = vunpack.c.l.b16 %v3722
        %v3743 = vunpack.c.l.b16 %v3723
        %v3744 = vunpack.c.l.b16 %v3724
        %v3745 = vunpack.c.l.b16 %v3725
        %v3746 = vunpack.c.l.b16 %v3726
        %v3747 = vunpack.c.l.b16 %v3727
        %v3748 = vunpack.c.l.b16 %v3728
        %v3749 = vunpack.c.l.b16 %v3729
        %v3750 = vpack.c.b16 %v3743, %v3742
        %v3751 = vpack.c.b16 %v3745, %v3744
        %v3752 = vpack.c.b16 %v3747, %v3746
        %v3753 = vpack.c.b16 %v3749, %v3748
        %v3755 = vsel %vm2694, %v3750, 0
        %v3758 = vsel %vm2694, %v3751, 0
        %v3761 = vsel %vm2694, %v3752, 0
        %v3764 = vsel %vm2694, %v3753, 0
        %3766 = vmatprep.subr.bf16.mxu0 0
        %3767 = vmatpush1.bf16.msra.mxu0 0
        %3768 = vmatprep.subr.bf16.mxu0 0
        %3769 = vmatpush1.bf16.msra.mxu0 0
        %3770 = vmatprep.subr.bf16.mxu0 0
        %3771 = vmatpush1.bf16.msra.mxu0 0
        %3772 = vmatprep.subr.bf16.mxu0 0
        %3773 = vmatpush1.bf16.msra.mxu0 0
        %3774 = vmatprep.subr.bf16.mxu0 0
        %3775 = vmatpush1.bf16.msra.mxu0 %v3733
        %3776 = vmatprep.subr.bf16.mxu0 0
        %3777 = vmatpush1.bf16.msra.mxu0 %v3732
        %3778 = vmatprep.subr.bf16.mxu0 0
        %3779 = vmatpush1.bf16.msra.mxu0 %v3731
        %3780 = vmatprep.subr.bf16.mxu0 0
        %3781 = vmatpush1.bf16.msra.mxu0 %v3730
        %3782 = vmatprep.subr.bf16.mxu0 0
        %3783 = vmatpush2.bf16.msra.mxu0 0
        %3784 = vmatprep.subr.bf16.mxu0 0
        %3785 = vmatpush2.bf16.msra.mxu0 0
        %3786 = vmatprep.subr.bf16.mxu0 0
        %3787 = vmatpush2.bf16.msra.mxu0 0
        %3788 = vmatprep.subr.bf16.mxu0 0
        %3789 = vmatpush2.bf16.msra.mxu0 0
        %3790 = vmatprep.subr.bf16.mxu0 0
        %3791 = vmatpush2.bf16.msra.mxu0 0
        %3792 = vmatprep.subr.bf16.mxu0 0
        %3793 = vmatpush2.bf16.msra.mxu0 0
        %3794 = vmatprep.subr.bf16.mxu0 0
        %3795 = vmatpush2.bf16.msra.mxu0 0
        %3796 = vmatprep.subr.bf16.mxu0 0
        %3797 = vmatpush2.bf16.msra.mxu0 0
        %3798 = vmatprep.mubr.bf16.mxu0 0
        %3799 = vmatmul.mubr.bf16.gmra.mxu0 %v3755
        %v3800 = vpop.f32.mrf.mxu0
        %v3801 = vadd.f32 0.0, %v3800
        %v3802 = vpop.f32.mrf.mxu0
        %v3803 = vpop.f32.mrf.mxu0
        %v3804 = vadd.f32 0.0, %v3803
        %v3805 = vpop.f32.mrf.mxu0
        %3806 = vmatprep.mubr.bf16.mxu0 0
        %3807 = vmatmul.mubr.bf16.gmra.mxu0 %v3758
        %v3808 = vpop.f32.mrf.mxu0
        %v3809 = vadd.f32 0.0, %v3808
        %v3810 = vpop.f32.mrf.mxu0
        %v3811 = vpop.f32.mrf.mxu0
        %v3812 = vadd.f32 0.0, %v3811
        %v3813 = vpop.f32.mrf.mxu0
        %3814 = vmatprep.mubr.bf16.mxu0 0
        %3815 = vmatmul.mubr.bf16.gmra.mxu0 %v3761
        %v3816 = vpop.f32.mrf.mxu0
        %v3817 = vadd.f32 0.0, %v3816
        %v3818 = vpop.f32.mrf.mxu0
        %v3819 = vpop.f32.mrf.mxu0
        %v3820 = vadd.f32 0.0, %v3819
        %v3821 = vpop.f32.mrf.mxu0
        %3822 = vmatprep.mubr.bf16.mxu0 0
        %3823 = vmatmul.mubr.bf16.gmra.mxu0 %v3764
        %v3824 = vpop.f32.mrf.mxu0
        %v3825 = vadd.f32 0.0, %v3824
        %v3826 = vpop.f32.mrf.mxu0
        %v3827 = vpop.f32.mrf.mxu0
        %v3828 = vadd.f32 0.0, %v3827
        %v3829 = vpop.f32.mrf.mxu0
        %3830 = vdwg.mxu0
        %v3831 = vadd.f32 %v3689, %v3801
        %v3832 = vadd.f32 %v3690, %v3804
        %v3833 = vadd.f32 %v3691, %v3809
        %v3834 = vadd.f32 %v3692, %v3812
        %v3835 = vadd.f32 %v3693, %v3817
        %v3836 = vadd.f32 %v3694, %v3820
        %v3837 = vadd.f32 %v3695, %v3825
        %v3838 = vadd.f32 %v3696, %v3828
        %v3839 = vld [vmem:[%s6] sm:$0xff]
        %v3840 = vld [vmem:[%s6 + $0x8] sm:$0xff]
        %v3841 = vld [vmem:[%s6 + $0x10] sm:$0xff]
        %v3842 = vld [vmem:[%s6 + $0x18] sm:$0xff]
        %v3843 = vld [vmem:[%s6 + $0x20] sm:$0xff]
        %v3844 = vld [vmem:[%s6 + $0x28] sm:$0xff]
        %v3845 = vld [vmem:[%s6 + $0x30] sm:$0xff]
        %v3846 = vld [vmem:[%s6 + $0x38] sm:$0xff]
        %3848 = vset.pattern.permute.xlu0 0
        %3849 = vperm.xlu0 %3848, %v3839
        %v3850 = vpop.permute.xlu0 %3849
        %3853 = vset.pattern.permute.xlu0 0
        %3854 = vperm.xlu0 %3853, %v3840
        %v3855 = vpop.permute.xlu0 %3854
        %3858 = vset.pattern.permute.xlu0 0
        %3859 = vperm.xlu0 %3858, %v3841
        %v3860 = vpop.permute.xlu0 %3859
        %3863 = vset.pattern.permute.xlu0 0
        %3864 = vperm.xlu0 %3863, %v3842
        %v3865 = vpop.permute.xlu0 %3864
        %3868 = vset.pattern.permute.xlu0 0
        %3869 = vperm.xlu0 %3868, %v3843
        %v3870 = vpop.permute.xlu0 %3869
        %3873 = vset.pattern.permute.xlu0 0
        %3874 = vperm.xlu0 %3873, %v3844
        %v3875 = vpop.permute.xlu0 %3874
        %3878 = vset.pattern.permute.xlu0 0
        %3879 = vperm.xlu0 %3878, %v3845
        %v3880 = vpop.permute.xlu0 %3879
        %3883 = vset.pattern.permute.xlu0 0
        %3884 = vperm.xlu0 %3883, %v3846
        %v3885 = vpop.permute.xlu0 %3884
        %v3887 = vmul.f32 %v3831, %v3850
        %v3888 = vmul.f32 %v3832, %v3855
        %v3889 = vmul.f32 %v3833, %v3860
        %v3890 = vmul.f32 %v3834, %v3865
        %v3891 = vmul.f32 %v3835, %v3870
        %v3892 = vmul.f32 %v3836, %v3875
        %v3893 = vmul.f32 %v3837, %v3880
        %v3894 = vmul.f32 %v3838, %v3885
        %v3895 = vld [vmem:[%s7] sm:$0xff]
        %v3896 = vld [vmem:[%s7 + $0x8] sm:$0xff]
        %v3897 = vld [vmem:[%s7 + $0x10] sm:$0xff]
        %v3898 = vld [vmem:[%s7 + $0x18] sm:$0xff]
        %v3899 = vld [vmem:[%s7 + $0x20] sm:$0xff]
        %v3900 = vld [vmem:[%s7 + $0x28] sm:$0xff]
        %v3901 = vld [vmem:[%s7 + $0x30] sm:$0xff]
        %v3902 = vld [vmem:[%s7 + $0x38] sm:$0xff]
        %3904 = vset.pattern.permute.xlu0 0
        %3905 = vperm.xlu0 %3904, %v3895
        %v3906 = vpop.permute.xlu0 %3905
        %3909 = vset.pattern.permute.xlu0 0
        %3910 = vperm.xlu0 %3909, %v3896
        %v3911 = vpop.permute.xlu0 %3910
        %3914 = vset.pattern.permute.xlu0 0
        %3915 = vperm.xlu0 %3914, %v3897
        %v3916 = vpop.permute.xlu0 %3915
        %3919 = vset.pattern.permute.xlu0 0
        %3920 = vperm.xlu0 %3919, %v3898
        %v3921 = vpop.permute.xlu0 %3920
        %3924 = vset.pattern.permute.xlu0 0
        %3925 = vperm.xlu0 %3924, %v3899
        %v3926 = vpop.permute.xlu0 %3925
        %3929 = vset.pattern.permute.xlu0 0
        %3930 = vperm.xlu0 %3929, %v3900
        %v3931 = vpop.permute.xlu0 %3930
        %3934 = vset.pattern.permute.xlu0 0
        %3935 = vperm.xlu0 %3934, %v3901
        %v3936 = vpop.permute.xlu0 %3935
        %3939 = vset.pattern.permute.xlu0 0
        %3940 = vperm.xlu0 %3939, %v3902
        %v3941 = vpop.permute.xlu0 %3940
        %v3943 = vadd.f32 %v3887, %v3906
        %v3944 = vadd.f32 %v3888, %v3911
        %v3945 = vadd.f32 %v3889, %v3916
        %v3946 = vadd.f32 %v3890, %v3921
        %v3947 = vadd.f32 %v3891, %v3926
        %v3948 = vadd.f32 %v3892, %v3931
        %v3949 = vadd.f32 %v3893, %v3936
        %v3950 = vadd.f32 %v3894, %v3941
        %3951 = vst [vmem:[#allocation2] sm:$0xff] %v3943
        %3952 = vst [vmem:[#allocation2 + $0x8] sm:$0xff] %v3944
        %3953 = vst [vmem:[#allocation2 + $0x10] sm:$0xff] %v3945
        %3954 = vst [vmem:[#allocation2 + $0x18] sm:$0xff] %v3946
        %3955 = vst [vmem:[#allocation2 + $0x20] sm:$0xff] %v3947
        %3956 = vst [vmem:[#allocation2 + $0x28] sm:$0xff] %v3948
        %3957 = vst [vmem:[#allocation2 + $0x30] sm:$0xff] %v3949
        %3958 = vst [vmem:[#allocation2 + $0x38] sm:$0xff] %v3950
        %v3959 = vld [vmem:[#allocation2] sm:$0xff]
        %v3960 = vld [vmem:[#allocation2 + $0x8] sm:$0xff]
        %v3961 = vld [vmem:[#allocation2 + $0x10] sm:$0xff]
        %v3962 = vld [vmem:[#allocation2 + $0x18] sm:$0xff]
        %v3963 = vld [vmem:[#allocation2 + $0x20] sm:$0xff]
        %v3964 = vld [vmem:[#allocation2 + $0x28] sm:$0xff]
        %v3965 = vld [vmem:[#allocation2 + $0x30] sm:$0xff]
        %v3966 = vld [vmem:[#allocation2 + $0x38] sm:$0xff]
        %3967 = vrot.lane.b32.xlu0 %v3959, 9
        %v3968 = vpop.permute.xlu0 %3967
        %3969 = vrot.lane.b32.xlu0 %v3960, 9
        %v3970 = vpop.permute.xlu0 %3969
        %3971 = vrot.lane.b32.xlu0 %v3961, 9
        %v3972 = vpop.permute.xlu0 %3971
        %3973 = vrot.lane.b32.xlu0 %v3962, 9
        %v3974 = vpop.permute.xlu0 %3973
        %3975 = vrot.lane.b32.xlu0 %v3963, 9
        %v3976 = vpop.permute.xlu0 %3975
        %3977 = vrot.lane.b32.xlu0 %v3964, 9
        %v3978 = vpop.permute.xlu0 %3977
        %3979 = vrot.lane.b32.xlu0 %v3965, 9
        %v3980 = vpop.permute.xlu0 %3979
        %3981 = vrot.lane.b32.xlu0 %v3966, 9
        %v3982 = vpop.permute.xlu0 %3981
        %v3983 = vmul.f32 %v3968, %v580
        %v3984 = vmul.f32 %v3970, %v580
        %v3985 = vmul.f32 %v3972, %v580
        %v3986 = vmul.f32 %v3974, %v580
        %v3987 = vmul.f32 %v3976, %v580
        %v3988 = vmul.f32 %v3978, %v580
        %v3989 = vmul.f32 %v3980, %v580
        %v3990 = vmul.f32 %v3982, %v580
        %v3991 = vld [vmem:[%s8] sm:$0xf]
        %v3992 = vld [vmem:[%s8 + $0x4] sm:$0xf]
        %v3993 = vld [vmem:[%s8 + $0x8] sm:$0xf]
        %v3994 = vld [vmem:[%s8 + $0xc] sm:$0xf]
        %v3995 = vld [vmem:[%s8 + $0x10] sm:$0xf]
        %v3996 = vld [vmem:[%s8 + $0x14] sm:$0xf]
        %v3997 = vld [vmem:[%s8 + $0x18] sm:$0xf]
        %v3998 = vld [vmem:[%s8 + $0x1c] sm:$0xf]
        %v3999 = vpack.c.bf16 %v3984, %v3983
        %v4000 = vpack.c.bf16 %v3986, %v3985
        %v4001 = vpack.c.bf16 %v3988, %v3987
        %v4002 = vpack.c.bf16 %v3990, %v3989
        %4003 = vrot.lane.b32.xlu0 %v3959, 8
        %v4004 = vpop.permute.xlu0 %4003
        %4005 = vrot.lane.b32.xlu0 %v3960, 8
        %v4006 = vpop.permute.xlu0 %4005
        %4007 = vrot.lane.b32.xlu0 %v3961, 8
        %v4008 = vpop.permute.xlu0 %4007
        %4009 = vrot.lane.b32.xlu0 %v3962, 8
        %v4010 = vpop.permute.xlu0 %4009
        %4011 = vrot.lane.b32.xlu0 %v3963, 8
        %v4012 = vpop.permute.xlu0 %4011
        %4013 = vrot.lane.b32.xlu0 %v3964, 8
        %v4014 = vpop.permute.xlu0 %4013
        %4015 = vrot.lane.b32.xlu0 %v3965, 8
        %v4016 = vpop.permute.xlu0 %4015
        %4017 = vrot.lane.b32.xlu0 %v3966, 8
        %v4018 = vpop.permute.xlu0 %4017
        %v4019 = vmul.f32 %v4004, %v682
        %v4020 = vmul.f32 %v4006, %v682
        %v4021 = vmul.f32 %v4008, %v682
        %v4022 = vmul.f32 %v4010, %v682
        %v4023 = vmul.f32 %v4012, %v682
        %v4024 = vmul.f32 %v4014, %v682
        %v4025 = vmul.f32 %v4016, %v682
        %v4026 = vmul.f32 %v4018, %v682
        %s4027 = scalar_lea.vmem %s8, 32
        %v4028 = vld [vmem:[%s4027] sm:$0xf]
        %v4029 = vld [vmem:[%s4027 + $0x4] sm:$0xf]
        %v4030 = vld [vmem:[%s4027 + $0x8] sm:$0xf]
        %v4031 = vld [vmem:[%s4027 + $0xc] sm:$0xf]
        %v4032 = vld [vmem:[%s4027 + $0x10] sm:$0xf]
        %v4033 = vld [vmem:[%s4027 + $0x14] sm:$0xf]
        %v4034 = vld [vmem:[%s4027 + $0x18] sm:$0xf]
        %v4035 = vld [vmem:[%s4027 + $0x1c] sm:$0xf]
        %v4036 = vpack.c.bf16 %v4020, %v4019
        %v4037 = vpack.c.bf16 %v4022, %v4021
        %v4038 = vpack.c.bf16 %v4024, %v4023
        %v4039 = vpack.c.bf16 %v4026, %v4025
        %v4048 = vunpack.c.l.b16 %v4028
        %v4049 = vunpack.c.l.b16 %v4029
        %v4050 = vunpack.c.l.b16 %v4030
        %v4051 = vunpack.c.l.b16 %v4031
        %v4052 = vunpack.c.l.b16 %v4032
        %v4053 = vunpack.c.l.b16 %v4033
        %v4054 = vunpack.c.l.b16 %v4034
        %v4055 = vunpack.c.l.b16 %v4035
        %v4056 = vpack.c.b16 %v4049, %v4048
        %v4057 = vpack.c.b16 %v4051, %v4050
        %v4058 = vpack.c.b16 %v4053, %v4052
        %v4059 = vpack.c.b16 %v4055, %v4054
        %v4061 = vsel %vm2694, %v4056, 0
        %v4064 = vsel %vm2694, %v4057, 0
        %v4067 = vsel %vm2694, %v4058, 0
        %v4070 = vsel %vm2694, %v4059, 0
        %4072 = vmatprep.subr.bf16.mxu0 0
        %4073 = vmatpush1.bf16.msra.mxu0 0
        %4074 = vmatprep.subr.bf16.mxu0 0
        %4075 = vmatpush1.bf16.msra.mxu0 0
        %4076 = vmatprep.subr.bf16.mxu0 0
        %4077 = vmatpush1.bf16.msra.mxu0 0
        %4078 = vmatprep.subr.bf16.mxu0 0
        %4079 = vmatpush1.bf16.msra.mxu0 0
        %4080 = vmatprep.subr.bf16.mxu0 0
        %4081 = vmatpush1.bf16.msra.mxu0 %v4039
        %4082 = vmatprep.subr.bf16.mxu0 0
        %4083 = vmatpush1.bf16.msra.mxu0 %v4038
        %4084 = vmatprep.subr.bf16.mxu0 0
        %4085 = vmatpush1.bf16.msra.mxu0 %v4037
        %4086 = vmatprep.subr.bf16.mxu0 0
        %4087 = vmatpush1.bf16.msra.mxu0 %v4036
        %4088 = vmatprep.subr.bf16.mxu0 0
        %4089 = vmatpush2.bf16.msra.mxu0 0
        %4090 = vmatprep.subr.bf16.mxu0 0
        %4091 = vmatpush2.bf16.msra.mxu0 0
        %4092 = vmatprep.subr.bf16.mxu0 0
        %4093 = vmatpush2.bf16.msra.mxu0 0
        %4094 = vmatprep.subr.bf16.mxu0 0
        %4095 = vmatpush2.bf16.msra.mxu0 0
        %4096 = vmatprep.subr.bf16.mxu0 0
        %4097 = vmatpush2.bf16.msra.mxu0 0
        %4098 = vmatprep.subr.bf16.mxu0 0
        %4099 = vmatpush2.bf16.msra.mxu0 0
        %4100 = vmatprep.subr.bf16.mxu0 0
        %4101 = vmatpush2.bf16.msra.mxu0 0
        %4102 = vmatprep.subr.bf16.mxu0 0
        %4103 = vmatpush2.bf16.msra.mxu0 0
        %4104 = vmatprep.mubr.bf16.mxu0 0
        %4105 = vmatmul.mubr.bf16.gmra.mxu0 %v4061
        %v4106 = vpop.f32.mrf.mxu0
        %v4107 = vadd.f32 0.0, %v4106
        %v4108 = vpop.f32.mrf.mxu0
        %v4109 = vpop.f32.mrf.mxu0
        %v4110 = vadd.f32 0.0, %v4109
        %v4111 = vpop.f32.mrf.mxu0
        %4112 = vmatprep.mubr.bf16.mxu0 0
        %4113 = vmatmul.mubr.bf16.gmra.mxu0 %v4064
        %v4114 = vpop.f32.mrf.mxu0
        %v4115 = vadd.f32 0.0, %v4114
        %v4116 = vpop.f32.mrf.mxu0
        %v4117 = vpop.f32.mrf.mxu0
        %v4118 = vadd.f32 0.0, %v4117
        %v4119 = vpop.f32.mrf.mxu0
        %4120 = vmatprep.mubr.bf16.mxu0 0
        %4121 = vmatmul.mubr.bf16.gmra.mxu0 %v4067
        %v4122 = vpop.f32.mrf.mxu0
        %v4123 = vadd.f32 0.0, %v4122
        %v4124 = vpop.f32.mrf.mxu0
        %v4125 = vpop.f32.mrf.mxu0
        %v4126 = vadd.f32 0.0, %v4125
        %v4127 = vpop.f32.mrf.mxu0
        %4128 = vmatprep.mubr.bf16.mxu0 0
        %4129 = vmatmul.mubr.bf16.gmra.mxu0 %v4070
        %v4130 = vpop.f32.mrf.mxu0
        %v4131 = vadd.f32 0.0, %v4130
        %v4132 = vpop.f32.mrf.mxu0
        %v4133 = vpop.f32.mrf.mxu0
        %v4134 = vadd.f32 0.0, %v4133
        %v4135 = vpop.f32.mrf.mxu0
        %4136 = vdwg.mxu0
        %v4145 = vunpack.c.l.b16 %v3991
        %v4146 = vunpack.c.l.b16 %v3992
        %v4147 = vunpack.c.l.b16 %v3993
        %v4148 = vunpack.c.l.b16 %v3994
        %v4149 = vunpack.c.l.b16 %v3995
        %v4150 = vunpack.c.l.b16 %v3996
        %v4151 = vunpack.c.l.b16 %v3997
        %v4152 = vunpack.c.l.b16 %v3998
        %v4153 = vpack.c.b16 %v4146, %v4145
        %v4154 = vpack.c.b16 %v4148, %v4147
        %v4155 = vpack.c.b16 %v4150, %v4149
        %v4156 = vpack.c.b16 %v4152, %v4151
        %v4158 = vsel %vm2694, %v4153, 0
        %v4161 = vsel %vm2694, %v4154, 0
        %v4164 = vsel %vm2694, %v4155, 0
        %v4167 = vsel %vm2694, %v4156, 0
        %4169 = vmatprep.subr.bf16.mxu0 0
        %4170 = vmatpush1.bf16.msra.mxu0 0
        %4171 = vmatprep.subr.bf16.mxu0 0
        %4172 = vmatpush1.bf16.msra.mxu0 0
        %4173 = vmatprep.subr.bf16.mxu0 0
        %4174 = vmatpush1.bf16.msra.mxu0 0
        %4175 = vmatprep.subr.bf16.mxu0 0
        %4176 = vmatpush1.bf16.msra.mxu0 0
        %4177 = vmatprep.subr.bf16.mxu0 0
        %4178 = vmatpush1.bf16.msra.mxu0 %v4002
        %4179 = vmatprep.subr.bf16.mxu0 0
        %4180 = vmatpush1.bf16.msra.mxu0 %v4001
        %4181 = vmatprep.subr.bf16.mxu0 0
        %4182 = vmatpush1.bf16.msra.mxu0 %v4000
        %4183 = vmatprep.subr.bf16.mxu0 0
        %4184 = vmatpush1.bf16.msra.mxu0 %v3999
        %4185 = vmatprep.subr.bf16.mxu0 0
        %4186 = vmatpush2.bf16.msra.mxu0 0
        %4187 = vmatprep.subr.bf16.mxu0 0
        %4188 = vmatpush2.bf16.msra.mxu0 0
        %4189 = vmatprep.subr.bf16.mxu0 0
        %4190 = vmatpush2.bf16.msra.mxu0 0
        %4191 = vmatprep.subr.bf16.mxu0 0
        %4192 = vmatpush2.bf16.msra.mxu0 0
        %4193 = vmatprep.subr.bf16.mxu0 0
        %4194 = vmatpush2.bf16.msra.mxu0 0
        %4195 = vmatprep.subr.bf16.mxu0 0
        %4196 = vmatpush2.bf16.msra.mxu0 0
        %4197 = vmatprep.subr.bf16.mxu0 0
        %4198 = vmatpush2.bf16.msra.mxu0 0
        %4199 = vmatprep.subr.bf16.mxu0 0
        %4200 = vmatpush2.bf16.msra.mxu0 0
        %4201 = vmatprep.mubr.bf16.mxu0 0
        %4202 = vmatmul.mubr.bf16.gmra.mxu0 %v4158
        %v4203 = vpop.f32.mrf.mxu0
        %v4204 = vadd.f32 %v4107, %v4203
        %v4205 = vpop.f32.mrf.mxu0
        %v4206 = vpop.f32.mrf.mxu0
        %v4207 = vadd.f32 %v4110, %v4206
        %v4208 = vpop.f32.mrf.mxu0
        %4209 = vmatprep.mubr.bf16.mxu0 0
        %4210 = vmatmul.mubr.bf16.gmra.mxu0 %v4161
        %v4211 = vpop.f32.mrf.mxu0
        %v4212 = vadd.f32 %v4115, %v4211
        %v4213 = vpop.f32.mrf.mxu0
        %v4214 = vpop.f32.mrf.mxu0
        %v4215 = vadd.f32 %v4118, %v4214
        %v4216 = vpop.f32.mrf.mxu0
        %4217 = vmatprep.mubr.bf16.mxu0 0
        %4218 = vmatmul.mubr.bf16.gmra.mxu0 %v4164
        %v4219 = vpop.f32.mrf.mxu0
        %v4220 = vadd.f32 %v4123, %v4219
        %v4221 = vpop.f32.mrf.mxu0
        %v4222 = vpop.f32.mrf.mxu0
        %v4223 = vadd.f32 %v4126, %v4222
        %v4224 = vpop.f32.mrf.mxu0
        %4225 = vmatprep.mubr.bf16.mxu0 0
        %4226 = vmatmul.mubr.bf16.gmra.mxu0 %v4167
        %v4227 = vpop.f32.mrf.mxu0
        %v4228 = vadd.f32 %v4131, %v4227
        %v4229 = vpop.f32.mrf.mxu0
        %v4230 = vpop.f32.mrf.mxu0
        %v4231 = vadd.f32 %v4134, %v4230
        %v4232 = vpop.f32.mrf.mxu0
        %4233 = vdwg.mxu0
        %4234 = vrot.lane.b32.xlu0 %v3959, 7
        %v4235 = vpop.permute.xlu0 %4234
        %4236 = vrot.lane.b32.xlu0 %v3960, 7
        %v4237 = vpop.permute.xlu0 %4236
        %4238 = vrot.lane.b32.xlu0 %v3961, 7
        %v4239 = vpop.permute.xlu0 %4238
        %4240 = vrot.lane.b32.xlu0 %v3962, 7
        %v4241 = vpop.permute.xlu0 %4240
        %4242 = vrot.lane.b32.xlu0 %v3963, 7
        %v4243 = vpop.permute.xlu0 %4242
        %4244 = vrot.lane.b32.xlu0 %v3964, 7
        %v4245 = vpop.permute.xlu0 %4244
        %4246 = vrot.lane.b32.xlu0 %v3965, 7
        %v4247 = vpop.permute.xlu0 %4246
        %4248 = vrot.lane.b32.xlu0 %v3966, 7
        %v4249 = vpop.permute.xlu0 %4248
        %v4250 = vmul.f32 %v4235, %v1019
        %v4251 = vmul.f32 %v4237, %v1019
        %v4252 = vmul.f32 %v4239, %v1019
        %v4253 = vmul.f32 %v4241, %v1019
        %v4254 = vmul.f32 %v4243, %v1019
        %v4255 = vmul.f32 %v4245, %v1019
        %v4256 = vmul.f32 %v4247, %v1019
        %v4257 = vmul.f32 %v4249, %v1019
        %s4258 = scalar_lea.vmem %s8, 64
        %v4259 = vld [vmem:[%s4258] sm:$0xf]
        %v4260 = vld [vmem:[%s4258 + $0x4] sm:$0xf]
        %v4261 = vld [vmem:[%s4258 + $0x8] sm:$0xf]
        %v4262 = vld [vmem:[%s4258 + $0xc] sm:$0xf]
        %v4263 = vld [vmem:[%s4258 + $0x10] sm:$0xf]
        %v4264 = vld [vmem:[%s4258 + $0x14] sm:$0xf]
        %v4265 = vld [vmem:[%s4258 + $0x18] sm:$0xf]
        %v4266 = vld [vmem:[%s4258 + $0x1c] sm:$0xf]
        %v4267 = vpack.c.bf16 %v4251, %v4250
        %v4268 = vpack.c.bf16 %v4253, %v4252
        %v4269 = vpack.c.bf16 %v4255, %v4254
        %v4270 = vpack.c.bf16 %v4257, %v4256
        %v4279 = vunpack.c.l.b16 %v4259
        %v4280 = vunpack.c.l.b16 %v4260
        %v4281 = vunpack.c.l.b16 %v4261
        %v4282 = vunpack.c.l.b16 %v4262
        %v4283 = vunpack.c.l.b16 %v4263
        %v4284 = vunpack.c.l.b16 %v4264
        %v4285 = vunpack.c.l.b16 %v4265
        %v4286 = vunpack.c.l.b16 %v4266
        %v4287 = vpack.c.b16 %v4280, %v4279
        %v4288 = vpack.c.b16 %v4282, %v4281
        %v4289 = vpack.c.b16 %v4284, %v4283
        %v4290 = vpack.c.b16 %v4286, %v4285
        %v4292 = vsel %vm2694, %v4287, 0
        %v4295 = vsel %vm2694, %v4288, 0
        %v4298 = vsel %vm2694, %v4289, 0
        %v4301 = vsel %vm2694, %v4290, 0
        %4303 = vmatprep.subr.bf16.mxu0 0
        %4304 = vmatpush1.bf16.msra.mxu0 0
        %4305 = vmatprep.subr.bf16.mxu0 0
        %4306 = vmatpush1.bf16.msra.mxu0 0
        %4307 = vmatprep.subr.bf16.mxu0 0
        %4308 = vmatpush1.bf16.msra.mxu0 0
        %4309 = vmatprep.subr.bf16.mxu0 0
        %4310 = vmatpush1.bf16.msra.mxu0 0
        %4311 = vmatprep.subr.bf16.mxu0 0
        %4312 = vmatpush1.bf16.msra.mxu0 %v4270
        %4313 = vmatprep.subr.bf16.mxu0 0
        %4314 = vmatpush1.bf16.msra.mxu0 %v4269
        %4315 = vmatprep.subr.bf16.mxu0 0
        %4316 = vmatpush1.bf16.msra.mxu0 %v4268
        %4317 = vmatprep.subr.bf16.mxu0 0
        %4318 = vmatpush1.bf16.msra.mxu0 %v4267
        %4319 = vmatprep.subr.bf16.mxu0 0
        %4320 = vmatpush2.bf16.msra.mxu0 0
        %4321 = vmatprep.subr.bf16.mxu0 0
        %4322 = vmatpush2.bf16.msra.mxu0 0
        %4323 = vmatprep.subr.bf16.mxu0 0
        %4324 = vmatpush2.bf16.msra.mxu0 0
        %4325 = vmatprep.subr.bf16.mxu0 0
        %4326 = vmatpush2.bf16.msra.mxu0 0
        %4327 = vmatprep.subr.bf16.mxu0 0
        %4328 = vmatpush2.bf16.msra.mxu0 0
        %4329 = vmatprep.subr.bf16.mxu0 0
        %4330 = vmatpush2.bf16.msra.mxu0 0
        %4331 = vmatprep.subr.bf16.mxu0 0
        %4332 = vmatpush2.bf16.msra.mxu0 0
        %4333 = vmatprep.subr.bf16.mxu0 0
        %4334 = vmatpush2.bf16.msra.mxu0 0
        %4335 = vmatprep.mubr.bf16.mxu0 0
        %4336 = vmatmul.mubr.bf16.gmra.mxu0 %v4292
        %v4337 = vpop.f32.mrf.mxu0
        %v4338 = vadd.f32 0.0, %v4337
        %v4339 = vpop.f32.mrf.mxu0
        %v4340 = vpop.f32.mrf.mxu0
        %v4341 = vadd.f32 0.0, %v4340
        %v4342 = vpop.f32.mrf.mxu0
        %4343 = vmatprep.mubr.bf16.mxu0 0
        %4344 = vmatmul.mubr.bf16.gmra.mxu0 %v4295
        %v4345 = vpop.f32.mrf.mxu0
        %v4346 = vadd.f32 0.0, %v4345
        %v4347 = vpop.f32.mrf.mxu0
        %v4348 = vpop.f32.mrf.mxu0
        %v4349 = vadd.f32 0.0, %v4348
        %v4350 = vpop.f32.mrf.mxu0
        %4351 = vmatprep.mubr.bf16.mxu0 0
        %4352 = vmatmul.mubr.bf16.gmra.mxu0 %v4298
        %v4353 = vpop.f32.mrf.mxu0
        %v4354 = vadd.f32 0.0, %v4353
        %v4355 = vpop.f32.mrf.mxu0
        %v4356 = vpop.f32.mrf.mxu0
        %v4357 = vadd.f32 0.0, %v4356
        %v4358 = vpop.f32.mrf.mxu0
        %4359 = vmatprep.mubr.bf16.mxu0 0
        %4360 = vmatmul.mubr.bf16.gmra.mxu0 %v4301
        %v4361 = vpop.f32.mrf.mxu0
        %v4362 = vadd.f32 0.0, %v4361
        %v4363 = vpop.f32.mrf.mxu0
        %v4364 = vpop.f32.mrf.mxu0
        %v4365 = vadd.f32 0.0, %v4364
        %v4366 = vpop.f32.mrf.mxu0
        %4367 = vdwg.mxu0
        %v4368 = vadd.f32 %v4204, %v4338
        %v4369 = vadd.f32 %v4207, %v4341
        %v4370 = vadd.f32 %v4212, %v4346
        %v4371 = vadd.f32 %v4215, %v4349
        %v4372 = vadd.f32 %v4220, %v4354
        %v4373 = vadd.f32 %v4223, %v4357
        %v4374 = vadd.f32 %v4228, %v4362
        %v4375 = vadd.f32 %v4231, %v4365
        %4376 = vrot.lane.b32.xlu0 %v3959, 1
        %v4377 = vpop.permute.xlu0 %4376
        %4378 = vrot.lane.b32.xlu0 %v3960, 1
        %v4379 = vpop.permute.xlu0 %4378
        %4380 = vrot.lane.b32.xlu0 %v3961, 1
        %v4381 = vpop.permute.xlu0 %4380
        %4382 = vrot.lane.b32.xlu0 %v3962, 1
        %v4383 = vpop.permute.xlu0 %4382
        %4384 = vrot.lane.b32.xlu0 %v3963, 1
        %v4385 = vpop.permute.xlu0 %4384
        %4386 = vrot.lane.b32.xlu0 %v3964, 1
        %v4387 = vpop.permute.xlu0 %4386
        %4388 = vrot.lane.b32.xlu0 %v3965, 1
        %v4389 = vpop.permute.xlu0 %4388
        %4390 = vrot.lane.b32.xlu0 %v3966, 1
        %v4391 = vpop.permute.xlu0 %4390
        %v4392 = vmul.f32 %v4377, %v1246
        %v4393 = vmul.f32 %v4379, %v1246
        %v4394 = vmul.f32 %v4381, %v1246
        %v4395 = vmul.f32 %v4383, %v1246
        %v4396 = vmul.f32 %v4385, %v1246
        %v4397 = vmul.f32 %v4387, %v1246
        %v4398 = vmul.f32 %v4389, %v1246
        %v4399 = vmul.f32 %v4391, %v1246
        %s4400 = scalar_lea.vmem %s8, 96
        %v4401 = vld [vmem:[%s4400] sm:$0xf]
        %v4402 = vld [vmem:[%s4400 + $0x4] sm:$0xf]
        %v4403 = vld [vmem:[%s4400 + $0x8] sm:$0xf]
        %v4404 = vld [vmem:[%s4400 + $0xc] sm:$0xf]
        %v4405 = vld [vmem:[%s4400 + $0x10] sm:$0xf]
        %v4406 = vld [vmem:[%s4400 + $0x14] sm:$0xf]
        %v4407 = vld [vmem:[%s4400 + $0x18] sm:$0xf]
        %v4408 = vld [vmem:[%s4400 + $0x1c] sm:$0xf]
        %v4409 = vpack.c.bf16 %v4393, %v4392
        %v4410 = vpack.c.bf16 %v4395, %v4394
        %v4411 = vpack.c.bf16 %v4397, %v4396
        %v4412 = vpack.c.bf16 %v4399, %v4398
        %v4421 = vunpack.c.l.b16 %v4401
        %v4422 = vunpack.c.l.b16 %v4402
        %v4423 = vunpack.c.l.b16 %v4403
        %v4424 = vunpack.c.l.b16 %v4404
        %v4425 = vunpack.c.l.b16 %v4405
        %v4426 = vunpack.c.l.b16 %v4406
        %v4427 = vunpack.c.l.b16 %v4407
        %v4428 = vunpack.c.l.b16 %v4408
        %v4429 = vpack.c.b16 %v4422, %v4421
        %v4430 = vpack.c.b16 %v4424, %v4423
        %v4431 = vpack.c.b16 %v4426, %v4425
        %v4432 = vpack.c.b16 %v4428, %v4427
        %v4434 = vsel %vm2694, %v4429, 0
        %v4437 = vsel %vm2694, %v4430, 0
        %v4440 = vsel %vm2694, %v4431, 0
        %v4443 = vsel %vm2694, %v4432, 0
        %4445 = vmatprep.subr.bf16.mxu0 0
        %4446 = vmatpush1.bf16.msra.mxu0 0
        %4447 = vmatprep.subr.bf16.mxu0 0
        %4448 = vmatpush1.bf16.msra.mxu0 0
        %4449 = vmatprep.subr.bf16.mxu0 0
        %4450 = vmatpush1.bf16.msra.mxu0 0
        %4451 = vmatprep.subr.bf16.mxu0 0
        %4452 = vmatpush1.bf16.msra.mxu0 0
        %4453 = vmatprep.subr.bf16.mxu0 0
        %4454 = vmatpush1.bf16.msra.mxu0 %v4412
        %4455 = vmatprep.subr.bf16.mxu0 0
        %4456 = vmatpush1.bf16.msra.mxu0 %v4411
        %4457 = vmatprep.subr.bf16.mxu0 0
        %4458 = vmatpush1.bf16.msra.mxu0 %v4410
        %4459 = vmatprep.subr.bf16.mxu0 0
        %4460 = vmatpush1.bf16.msra.mxu0 %v4409
        %4461 = vmatprep.subr.bf16.mxu0 0
        %4462 = vmatpush2.bf16.msra.mxu0 0
        %4463 = vmatprep.subr.bf16.mxu0 0
        %4464 = vmatpush2.bf16.msra.mxu0 0
        %4465 = vmatprep.subr.bf16.mxu0 0
        %4466 = vmatpush2.bf16.msra.mxu0 0
        %4467 = vmatprep.subr.bf16.mxu0 0
        %4468 = vmatpush2.bf16.msra.mxu0 0
        %4469 = vmatprep.subr.bf16.mxu0 0
        %4470 = vmatpush2.bf16.msra.mxu0 0
        %4471 = vmatprep.subr.bf16.mxu0 0
        %4472 = vmatpush2.bf16.msra.mxu0 0
        %4473 = vmatprep.subr.bf16.mxu0 0
        %4474 = vmatpush2.bf16.msra.mxu0 0
        %4475 = vmatprep.subr.bf16.mxu0 0
        %4476 = vmatpush2.bf16.msra.mxu0 0
        %4477 = vmatprep.mubr.bf16.mxu0 0
        %4478 = vmatmul.mubr.bf16.gmra.mxu0 %v4434
        %v4479 = vpop.f32.mrf.mxu0
        %v4480 = vadd.f32 0.0, %v4479
        %v4481 = vpop.f32.mrf.mxu0
        %v4482 = vpop.f32.mrf.mxu0
        %v4483 = vadd.f32 0.0, %v4482
        %v4484 = vpop.f32.mrf.mxu0
        %4485 = vmatprep.mubr.bf16.mxu0 0
        %4486 = vmatmul.mubr.bf16.gmra.mxu0 %v4437
        %v4487 = vpop.f32.mrf.mxu0
        %v4488 = vadd.f32 0.0, %v4487
        %v4489 = vpop.f32.mrf.mxu0
        %v4490 = vpop.f32.mrf.mxu0
        %v4491 = vadd.f32 0.0, %v4490
        %v4492 = vpop.f32.mrf.mxu0
        %4493 = vmatprep.mubr.bf16.mxu0 0
        %4494 = vmatmul.mubr.bf16.gmra.mxu0 %v4440
        %v4495 = vpop.f32.mrf.mxu0
        %v4496 = vadd.f32 0.0, %v4495
        %v4497 = vpop.f32.mrf.mxu0
        %v4498 = vpop.f32.mrf.mxu0
        %v4499 = vadd.f32 0.0, %v4498
        %v4500 = vpop.f32.mrf.mxu0
        %4501 = vmatprep.mubr.bf16.mxu0 0
        %4502 = vmatmul.mubr.bf16.gmra.mxu0 %v4443
        %v4503 = vpop.f32.mrf.mxu0
        %v4504 = vadd.f32 0.0, %v4503
        %v4505 = vpop.f32.mrf.mxu0
        %v4506 = vpop.f32.mrf.mxu0
        %v4507 = vadd.f32 0.0, %v4506
        %v4508 = vpop.f32.mrf.mxu0
        %4509 = vdwg.mxu0
        %v4510 = vadd.f32 %v4368, %v4480
        %v4511 = vadd.f32 %v4369, %v4483
        %v4512 = vadd.f32 %v4370, %v4488
        %v4513 = vadd.f32 %v4371, %v4491
        %v4514 = vadd.f32 %v4372, %v4496
        %v4515 = vadd.f32 %v4373, %v4499
        %v4516 = vadd.f32 %v4374, %v4504
        %v4517 = vadd.f32 %v4375, %v4507
        %s4518 = scalar_lea.vmem %s8, 128
        %v4519 = vld [vmem:[%s4518] sm:$0xf]
        %v4520 = vld [vmem:[%s4518 + $0x4] sm:$0xf]
        %v4521 = vld [vmem:[%s4518 + $0x8] sm:$0xf]
        %v4522 = vld [vmem:[%s4518 + $0xc] sm:$0xf]
        %v4523 = vld [vmem:[%s4518 + $0x10] sm:$0xf]
        %v4524 = vld [vmem:[%s4518 + $0x14] sm:$0xf]
        %v4525 = vld [vmem:[%s4518 + $0x18] sm:$0xf]
        %v4526 = vld [vmem:[%s4518 + $0x1c] sm:$0xf]
        %v4527 = vpack.c.bf16 %v3960, %v3959
        %v4528 = vpack.c.bf16 %v3962, %v3961
        %v4529 = vpack.c.bf16 %v3964, %v3963
        %v4530 = vpack.c.bf16 %v3966, %v3965
        %v4539 = vunpack.c.l.b16 %v4519
        %v4540 = vunpack.c.l.b16 %v4520
        %v4541 = vunpack.c.l.b16 %v4521
        %v4542 = vunpack.c.l.b16 %v4522
        %v4543 = vunpack.c.l.b16 %v4523
        %v4544 = vunpack.c.l.b16 %v4524
        %v4545 = vunpack.c.l.b16 %v4525
        %v4546 = vunpack.c.l.b16 %v4526
        %v4547 = vpack.c.b16 %v4540, %v4539
        %v4548 = vpack.c.b16 %v4542, %v4541
        %v4549 = vpack.c.b16 %v4544, %v4543
        %v4550 = vpack.c.b16 %v4546, %v4545
        %v4552 = vsel %vm2694, %v4547, 0
        %v4555 = vsel %vm2694, %v4548, 0
        %v4558 = vsel %vm2694, %v4549, 0
        %v4561 = vsel %vm2694, %v4550, 0
        %4563 = vmatprep.subr.bf16.mxu0 0
        %4564 = vmatpush1.bf16.msra.mxu0 0
        %4565 = vmatprep.subr.bf16.mxu0 0
        %4566 = vmatpush1.bf16.msra.mxu0 0
        %4567 = vmatprep.subr.bf16.mxu0 0
        %4568 = vmatpush1.bf16.msra.mxu0 0
        %4569 = vmatprep.subr.bf16.mxu0 0
        %4570 = vmatpush1.bf16.msra.mxu0 0
        %4571 = vmatprep.subr.bf16.mxu0 0
        %4572 = vmatpush1.bf16.msra.mxu0 %v4530
        %4573 = vmatprep.subr.bf16.mxu0 0
        %4574 = vmatpush1.bf16.msra.mxu0 %v4529
        %4575 = vmatprep.subr.bf16.mxu0 0
        %4576 = vmatpush1.bf16.msra.mxu0 %v4528
        %4577 = vmatprep.subr.bf16.mxu0 0
        %4578 = vmatpush1.bf16.msra.mxu0 %v4527
        %4579 = vmatprep.subr.bf16.mxu0 0
        %4580 = vmatpush2.bf16.msra.mxu0 0
        %4581 = vmatprep.subr.bf16.mxu0 0
        %4582 = vmatpush2.bf16.msra.mxu0 0
        %4583 = vmatprep.subr.bf16.mxu0 0
        %4584 = vmatpush2.bf16.msra.mxu0 0
        %4585 = vmatprep.subr.bf16.mxu0 0
        %4586 = vmatpush2.bf16.msra.mxu0 0
        %4587 = vmatprep.subr.bf16.mxu0 0
        %4588 = vmatpush2.bf16.msra.mxu0 0
        %4589 = vmatprep.subr.bf16.mxu0 0
        %4590 = vmatpush2.bf16.msra.mxu0 0
        %4591 = vmatprep.subr.bf16.mxu0 0
        %4592 = vmatpush2.bf16.msra.mxu0 0
        %4593 = vmatprep.subr.bf16.mxu0 0
        %4594 = vmatpush2.bf16.msra.mxu0 0
        %4595 = vmatprep.mubr.bf16.mxu0 0
        %4596 = vmatmul.mubr.bf16.gmra.mxu0 %v4552
        %v4597 = vpop.f32.mrf.mxu0
        %v4598 = vadd.f32 0.0, %v4597
        %v4599 = vpop.f32.mrf.mxu0
        %v4600 = vpop.f32.mrf.mxu0
        %v4601 = vadd.f32 0.0, %v4600
        %v4602 = vpop.f32.mrf.mxu0
        %4603 = vmatprep.mubr.bf16.mxu0 0
        %4604 = vmatmul.mubr.bf16.gmra.mxu0 %v4555
        %v4605 = vpop.f32.mrf.mxu0
        %v4606 = vadd.f32 0.0, %v4605
        %v4607 = vpop.f32.mrf.mxu0
        %v4608 = vpop.f32.mrf.mxu0
        %v4609 = vadd.f32 0.0, %v4608
        %v4610 = vpop.f32.mrf.mxu0
        %4611 = vmatprep.mubr.bf16.mxu0 0
        %4612 = vmatmul.mubr.bf16.gmra.mxu0 %v4558
        %v4613 = vpop.f32.mrf.mxu0
        %v4614 = vadd.f32 0.0, %v4613
        %v4615 = vpop.f32.mrf.mxu0
        %v4616 = vpop.f32.mrf.mxu0
        %v4617 = vadd.f32 0.0, %v4616
        %v4618 = vpop.f32.mrf.mxu0
        %4619 = vmatprep.mubr.bf16.mxu0 0
        %4620 = vmatmul.mubr.bf16.gmra.mxu0 %v4561
        %v4621 = vpop.f32.mrf.mxu0
        %v4622 = vadd.f32 0.0, %v4621
        %v4623 = vpop.f32.mrf.mxu0
        %v4624 = vpop.f32.mrf.mxu0
        %v4625 = vadd.f32 0.0, %v4624
        %v4626 = vpop.f32.mrf.mxu0
        %4627 = vdwg.mxu0
        %v4628 = vadd.f32 %v4510, %v4598
        %v4629 = vadd.f32 %v4511, %v4601
        %v4630 = vadd.f32 %v4512, %v4606
        %v4631 = vadd.f32 %v4513, %v4609
        %v4632 = vadd.f32 %v4514, %v4614
        %v4633 = vadd.f32 %v4515, %v4617
        %v4634 = vadd.f32 %v4516, %v4622
        %v4635 = vadd.f32 %v4517, %v4625
        %4636 = vrot.lane.b32.xlu0 %v3959, 127
        %v4637 = vpop.permute.xlu0 %4636
        %4638 = vrot.lane.b32.xlu0 %v3960, 127
        %v4639 = vpop.permute.xlu0 %4638
        %4640 = vrot.lane.b32.xlu0 %v3961, 127
        %v4641 = vpop.permute.xlu0 %4640
        %4642 = vrot.lane.b32.xlu0 %v3962, 127
        %v4643 = vpop.permute.xlu0 %4642
        %4644 = vrot.lane.b32.xlu0 %v3963, 127
        %v4645 = vpop.permute.xlu0 %4644
        %4646 = vrot.lane.b32.xlu0 %v3964, 127
        %v4647 = vpop.permute.xlu0 %4646
        %4648 = vrot.lane.b32.xlu0 %v3965, 127
        %v4649 = vpop.permute.xlu0 %4648
        %4650 = vrot.lane.b32.xlu0 %v3966, 127
        %v4651 = vpop.permute.xlu0 %4650
        %v4652 = vmul.f32 %v4637, %v1619
        %v4653 = vmul.f32 %v4639, %v1619
        %v4654 = vmul.f32 %v4641, %v1619
        %v4655 = vmul.f32 %v4643, %v1619
        %v4656 = vmul.f32 %v4645, %v1619
        %v4657 = vmul.f32 %v4647, %v1619
        %v4658 = vmul.f32 %v4649, %v1619
        %v4659 = vmul.f32 %v4651, %v1619
        %s4660 = scalar_lea.vmem %s8, 160
        %v4661 = vld [vmem:[%s4660] sm:$0xf]
        %v4662 = vld [vmem:[%s4660 + $0x4] sm:$0xf]
        %v4663 = vld [vmem:[%s4660 + $0x8] sm:$0xf]
        %v4664 = vld [vmem:[%s4660 + $0xc] sm:$0xf]
        %v4665 = vld [vmem:[%s4660 + $0x10] sm:$0xf]
        %v4666 = vld [vmem:[%s4660 + $0x14] sm:$0xf]
        %v4667 = vld [vmem:[%s4660 + $0x18] sm:$0xf]
        %v4668 = vld [vmem:[%s4660 + $0x1c] sm:$0xf]
        %v4669 = vpack.c.bf16 %v4653, %v4652
        %v4670 = vpack.c.bf16 %v4655, %v4654
        %v4671 = vpack.c.bf16 %v4657, %v4656
        %v4672 = vpack.c.bf16 %v4659, %v4658
        %v4681 = vunpack.c.l.b16 %v4661
        %v4682 = vunpack.c.l.b16 %v4662
        %v4683 = vunpack.c.l.b16 %v4663
        %v4684 = vunpack.c.l.b16 %v4664
        %v4685 = vunpack.c.l.b16 %v4665
        %v4686 = vunpack.c.l.b16 %v4666
        %v4687 = vunpack.c.l.b16 %v4667
        %v4688 = vunpack.c.l.b16 %v4668
        %v4689 = vpack.c.b16 %v4682, %v4681
        %v4690 = vpack.c.b16 %v4684, %v4683
        %v4691 = vpack.c.b16 %v4686, %v4685
        %v4692 = vpack.c.b16 %v4688, %v4687
        %v4694 = vsel %vm2694, %v4689, 0
        %v4697 = vsel %vm2694, %v4690, 0
        %v4700 = vsel %vm2694, %v4691, 0
        %v4703 = vsel %vm2694, %v4692, 0
        %4705 = vmatprep.subr.bf16.mxu0 0
        %4706 = vmatpush1.bf16.msra.mxu0 0
        %4707 = vmatprep.subr.bf16.mxu0 0
        %4708 = vmatpush1.bf16.msra.mxu0 0
        %4709 = vmatprep.subr.bf16.mxu0 0
        %4710 = vmatpush1.bf16.msra.mxu0 0
        %4711 = vmatprep.subr.bf16.mxu0 0
        %4712 = vmatpush1.bf16.msra.mxu0 0
        %4713 = vmatprep.subr.bf16.mxu0 0
        %4714 = vmatpush1.bf16.msra.mxu0 %v4672
        %4715 = vmatprep.subr.bf16.mxu0 0
        %4716 = vmatpush1.bf16.msra.mxu0 %v4671
        %4717 = vmatprep.subr.bf16.mxu0 0
        %4718 = vmatpush1.bf16.msra.mxu0 %v4670
        %4719 = vmatprep.subr.bf16.mxu0 0
        %4720 = vmatpush1.bf16.msra.mxu0 %v4669
        %4721 = vmatprep.subr.bf16.mxu0 0
        %4722 = vmatpush2.bf16.msra.mxu0 0
        %4723 = vmatprep.subr.bf16.mxu0 0
        %4724 = vmatpush2.bf16.msra.mxu0 0
        %4725 = vmatprep.subr.bf16.mxu0 0
        %4726 = vmatpush2.bf16.msra.mxu0 0
        %4727 = vmatprep.subr.bf16.mxu0 0
        %4728 = vmatpush2.bf16.msra.mxu0 0
        %4729 = vmatprep.subr.bf16.mxu0 0
        %4730 = vmatpush2.bf16.msra.mxu0 0
        %4731 = vmatprep.subr.bf16.mxu0 0
        %4732 = vmatpush2.bf16.msra.mxu0 0
        %4733 = vmatprep.subr.bf16.mxu0 0
        %4734 = vmatpush2.bf16.msra.mxu0 0
        %4735 = vmatprep.subr.bf16.mxu0 0
        %4736 = vmatpush2.bf16.msra.mxu0 0
        %4737 = vmatprep.mubr.bf16.mxu0 0
        %4738 = vmatmul.mubr.bf16.gmra.mxu0 %v4694
        %v4739 = vpop.f32.mrf.mxu0
        %v4740 = vadd.f32 0.0, %v4739
        %v4741 = vpop.f32.mrf.mxu0
        %v4742 = vpop.f32.mrf.mxu0
        %v4743 = vadd.f32 0.0, %v4742
        %v4744 = vpop.f32.mrf.mxu0
        %4745 = vmatprep.mubr.bf16.mxu0 0
        %4746 = vmatmul.mubr.bf16.gmra.mxu0 %v4697
        %v4747 = vpop.f32.mrf.mxu0
        %v4748 = vadd.f32 0.0, %v4747
        %v4749 = vpop.f32.mrf.mxu0
        %v4750 = vpop.f32.mrf.mxu0
        %v4751 = vadd.f32 0.0, %v4750
        %v4752 = vpop.f32.mrf.mxu0
        %4753 = vmatprep.mubr.bf16.mxu0 0
        %4754 = vmatmul.mubr.bf16.gmra.mxu0 %v4700
        %v4755 = vpop.f32.mrf.mxu0
        %v4756 = vadd.f32 0.0, %v4755
        %v4757 = vpop.f32.mrf.mxu0
        %v4758 = vpop.f32.mrf.mxu0
        %v4759 = vadd.f32 0.0, %v4758
        %v4760 = vpop.f32.mrf.mxu0
        %4761 = vmatprep.mubr.bf16.mxu0 0
        %4762 = vmatmul.mubr.bf16.gmra.mxu0 %v4703
        %v4763 = vpop.f32.mrf.mxu0
        %v4764 = vadd.f32 0.0, %v4763
        %v4765 = vpop.f32.mrf.mxu0
        %v4766 = vpop.f32.mrf.mxu0
        %v4767 = vadd.f32 0.0, %v4766
        %v4768 = vpop.f32.mrf.mxu0
        %4769 = vdwg.mxu0
        %v4770 = vadd.f32 %v4628, %v4740
        %v4771 = vadd.f32 %v4629, %v4743
        %v4772 = vadd.f32 %v4630, %v4748
        %v4773 = vadd.f32 %v4631, %v4751
        %v4774 = vadd.f32 %v4632, %v4756
        %v4775 = vadd.f32 %v4633, %v4759
        %v4776 = vadd.f32 %v4634, %v4764
        %v4777 = vadd.f32 %v4635, %v4767
        %4778 = vrot.lane.b32.xlu0 %v3959, 121
        %v4779 = vpop.permute.xlu0 %4778
        %4780 = vrot.lane.b32.xlu0 %v3960, 121
        %v4781 = vpop.permute.xlu0 %4780
        %4782 = vrot.lane.b32.xlu0 %v3961, 121
        %v4783 = vpop.permute.xlu0 %4782
        %4784 = vrot.lane.b32.xlu0 %v3962, 121
        %v4785 = vpop.permute.xlu0 %4784
        %4786 = vrot.lane.b32.xlu0 %v3963, 121
        %v4787 = vpop.permute.xlu0 %4786
        %4788 = vrot.lane.b32.xlu0 %v3964, 121
        %v4789 = vpop.permute.xlu0 %4788
        %4790 = vrot.lane.b32.xlu0 %v3965, 121
        %v4791 = vpop.permute.xlu0 %4790
        %4792 = vrot.lane.b32.xlu0 %v3966, 121
        %v4793 = vpop.permute.xlu0 %4792
        %v4794 = vmul.f32 %v4779, %v1846
        %v4795 = vmul.f32 %v4781, %v1846
        %v4796 = vmul.f32 %v4783, %v1846
        %v4797 = vmul.f32 %v4785, %v1846
        %v4798 = vmul.f32 %v4787, %v1846
        %v4799 = vmul.f32 %v4789, %v1846
        %v4800 = vmul.f32 %v4791, %v1846
        %v4801 = vmul.f32 %v4793, %v1846
        %s4802 = scalar_lea.vmem %s8, 192
        %v4803 = vld [vmem:[%s4802] sm:$0xf]
        %v4804 = vld [vmem:[%s4802 + $0x4] sm:$0xf]
        %v4805 = vld [vmem:[%s4802 + $0x8] sm:$0xf]
        %v4806 = vld [vmem:[%s4802 + $0xc] sm:$0xf]
        %v4807 = vld [vmem:[%s4802 + $0x10] sm:$0xf]
        %v4808 = vld [vmem:[%s4802 + $0x14] sm:$0xf]
        %v4809 = vld [vmem:[%s4802 + $0x18] sm:$0xf]
        %v4810 = vld [vmem:[%s4802 + $0x1c] sm:$0xf]
        %v4811 = vpack.c.bf16 %v4795, %v4794
        %v4812 = vpack.c.bf16 %v4797, %v4796
        %v4813 = vpack.c.bf16 %v4799, %v4798
        %v4814 = vpack.c.bf16 %v4801, %v4800
        %v4823 = vunpack.c.l.b16 %v4803
        %v4824 = vunpack.c.l.b16 %v4804
        %v4825 = vunpack.c.l.b16 %v4805
        %v4826 = vunpack.c.l.b16 %v4806
        %v4827 = vunpack.c.l.b16 %v4807
        %v4828 = vunpack.c.l.b16 %v4808
        %v4829 = vunpack.c.l.b16 %v4809
        %v4830 = vunpack.c.l.b16 %v4810
        %v4831 = vpack.c.b16 %v4824, %v4823
        %v4832 = vpack.c.b16 %v4826, %v4825
        %v4833 = vpack.c.b16 %v4828, %v4827
        %v4834 = vpack.c.b16 %v4830, %v4829
        %v4836 = vsel %vm2694, %v4831, 0
        %v4839 = vsel %vm2694, %v4832, 0
        %v4842 = vsel %vm2694, %v4833, 0
        %v4845 = vsel %vm2694, %v4834, 0
        %4847 = vmatprep.subr.bf16.mxu0 0
        %4848 = vmatpush1.bf16.msra.mxu0 0
        %4849 = vmatprep.subr.bf16.mxu0 0
        %4850 = vmatpush1.bf16.msra.mxu0 0
        %4851 = vmatprep.subr.bf16.mxu0 0
        %4852 = vmatpush1.bf16.msra.mxu0 0
        %4853 = vmatprep.subr.bf16.mxu0 0
        %4854 = vmatpush1.bf16.msra.mxu0 0
        %4855 = vmatprep.subr.bf16.mxu0 0
        %4856 = vmatpush1.bf16.msra.mxu0 %v4814
        %4857 = vmatprep.subr.bf16.mxu0 0
        %4858 = vmatpush1.bf16.msra.mxu0 %v4813
        %4859 = vmatprep.subr.bf16.mxu0 0
        %4860 = vmatpush1.bf16.msra.mxu0 %v4812
        %4861 = vmatprep.subr.bf16.mxu0 0
        %4862 = vmatpush1.bf16.msra.mxu0 %v4811
        %4863 = vmatprep.subr.bf16.mxu0 0
        %4864 = vmatpush2.bf16.msra.mxu0 0
        %4865 = vmatprep.subr.bf16.mxu0 0
        %4866 = vmatpush2.bf16.msra.mxu0 0
        %4867 = vmatprep.subr.bf16.mxu0 0
        %4868 = vmatpush2.bf16.msra.mxu0 0
        %4869 = vmatprep.subr.bf16.mxu0 0
        %4870 = vmatpush2.bf16.msra.mxu0 0
        %4871 = vmatprep.subr.bf16.mxu0 0
        %4872 = vmatpush2.bf16.msra.mxu0 0
        %4873 = vmatprep.subr.bf16.mxu0 0
        %4874 = vmatpush2.bf16.msra.mxu0 0
        %4875 = vmatprep.subr.bf16.mxu0 0
        %4876 = vmatpush2.bf16.msra.mxu0 0
        %4877 = vmatprep.subr.bf16.mxu0 0
        %4878 = vmatpush2.bf16.msra.mxu0 0
        %4879 = vmatprep.mubr.bf16.mxu0 0
        %4880 = vmatmul.mubr.bf16.gmra.mxu0 %v4836
        %v4881 = vpop.f32.mrf.mxu0
        %v4882 = vadd.f32 0.0, %v4881
        %v4883 = vpop.f32.mrf.mxu0
        %v4884 = vpop.f32.mrf.mxu0
        %v4885 = vadd.f32 0.0, %v4884
        %v4886 = vpop.f32.mrf.mxu0
        %4887 = vmatprep.mubr.bf16.mxu0 0
        %4888 = vmatmul.mubr.bf16.gmra.mxu0 %v4839
        %v4889 = vpop.f32.mrf.mxu0
        %v4890 = vadd.f32 0.0, %v4889
        %v4891 = vpop.f32.mrf.mxu0
        %v4892 = vpop.f32.mrf.mxu0
        %v4893 = vadd.f32 0.0, %v4892
        %v4894 = vpop.f32.mrf.mxu0
        %4895 = vmatprep.mubr.bf16.mxu0 0
        %4896 = vmatmul.mubr.bf16.gmra.mxu0 %v4842
        %v4897 = vpop.f32.mrf.mxu0
        %v4898 = vadd.f32 0.0, %v4897
        %v4899 = vpop.f32.mrf.mxu0
        %v4900 = vpop.f32.mrf.mxu0
        %v4901 = vadd.f32 0.0, %v4900
        %v4902 = vpop.f32.mrf.mxu0
        %4903 = vmatprep.mubr.bf16.mxu0 0
        %4904 = vmatmul.mubr.bf16.gmra.mxu0 %v4845
        %v4905 = vpop.f32.mrf.mxu0
        %v4906 = vadd.f32 0.0, %v4905
        %v4907 = vpop.f32.mrf.mxu0
        %v4908 = vpop.f32.mrf.mxu0
        %v4909 = vadd.f32 0.0, %v4908
        %v4910 = vpop.f32.mrf.mxu0
        %4911 = vdwg.mxu0
        %v4912 = vadd.f32 %v4770, %v4882
        %v4913 = vadd.f32 %v4771, %v4885
        %v4914 = vadd.f32 %v4772, %v4890
        %v4915 = vadd.f32 %v4773, %v4893
        %v4916 = vadd.f32 %v4774, %v4898
        %v4917 = vadd.f32 %v4775, %v4901
        %v4918 = vadd.f32 %v4776, %v4906
        %v4919 = vadd.f32 %v4777, %v4909
        %4920 = vrot.lane.b32.xlu0 %v3959, 120
        %v4921 = vpop.permute.xlu0 %4920
        %4922 = vrot.lane.b32.xlu0 %v3960, 120
        %v4923 = vpop.permute.xlu0 %4922
        %4924 = vrot.lane.b32.xlu0 %v3961, 120
        %v4925 = vpop.permute.xlu0 %4924
        %4926 = vrot.lane.b32.xlu0 %v3962, 120
        %v4927 = vpop.permute.xlu0 %4926
        %4928 = vrot.lane.b32.xlu0 %v3963, 120
        %v4929 = vpop.permute.xlu0 %4928
        %4930 = vrot.lane.b32.xlu0 %v3964, 120
        %v4931 = vpop.permute.xlu0 %4930
        %4932 = vrot.lane.b32.xlu0 %v3965, 120
        %v4933 = vpop.permute.xlu0 %4932
        %4934 = vrot.lane.b32.xlu0 %v3966, 120
        %v4935 = vpop.permute.xlu0 %4934
        %v4936 = vmul.f32 %v4921, %v2073
        %v4937 = vmul.f32 %v4923, %v2073
        %v4938 = vmul.f32 %v4925, %v2073
        %v4939 = vmul.f32 %v4927, %v2073
        %v4940 = vmul.f32 %v4929, %v2073
        %v4941 = vmul.f32 %v4931, %v2073
        %v4942 = vmul.f32 %v4933, %v2073
        %v4943 = vmul.f32 %v4935, %v2073
        %s4944 = scalar_lea.vmem %s8, 224
        %v4945 = vld [vmem:[%s4944] sm:$0xf]
        %v4946 = vld [vmem:[%s4944 + $0x4] sm:$0xf]
        %v4947 = vld [vmem:[%s4944 + $0x8] sm:$0xf]
        %v4948 = vld [vmem:[%s4944 + $0xc] sm:$0xf]
        %v4949 = vld [vmem:[%s4944 + $0x10] sm:$0xf]
        %v4950 = vld [vmem:[%s4944 + $0x14] sm:$0xf]
        %v4951 = vld [vmem:[%s4944 + $0x18] sm:$0xf]
        %v4952 = vld [vmem:[%s4944 + $0x1c] sm:$0xf]
        %v4953 = vpack.c.bf16 %v4937, %v4936
        %v4954 = vpack.c.bf16 %v4939, %v4938
        %v4955 = vpack.c.bf16 %v4941, %v4940
        %v4956 = vpack.c.bf16 %v4943, %v4942
        %v4965 = vunpack.c.l.b16 %v4945
        %v4966 = vunpack.c.l.b16 %v4946
        %v4967 = vunpack.c.l.b16 %v4947
        %v4968 = vunpack.c.l.b16 %v4948
        %v4969 = vunpack.c.l.b16 %v4949
        %v4970 = vunpack.c.l.b16 %v4950
        %v4971 = vunpack.c.l.b16 %v4951
        %v4972 = vunpack.c.l.b16 %v4952
        %v4973 = vpack.c.b16 %v4966, %v4965
        %v4974 = vpack.c.b16 %v4968, %v4967
        %v4975 = vpack.c.b16 %v4970, %v4969
        %v4976 = vpack.c.b16 %v4972, %v4971
        %v4978 = vsel %vm2694, %v4973, 0
        %v4981 = vsel %vm2694, %v4974, 0
        %v4984 = vsel %vm2694, %v4975, 0
        %v4987 = vsel %vm2694, %v4976, 0
        %4989 = vmatprep.subr.bf16.mxu0 0
        %4990 = vmatpush1.bf16.msra.mxu0 0
        %4991 = vmatprep.subr.bf16.mxu0 0
        %4992 = vmatpush1.bf16.msra.mxu0 0
        %4993 = vmatprep.subr.bf16.mxu0 0
        %4994 = vmatpush1.bf16.msra.mxu0 0
        %4995 = vmatprep.subr.bf16.mxu0 0
        %4996 = vmatpush1.bf16.msra.mxu0 0
        %4997 = vmatprep.subr.bf16.mxu0 0
        %4998 = vmatpush1.bf16.msra.mxu0 %v4956
        %4999 = vmatprep.subr.bf16.mxu0 0
        %5000 = vmatpush1.bf16.msra.mxu0 %v4955
        %5001 = vmatprep.subr.bf16.mxu0 0
        %5002 = vmatpush1.bf16.msra.mxu0 %v4954
        %5003 = vmatprep.subr.bf16.mxu0 0
        %5004 = vmatpush1.bf16.msra.mxu0 %v4953
        %5005 = vmatprep.subr.bf16.mxu0 0
        %5006 = vmatpush2.bf16.msra.mxu0 0
        %5007 = vmatprep.subr.bf16.mxu0 0
        %5008 = vmatpush2.bf16.msra.mxu0 0
        %5009 = vmatprep.subr.bf16.mxu0 0
        %5010 = vmatpush2.bf16.msra.mxu0 0
        %5011 = vmatprep.subr.bf16.mxu0 0
        %5012 = vmatpush2.bf16.msra.mxu0 0
        %5013 = vmatprep.subr.bf16.mxu0 0
        %5014 = vmatpush2.bf16.msra.mxu0 0
        %5015 = vmatprep.subr.bf16.mxu0 0
        %5016 = vmatpush2.bf16.msra.mxu0 0
        %5017 = vmatprep.subr.bf16.mxu0 0
        %5018 = vmatpush2.bf16.msra.mxu0 0
        %5019 = vmatprep.subr.bf16.mxu0 0
        %5020 = vmatpush2.bf16.msra.mxu0 0
        %5021 = vmatprep.mubr.bf16.mxu0 0
        %5022 = vmatmul.mubr.bf16.gmra.mxu0 %v4978
        %v5023 = vpop.f32.mrf.mxu0
        %v5024 = vadd.f32 0.0, %v5023
        %v5025 = vpop.f32.mrf.mxu0
        %v5026 = vpop.f32.mrf.mxu0
        %v5027 = vadd.f32 0.0, %v5026
        %v5028 = vpop.f32.mrf.mxu0
        %5029 = vmatprep.mubr.bf16.mxu0 0
        %5030 = vmatmul.mubr.bf16.gmra.mxu0 %v4981
        %v5031 = vpop.f32.mrf.mxu0
        %v5032 = vadd.f32 0.0, %v5031
        %v5033 = vpop.f32.mrf.mxu0
        %v5034 = vpop.f32.mrf.mxu0
        %v5035 = vadd.f32 0.0, %v5034
        %v5036 = vpop.f32.mrf.mxu0
        %5037 = vmatprep.mubr.bf16.mxu0 0
        %5038 = vmatmul.mubr.bf16.gmra.mxu0 %v4984
        %v5039 = vpop.f32.mrf.mxu0
        %v5040 = vadd.f32 0.0, %v5039
        %v5041 = vpop.f32.mrf.mxu0
        %v5042 = vpop.f32.mrf.mxu0
        %v5043 = vadd.f32 0.0, %v5042
        %v5044 = vpop.f32.mrf.mxu0
        %5045 = vmatprep.mubr.bf16.mxu0 0
        %5046 = vmatmul.mubr.bf16.gmra.mxu0 %v4987
        %v5047 = vpop.f32.mrf.mxu0
        %v5048 = vadd.f32 0.0, %v5047
        %v5049 = vpop.f32.mrf.mxu0
        %v5050 = vpop.f32.mrf.mxu0
        %v5051 = vadd.f32 0.0, %v5050
        %v5052 = vpop.f32.mrf.mxu0
        %5053 = vdwg.mxu0
        %v5054 = vadd.f32 %v4912, %v5024
        %v5055 = vadd.f32 %v4913, %v5027
        %v5056 = vadd.f32 %v4914, %v5032
        %v5057 = vadd.f32 %v4915, %v5035
        %v5058 = vadd.f32 %v4916, %v5040
        %v5059 = vadd.f32 %v4917, %v5043
        %v5060 = vadd.f32 %v4918, %v5048
        %v5061 = vadd.f32 %v4919, %v5051
        %5062 = vrot.lane.b32.xlu0 %v3959, 119
        %v5063 = vpop.permute.xlu0 %5062
        %5064 = vrot.lane.b32.xlu0 %v3960, 119
        %v5065 = vpop.permute.xlu0 %5064
        %5066 = vrot.lane.b32.xlu0 %v3961, 119
        %v5067 = vpop.permute.xlu0 %5066
        %5068 = vrot.lane.b32.xlu0 %v3962, 119
        %v5069 = vpop.permute.xlu0 %5068
        %5070 = vrot.lane.b32.xlu0 %v3963, 119
        %v5071 = vpop.permute.xlu0 %5070
        %5072 = vrot.lane.b32.xlu0 %v3964, 119
        %v5073 = vpop.permute.xlu0 %5072
        %5074 = vrot.lane.b32.xlu0 %v3965, 119
        %v5075 = vpop.permute.xlu0 %5074
        %5076 = vrot.lane.b32.xlu0 %v3966, 119
        %v5077 = vpop.permute.xlu0 %5076
        %v5078 = vmul.f32 %v5063, %v2300
        %v5079 = vmul.f32 %v5065, %v2300
        %v5080 = vmul.f32 %v5067, %v2300
        %v5081 = vmul.f32 %v5069, %v2300
        %v5082 = vmul.f32 %v5071, %v2300
        %v5083 = vmul.f32 %v5073, %v2300
        %v5084 = vmul.f32 %v5075, %v2300
        %v5085 = vmul.f32 %v5077, %v2300
        %s5086 = scalar_lea.vmem %s8, 256
        %v5087 = vld [vmem:[%s5086] sm:$0xf]
        %v5088 = vld [vmem:[%s5086 + $0x4] sm:$0xf]
        %v5089 = vld [vmem:[%s5086 + $0x8] sm:$0xf]
        %v5090 = vld [vmem:[%s5086 + $0xc] sm:$0xf]
        %v5091 = vld [vmem:[%s5086 + $0x10] sm:$0xf]
        %v5092 = vld [vmem:[%s5086 + $0x14] sm:$0xf]
        %v5093 = vld [vmem:[%s5086 + $0x18] sm:$0xf]
        %v5094 = vld [vmem:[%s5086 + $0x1c] sm:$0xf]
        %v5095 = vpack.c.bf16 %v5079, %v5078
        %v5096 = vpack.c.bf16 %v5081, %v5080
        %v5097 = vpack.c.bf16 %v5083, %v5082
        %v5098 = vpack.c.bf16 %v5085, %v5084
        %v5107 = vunpack.c.l.b16 %v5087
        %v5108 = vunpack.c.l.b16 %v5088
        %v5109 = vunpack.c.l.b16 %v5089
        %v5110 = vunpack.c.l.b16 %v5090
        %v5111 = vunpack.c.l.b16 %v5091
        %v5112 = vunpack.c.l.b16 %v5092
        %v5113 = vunpack.c.l.b16 %v5093
        %v5114 = vunpack.c.l.b16 %v5094
        %v5115 = vpack.c.b16 %v5108, %v5107
        %v5116 = vpack.c.b16 %v5110, %v5109
        %v5117 = vpack.c.b16 %v5112, %v5111
        %v5118 = vpack.c.b16 %v5114, %v5113
        %v5120 = vsel %vm2694, %v5115, 0
        %v5123 = vsel %vm2694, %v5116, 0
        %v5126 = vsel %vm2694, %v5117, 0
        %v5129 = vsel %vm2694, %v5118, 0
        %5131 = vmatprep.subr.bf16.mxu0 0
        %5132 = vmatpush1.bf16.msra.mxu0 0
        %5133 = vmatprep.subr.bf16.mxu0 0
        %5134 = vmatpush1.bf16.msra.mxu0 0
        %5135 = vmatprep.subr.bf16.mxu0 0
        %5136 = vmatpush1.bf16.msra.mxu0 0
        %5137 = vmatprep.subr.bf16.mxu0 0
        %5138 = vmatpush1.bf16.msra.mxu0 0
        %5139 = vmatprep.subr.bf16.mxu0 0
        %5140 = vmatpush1.bf16.msra.mxu0 %v5098
        %5141 = vmatprep.subr.bf16.mxu0 0
        %5142 = vmatpush1.bf16.msra.mxu0 %v5097
        %5143 = vmatprep.subr.bf16.mxu0 0
        %5144 = vmatpush1.bf16.msra.mxu0 %v5096
        %5145 = vmatprep.subr.bf16.mxu0 0
        %5146 = vmatpush1.bf16.msra.mxu0 %v5095
        %5147 = vmatprep.subr.bf16.mxu0 0
        %5148 = vmatpush2.bf16.msra.mxu0 0
        %5149 = vmatprep.subr.bf16.mxu0 0
        %5150 = vmatpush2.bf16.msra.mxu0 0
        %5151 = vmatprep.subr.bf16.mxu0 0
        %5152 = vmatpush2.bf16.msra.mxu0 0
        %5153 = vmatprep.subr.bf16.mxu0 0
        %5154 = vmatpush2.bf16.msra.mxu0 0
        %5155 = vmatprep.subr.bf16.mxu0 0
        %5156 = vmatpush2.bf16.msra.mxu0 0
        %5157 = vmatprep.subr.bf16.mxu0 0
        %5158 = vmatpush2.bf16.msra.mxu0 0
        %5159 = vmatprep.subr.bf16.mxu0 0
        %5160 = vmatpush2.bf16.msra.mxu0 0
        %5161 = vmatprep.subr.bf16.mxu0 0
        %5162 = vmatpush2.bf16.msra.mxu0 0
        %5163 = vmatprep.mubr.bf16.mxu0 0
        %5164 = vmatmul.mubr.bf16.gmra.mxu0 %v5120
        %v5165 = vpop.f32.mrf.mxu0
        %v5166 = vadd.f32 0.0, %v5165
        %v5167 = vpop.f32.mrf.mxu0
        %v5168 = vpop.f32.mrf.mxu0
        %v5169 = vadd.f32 0.0, %v5168
        %v5170 = vpop.f32.mrf.mxu0
        %5171 = vmatprep.mubr.bf16.mxu0 0
        %5172 = vmatmul.mubr.bf16.gmra.mxu0 %v5123
        %v5173 = vpop.f32.mrf.mxu0
        %v5174 = vadd.f32 0.0, %v5173
        %v5175 = vpop.f32.mrf.mxu0
        %v5176 = vpop.f32.mrf.mxu0
        %v5177 = vadd.f32 0.0, %v5176
        %v5178 = vpop.f32.mrf.mxu0
        %5179 = vmatprep.mubr.bf16.mxu0 0
        %5180 = vmatmul.mubr.bf16.gmra.mxu0 %v5126
        %v5181 = vpop.f32.mrf.mxu0
        %v5182 = vadd.f32 0.0, %v5181
        %v5183 = vpop.f32.mrf.mxu0
        %v5184 = vpop.f32.mrf.mxu0
        %v5185 = vadd.f32 0.0, %v5184
        %v5186 = vpop.f32.mrf.mxu0
        %5187 = vmatprep.mubr.bf16.mxu0 0
        %5188 = vmatmul.mubr.bf16.gmra.mxu0 %v5129
        %v5189 = vpop.f32.mrf.mxu0
        %v5190 = vadd.f32 0.0, %v5189
        %v5191 = vpop.f32.mrf.mxu0
        %v5192 = vpop.f32.mrf.mxu0
        %v5193 = vadd.f32 0.0, %v5192
        %v5194 = vpop.f32.mrf.mxu0
        %5195 = vdwg.mxu0
        %v5196 = vadd.f32 %v5054, %v5166
        %v5197 = vadd.f32 %v5055, %v5169
        %v5198 = vadd.f32 %v5056, %v5174
        %v5199 = vadd.f32 %v5057, %v5177
        %v5200 = vadd.f32 %v5058, %v5182
        %v5201 = vadd.f32 %v5059, %v5185
        %v5202 = vadd.f32 %v5060, %v5190
        %v5203 = vadd.f32 %v5061, %v5193
        %v5204 = vld [vmem:[%s9] sm:$0xff]
        %v5205 = vld [vmem:[%s9 + $0x8] sm:$0xff]
        %v5206 = vld [vmem:[%s9 + $0x10] sm:$0xff]
        %v5207 = vld [vmem:[%s9 + $0x18] sm:$0xff]
        %v5208 = vld [vmem:[%s9 + $0x20] sm:$0xff]
        %v5209 = vld [vmem:[%s9 + $0x28] sm:$0xff]
        %v5210 = vld [vmem:[%s9 + $0x30] sm:$0xff]
        %v5211 = vld [vmem:[%s9 + $0x38] sm:$0xff]
        %5213 = vset.pattern.permute.xlu0 0
        %5214 = vperm.xlu0 %5213, %v5204
        %v5215 = vpop.permute.xlu0 %5214
        %5218 = vset.pattern.permute.xlu0 0
        %5219 = vperm.xlu0 %5218, %v5205
        %v5220 = vpop.permute.xlu0 %5219
        %5223 = vset.pattern.permute.xlu0 0
        %5224 = vperm.xlu0 %5223, %v5206
        %v5225 = vpop.permute.xlu0 %5224
        %5228 = vset.pattern.permute.xlu0 0
        %5229 = vperm.xlu0 %5228, %v5207
        %v5230 = vpop.permute.xlu0 %5229
        %5233 = vset.pattern.permute.xlu0 0
        %5234 = vperm.xlu0 %5233, %v5208
        %v5235 = vpop.permute.xlu0 %5234
        %5238 = vset.pattern.permute.xlu0 0
        %5239 = vperm.xlu0 %5238, %v5209
        %v5240 = vpop.permute.xlu0 %5239
        %5243 = vset.pattern.permute.xlu0 0
        %5244 = vperm.xlu0 %5243, %v5210
        %v5245 = vpop.permute.xlu0 %5244
        %5248 = vset.pattern.permute.xlu0 0
        %5249 = vperm.xlu0 %5248, %v5211
        %v5250 = vpop.permute.xlu0 %5249
        %v5252 = vadd.f32 %v5196, %v5215
        %v5253 = vadd.f32 %v5197, %v5220
        %v5254 = vadd.f32 %v5198, %v5225
        %v5255 = vadd.f32 %v5199, %v5230
        %v5256 = vadd.f32 %v5200, %v5235
        %v5257 = vadd.f32 %v5201, %v5240
        %v5258 = vadd.f32 %v5202, %v5245
        %v5259 = vadd.f32 %v5203, %v5250
        %5260 = vst [vmem:[%s484] sm:$0xff] %v5252
        %5261 = vst [vmem:[%s484 + $0x8] sm:$0xff] %v5253
        %5262 = vst [vmem:[%s484 + $0x10] sm:$0xff] %v5254
        %5263 = vst [vmem:[%s484 + $0x18] sm:$0xff] %v5255
        %5264 = vst [vmem:[%s484 + $0x20] sm:$0xff] %v5256
        %5265 = vst [vmem:[%s484 + $0x28] sm:$0xff] %v5257
        %5266 = vst [vmem:[%s484 + $0x30] sm:$0xff] %v5258
        %5267 = vst [vmem:[%s484 + $0x38] sm:$0xff] %v5259
        %s5268 = sand.u32 %s244, 1
        %s5269 = sand.u32 %s244, 1
        %s5270 = smul.addr %s5269, 64
        %s5271 = scalar_lea.vmem [#allocation4], %s5270
        // Predicated region
        $region99: #{forward_pallas.1} parent=93 // pred_check
          %p5272 = pneg %p254
        $region100: #{forward_pallas.1} parent=93 // pred_check_branch
          %5274 = sbr.rel (%p5272) target = $region102
        $region101: #{forward_pallas.1} parent=93 // pred_region
          %s5275 = smul.addr %s21, 8
          %s5276 = scalar_lea.vmem %s10, %s5275
          // Predicated region
          $region103: #{forward_pallas.1} parent=101 // pred_check
            _
          $region104: #{forward_pallas.1} parent=101 // pred_check_branch
            %5278 = sbr.rel (0) target = $region106
          $region105: #{forward_pallas.1} parent=101 // pred_region
            // Predicated region
            $region107: #{forward_pallas.1} parent=105 // pred_check
              _
            $region108: #{forward_pallas.1} parent=105 // pred_check_branch
              %5280 = sbr.rel (0) target = $region110
            $region109: #{forward_pallas.1} parent=105 // pred_region
              // Predicated region
              $region122: #{forward_pallas.1} parent=109 // pred_check
                _
              $region123: #{forward_pallas.1} parent=109 // pred_check_branch
                %5310 = sbr.rel (0) target = $region125
              $region124: #{forward_pallas.1} parent=109 // pred_region
                loop: start=0, step=1, limit=1
                $region126: #{forward_pallas.1} parent=124 // loop_pre_header
                  _
                $region127: #{forward_pallas.1} parent=124 // loop_header
                  %s5312 = sphi 0, %s5316
                  %p5313 = scmp.ge.s32.totalorder %s5312, 1
                  %s5317 = sphi %s5271, %s5271
                  %s5318 = sphi %s5276, %s5276
                $region128: #{forward_pallas.1} parent=124 // loop_header_branch
                  %5315 = sbr.rel (%p5313) target = $region132
                $region129: #{forward_pallas.1} parent=124 // loop_body
                  %v5319 = vld [vmem:[%s5317] sm:$0xff]
                  %5320 = vst [vmem:[%s5318] sm:$0xff] %v5319
                  %v5321 = vld [vmem:[%s5317 + $0x8] sm:$0xff]
                  %5322 = vst [vmem:[%s5318 + $0x10] sm:$0xff] %v5321
                  %v5323 = vld [vmem:[%s5317 + $0x10] sm:$0xff]
                  %5324 = vst [vmem:[%s5318 + $0x20] sm:$0xff] %v5323
                  %v5325 = vld [vmem:[%s5317 + $0x18] sm:$0xff]
                  %5326 = vst [vmem:[%s5318 + $0x30] sm:$0xff] %v5325
                  %v5327 = vld [vmem:[%s5317 + $0x20] sm:$0xff]
                  %5328 = vst [vmem:[%s5318 + $0x40] sm:$0xff] %v5327
                  %v5329 = vld [vmem:[%s5317 + $0x28] sm:$0xff]
                  %5330 = vst [vmem:[%s5318 + $0x50] sm:$0xff] %v5329
                  %v5331 = vld [vmem:[%s5317 + $0x30] sm:$0xff]
                  %5332 = vst [vmem:[%s5318 + $0x60] sm:$0xff] %v5331
                  %v5333 = vld [vmem:[%s5317 + $0x38] sm:$0xff]
                  %5334 = vst [vmem:[%s5318 + $0x70] sm:$0xff] %v5333
                $region130: #{forward_pallas.1} parent=124 // loop_footer
                  %s5316 = sadd.s32 1, %s5312
                $region131: #{forward_pallas.1} parent=124 // loop_footer_branch
                  %5311 = sbr.rel target = $region127
                $region132: #{forward_pallas.1} parent=124 // loop_exit
                  _
              $region125: #{forward_pallas.1} parent=109 // pred_fallthru
                _
              // Predicated region
              $region133: #{forward_pallas.1} parent=109 // pred_check
                _
              $region134: #{forward_pallas.1} parent=109 // pred_check_branch
                %5336 = sbr.rel target = $region136
              $region135: #{forward_pallas.1} parent=109 // pred_region
                _
              $region136: #{forward_pallas.1} parent=109 // pred_fallthru
                _
            $region110: #{forward_pallas.1} parent=105 // pred_fallthru
              _
            // Predicated region
            $region111: #{forward_pallas.1} parent=105 // pred_check
              _
            $region112: #{forward_pallas.1} parent=105 // pred_check_branch
              %5282 = sbr.rel target = $region114
            $region113: #{forward_pallas.1} parent=105 // pred_region
              %s5284 = ssub.s32 256, 1
              loop: start=0, step=1, limit=1
              $region115: #{forward_pallas.1} parent=113 // loop_pre_header
                _
              $region116: #{forward_pallas.1} parent=113 // loop_header
                %s5286 = sphi 0, %s5290
                %p5287 = scmp.ge.s32.totalorder %s5286, 1
                %s5291 = sphi %s5271, %s5271
                %s5292 = sphi %s5276, %s5276
              $region117: #{forward_pallas.1} parent=113 // loop_header_branch
                %5289 = sbr.rel (%p5287) target = $region121
              $region118: #{forward_pallas.1} parent=113 // loop_body
                %v5293 = vld [vmem:[%s5291] sm:%s5284]
                %5294 = vst [vmem:[%s5292] sm:%s5284] %v5293
                %v5295 = vld [vmem:[%s5291 + $0x8] sm:%s5284]
                %5296 = vst [vmem:[%s5292 + $0x10] sm:%s5284] %v5295
                %v5297 = vld [vmem:[%s5291 + $0x10] sm:%s5284]
                %5298 = vst [vmem:[%s5292 + $0x20] sm:%s5284] %v5297
                %v5299 = vld [vmem:[%s5291 + $0x18] sm:%s5284]
                %5300 = vst [vmem:[%s5292 + $0x30] sm:%s5284] %v5299
                %v5301 = vld [vmem:[%s5291 + $0x20] sm:%s5284]
                %5302 = vst [vmem:[%s5292 + $0x40] sm:%s5284] %v5301
                %v5303 = vld [vmem:[%s5291 + $0x28] sm:%s5284]
                %5304 = vst [vmem:[%s5292 + $0x50] sm:%s5284] %v5303
                %v5305 = vld [vmem:[%s5291 + $0x30] sm:%s5284]
                %5306 = vst [vmem:[%s5292 + $0x60] sm:%s5284] %v5305
                %v5307 = vld [vmem:[%s5291 + $0x38] sm:%s5284]
                %5308 = vst [vmem:[%s5292 + $0x70] sm:%s5284] %v5307
              $region119: #{forward_pallas.1} parent=113 // loop_footer
                %s5290 = sadd.s32 1, %s5286
              $region120: #{forward_pallas.1} parent=113 // loop_footer_branch
                %5285 = sbr.rel target = $region116
              $region121: #{forward_pallas.1} parent=113 // loop_exit
                _
            $region114: #{forward_pallas.1} parent=105 // pred_fallthru
              _
          $region106: #{forward_pallas.1} parent=101 // pred_fallthru
            _
          %5337 = vnop
        $region102: #{forward_pallas.1} parent=93 // pred_fallthru
          _
      $region94: #{forward_pallas.1} parent=5 // pred_fallthru
        _
      %p5338 = scmp.le.s32.totalorder 2, %s16
      // Predicated region
      $region137: #{forward_pallas.1} parent=5 // pred_check
        %p5339 = pneg %p5338
      $region138: #{forward_pallas.1} parent=5 // pred_check_branch
        %5341 = sbr.rel (%p5339) target = $region140
      $region139: #{forward_pallas.1} parent=5 // pred_region
        %s5342 = ssub.s32 %s16, 2
        // Predicated region
        $region141: #{forward_pallas.1} parent=139 // pred_check
          %p5343 = pneg %p260
        $region142: #{forward_pallas.1} parent=139 // pred_check_branch
          %5345 = sbr.rel (%p5343) target = $region144
        $region143: #{forward_pallas.1} parent=139 // pred_region
          %s5346 = sand.u32 %s245, 1
          %s5347 = sand.u32 %s245, 1
          %s5348 = smul.addr %s5347, 64
          %s5349 = scalar_lea.vmem [#allocation4], %s5348
        $region144: #{forward_pallas.1} parent=139 // pred_fallthru
          _
      $region140: #{forward_pallas.1} parent=5 // pred_fallthru
        _
    $region6: #{forward_pallas.1} parent=1 // loop_footer
      %s20 = sadd.s32 1, %s16
    $region7: #{forward_pallas.1} parent=1 // loop_footer_branch
      %15 = sbr.rel target = $region3
    $region8: #{forward_pallas.1} parent=1 // loop_exit
      _

</llo_original>
